<compile_context>
chip_gen: v7x
topology: tpu7x:2x2x1
jax: 0.10.0
libtpu: 0.0.40
codegen_flags: <defaults>
</compile_context>

<pallas_src>
import functools

import jax
import jax.numpy as jnp
import numpy as np
from jax.experimental import pallas as pl
from jax.experimental.pallas import tpu as pltpu

VMEM_LIMIT = 32 * 1024 * 1024  # explicit scoped-VMEM cap (fits all generations)


def _round_up(x, m):
    return (x + m - 1) // m * m


def _cdiv(a, b):
    return -(-a // b)


# ----------------------------------------------------------------------------
# Pallas kernels
# ----------------------------------------------------------------------------
def conv_taps_relu_kernel(x_ref, w_ref, b_ref, o_ref, *, shifts, cin):
    """Stride-1 VALID conv + ReLU on one sample, flattened-row form.

    x_ref : (1, Hi*Wi, Cin)   bf16  whole sample, VMEM resident
    w_ref : (taps*Cin, Cout)  bf16  per-tap weight blocks, resident
    b_ref : (1, Cout)         f32
    o_ref : (1, Mo, Cout)     bf16  Mo = (Ho-1)*Wi + Wo "full-grid" rows

    The im2col is just `shifts`: for tap (a, b) the GEMM LHS is the input rows
    shifted by a*Wi + b — a contiguous pl.ds slice of the VMEM block, so no
    patch matrix ever touches HBM.
    """
    mo = o_ref.shape[1]
    cout = o_ref.shape[2]
    acc = jnp.zeros((mo, cout), jnp.float32)
    for t, sh in enumerate(shifts):
        lhs = x_ref[0, pl.ds(sh, mo), :]              # (Mo, Cin)  bf16
        rhs = w_ref[pl.ds(t * cin, cin), :]           # (Cin, Cout) bf16
        acc = acc + jnp.dot(lhs, rhs, preferred_element_type=jnp.float32)
    o_ref[0] = jnp.maximum(acc + b_ref[...], 0.0).astype(o_ref.dtype)


def fused_heads_kernel(x_ref, w1_ref, b1_ref, w2_ref, b2_ref, o_ref):
    # Fused policy+value heads: Linear -> ReLU -> Linear (block-structured 2nd
    # GEMM, 128-wide output so the store is lane-dense).
    h = jnp.dot(x_ref[...], w1_ref[...], preferred_element_type=jnp.float32)
    h = jnp.maximum(h + b1_ref[...], 0.0)
    out = jnp.dot(h.astype(w2_ref.dtype), w2_ref[...],
                  preferred_element_type=jnp.float32)
    o_ref[...] = (out + b2_ref[...]).astype(o_ref.dtype)


# ----------------------------------------------------------------------------
# Wrappers
# ----------------------------------------------------------------------------
def _space_to_depth(x_nhwc, s):
    """(B, H, W, C) -> (B, H//s, W//s, s*s*C); channel order (r, q, c)."""
    if s == 1:
        return x_nhwc
    B, H, W, C = x_nhwc.shape
    x = x_nhwc.reshape(B, H // s, s, W // s, s, C)
    x = x.transpose(0, 1, 3, 2, 4, 5)
    return x.reshape(B, H // s, W // s, s * s * C)


def conv_relu_pallas(x_nhwc, w_kxn, b_1xn, keff):
    """Stride-1 VALID conv(keff) + ReLU, gridded over batch ("parallel")."""
    B, Hi, Wi, Cin = x_nhwc.shape
    K, Cout = w_kxn.shape
    assert K == keff * keff * Cin
    Ho, Wo = Hi - keff + 1, Wi - keff + 1
    Mi = Hi * Wi
    Mo = (Ho - 1) * Wi + Wo          # last flattened row ever valid, +1
    shifts = tuple(a * Wi + b for a in range(keff) for b in range(keff))

    xf = x_nhwc.reshape(B, Mi, Cin)
    yf = pl.pallas_call(
        functools.partial(conv_taps_relu_kernel, shifts=shifts, cin=Cin),
        out_shape=jax.ShapeDtypeStruct((B, Mo, Cout), jnp.bfloat16),
        grid=(B,),
        in_specs=[
            pl.BlockSpec((1, Mi, Cin), lambda n: (n, 0, 0)),  # one sample
            pl.BlockSpec((K, Cout), lambda n: (0, 0)),        # weights resident
            pl.BlockSpec((1, Cout), lambda n: (0, 0)),        # bias resident
        ],
        out_specs=pl.BlockSpec((1, Mo, Cout), lambda n: (n, 0, 0)),
        compiler_params=pltpu.CompilerParams(
            dimension_semantics=("parallel",),
            vmem_limit_bytes=VMEM_LIMIT),
    )(xf, w_kxn, b_1xn)

    # Valid outputs live at rows p*Wi + t (p < Ho, t < Wo); extract them with a
    # free XLA pad + reshape + slice on the (tiny) activation.
    yf = jnp.pad(yf, ((0, 0), (0, Ho * Wi - Mo), (0, 0)))
    return yf.reshape(B, Ho, Wi, Cout)[:, :, :Wo, :]


def fused_heads_pallas(feat, w1, b1, w2, b2):
    """feat (B, F) bf16 -> ReLU(feat @ w1 + b1) @ w2 + b2 -> (B, Npad) f32."""
    B, F = feat.shape
    n_pad = w2.shape[1]
    # Row tile: always >= 2 grid steps so v7x megacore splits the work; 8-row
    # tiles at RL-inference batch sizes, up to 128 for training-size batches.
    tb = min(128, max(8, _round_up(_cdiv(B, 2), 8)))
    steps = max(2, _cdiv(B, tb))
    mp = steps * tb
    if mp != B:
        feat = jnp.pad(feat, ((0, mp - B), (0, 0)))
    out = pl.pallas_call(
        fused_heads_kernel,
        out_shape=jax.ShapeDtypeStruct((mp, n_pad), jnp.float32),
        grid=(steps,),
        in_specs=[
            pl.BlockSpec((tb, F), lambda i: (i, 0)),    # feat row tile
            pl.BlockSpec(w1.shape, lambda i: (0, 0)),   # resident weights
            pl.BlockSpec(b1.shape, lambda i: (0, 0)),
            pl.BlockSpec(w2.shape, lambda i: (0, 0)),
            pl.BlockSpec(b2.shape, lambda i: (0, 0)),
        ],
        out_specs=pl.BlockSpec((tb, n_pad), lambda i: (i, 0)),
        compiler_params=pltpu.CompilerParams(
            dimension_semantics=("parallel",),
            vmem_limit_bytes=VMEM_LIMIT),
    )(feat, w1, b1, w2, b2)
    return out[:B]


# ----------------------------------------------------------------------------
# Parameters: PyTorch-layout init + one-time packing for the kernels
# ----------------------------------------------------------------------------
def _uniform(key, shape, fan_in):
    bound = 1.0 / np.sqrt(fan_in)
    return jax.random.uniform(key, shape, jnp.float32, -bound, bound)


def _conv_out_hw(h, w):
    h1, w1 = (h - 8) // 4 + 1, (w - 8) // 4 + 1
    h2, w2 = (h1 - 4) // 2 + 1, (w1 - 4) // 2 + 1
    return h2 - 3 + 1, w2 - 3 + 1


def init_params(key, in_channels, h, w, n_actions):
    ks = jax.random.split(key, 14)
    params = {}
    params["c1_w"] = _uniform(ks[0], (32, in_channels, 8, 8), in_channels * 64)
    params["c1_b"] = _uniform(ks[1], (32,), in_channels * 64)
    params["c2_w"] = _uniform(ks[2], (64, 32, 4, 4), 32 * 16)
    params["c2_b"] = _uniform(ks[3], (64,), 32 * 16)
    params["c3_w"] = _uniform(ks[4], (64, 64, 3, 3), 64 * 9)
    params["c3_b"] = _uniform(ks[5], (64,), 64 * 9)

    h3, w3 = _conv_out_hw(h, w)
    conv_out = 64 * h3 * w3

    params["p1_w"] = _uniform(ks[6], (512, conv_out), conv_out)
    params["p1_b"] = _uniform(ks[7], (512,), conv_out)
    params["p2_w"] = _uniform(ks[8], (n_actions, 512), 512)
    params["p2_b"] = _uniform(ks[9], (n_actions,), 512)
    params["v1_w"] = _uniform(ks[10], (512, conv_out), conv_out)
    params["v1_b"] = _uniform(ks[11], (512,), conv_out)
    params["v2_w"] = _uniform(ks[12], (1, 512), 512)
    params["v2_b"] = _uniform(ks[13], (1,), 512)
    return params


def _conv_w_s2d(w_oihw, s, scale=1.0):
    """Pack an OIHW conv weight for the stride-1 (space-to-depth) kernel.

    Rows ordered (a, b, r, q, cin) with original tap (i, j) = (s*a+r, s*b+q),
    matching the (r, q, c) channel order produced by _space_to_depth.  For
    s == 1 this reduces to the plain (i, j, cin) im2col ordering.
    """
    cout, cin, k, _ = w_oihw.shape
    keff = k // s
    wt = w_oihw.transpose(2, 3, 1, 0)                    # (k, k, cin, cout)
    wt = wt.reshape(keff, s, keff, s, cin, cout)         # (a, r, b, q, c, o)
    wt = wt.transpose(0, 2, 1, 3, 4, 5)                  # (a, b, r, q, c, o)
    wt = wt.reshape(keff * keff * s * s * cin, cout)
    return (wt * scale).astype(jnp.bfloat16)


def prepare_params(params, h, w):
    """One-time packing hoisted out of the forward path:
       - conv weights -> space-to-depth stride-1 (K, N) layout, 1/256 folded
         into conv1, bf16; biases -> (1, N) f32
       - head first-layer columns permuted (c,h,w)->(h,w,c) to match the NHWC
         flatten, policy/value fused, bf16
       - head second layers packed block-wise into one lane-dense (1024, 128)
         matrix (zeros elsewhere), bf16."""
    assert h % 4 == 0 and w % 4 == 0, "input H/W must be multiples of 4"
    h1, w1_ = (h - 8) // 4 + 1, (w - 8) // 4 + 1
    assert h1 % 2 == 0 and w1_ % 2 == 0, "conv1 output H/W must be even"

    h3, w3 = _conv_out_hw(h, w)
    c3 = params["c3_w"].shape[0]
    hid = params["p1_w"].shape[0]
    n_actions = params["p2_w"].shape[0]
    n_pad = max(128, _round_up(n_actions + 1, 128))

    def head_w_cols(w_lin):  # permute (c,h,w)-ordered columns to (h,w,c) order
        return (w_lin.reshape(-1, c3, h3, w3).transpose(0, 2, 3, 1)
                .reshape(w_lin.shape[0], -1))

    packed = {
        "c1_w": _conv_w_s2d(params["c1_w"], 4, 1.0 / 256.0),
        "c1_b": params["c1_b"].reshape(1, -1).astype(jnp.float32),
        "c2_w": _conv_w_s2d(params["c2_w"], 2),
        "c2_b": params["c2_b"].reshape(1, -1).astype(jnp.float32),
        "c3_w": _conv_w_s2d(params["c3_w"], 1),
        "c3_b": params["c3_b"].reshape(1, -1).astype(jnp.float32),
    }

    w1 = jnp.concatenate([head_w_cols(params["p1_w"]),
                          head_w_cols(params["v1_w"])], axis=0).T
    b1 = jnp.concatenate([params["p1_b"], params["v1_b"]]).reshape(1, -1)

    w2 = jnp.zeros((2 * hid, n_pad), jnp.float32)
    w2 = w2.at[:hid, :n_actions].set(params["p2_w"].T)
    w2 = w2.at[hid:, n_actions].set(params["v2_w"][0])
    b2 = jnp.zeros((n_pad,), jnp.float32)
    b2 = b2.at[:n_actions].set(params["p2_b"])
    b2 = b2.at[n_actions].set(params["v2_b"][0])

    packed["h1_w"] = w1.astype(jnp.bfloat16)
    packed["h1_b"] = b1.astype(jnp.float32)
    packed["h2_w"] = w2.astype(jnp.bfloat16)
    packed["h2_b"] = b2.reshape(1, -1)
    return packed


# ----------------------------------------------------------------------------
# Forward pass
# ----------------------------------------------------------------------------
def atari_a2c_forward(packed, x, *, n_actions):
    """x: (B, C, H, W) float32 in [0, 256). Returns (policy_logits, value)."""
    B = x.shape[0]
    # Single layout pass over the raw input: NCHW -> NHWC + space-to-depth(4)
    # (makes conv1 stride-1 and channel-dense); /256 is folded into c1_w.
    x_nhwc = jnp.transpose(x.astype(jnp.bfloat16), (0, 2, 3, 1))
    h = _space_to_depth(x_nhwc, 4)
    h = conv_relu_pallas(h, packed["c1_w"], packed["c1_b"], keff=2)
    h = conv_relu_pallas(_space_to_depth(h, 2),
                         packed["c2_w"], packed["c2_b"], keff=2)
    h = conv_relu_pallas(h, packed["c3_w"], packed["c3_b"], keff=3)
    feat = h.reshape(B, -1)   # NHWC flatten; head weights are pre-permuted
    out = fused_heads_pallas(feat, packed["h1_w"], packed["h1_b"],
                             packed["h2_w"], packed["h2_b"])
    return out[:, :n_actions], out[:, n_actions:n_actions + 1]


# ----------------------------------------------------------------------------
# Pure-JAX f32 reference (for correctness check)
# ----------------------------------------------------------------------------
def reference_forward(params, x):
    fx = x.astype(jnp.float32) / 256.0
    h = fx
    for name, s in (("c1", 4), ("c2", 2), ("c3", 1)):
        w, b = params[name + "_w"], params[name + "_b"]
        h = jax.lax.conv_general_dilated(
            h, w, (s, s), "VALID",
            dimension_numbers=("NCHW", "OIHW", "NCHW"))
        h = jnp.maximum(h + b[None, :, None, None], 0.0)
    feat = h.reshape(h.shape[0], -1)
    pol = jnp.maximum(feat @ params["p1_w"].T + params["p1_b"], 0.0)
    pol = pol @ params["p2_w"].T + params["p2_b"]
    val = jnp.maximum(feat @ params["v1_w"].T + params["v1_b"], 0.0)
    val = val @ params["v2_w"].T + params["v2_b"]
    return pol, val


if __name__ == "__main__":
    key = jax.random.PRNGKey(0)
    k_x, k_p = jax.random.split(key)

    # Smallest clean shapes for the Atari-style conv stack that still exercise
    # the NHWC head-weight permutation: H = W = 52 -> 12 -> 5 -> 3 spatial,
    # conv_out_size = 64*3*3 = 576.
    B, C, H, W = 2, 4, 52, 52
    n_actions = 5

    x = jax.random.uniform(k_x, (B, C, H, W), jnp.float32, 0.0, 255.0)
    params = init_params(k_p, C, H, W, n_actions)
    packed = prepare_params(params, H, W)   # one-time weight packing

    fwd = jax.jit(functools.partial(atari_a2c_forward, n_actions=n_actions))
    policy, value = fwd(packed, x)
    jax.block_until_ready((policy, value))

    # Sanity check vs. the pure-f32 reference. Tolerance is loose because the
    # Pallas path runs bf16 MXU operands (f32 accumulation).
    ref_policy, ref_value = reference_forward(params, x)
    np.testing.assert_allclose(np.asarray(policy), np.asarray(ref_policy),
                               rtol=5e-2, atol=5e-2)
    np.testing.assert_allclose(np.asarray(value), np.asarray(ref_value),
                               rtol=5e-2, atol=5e-2)
    assert policy.shape == (B, n_actions) and value.shape == (B, 1)

    print("KERNEL_OK")
</pallas_src>

<mosaic_0001>
module attributes {stable_mosaic.version = 11 : i64} {
  func.func @conv_taps_relu_kernel(%arg0: i32, %arg1: memref<1x169x64xbf16, #tpu.memory_space<vmem>>, %arg2: memref<256x32xbf16, #tpu.memory_space<vmem>>, %arg3: memref<1x32xf32, #tpu.memory_space<vmem>>, %arg4: memref<1x155x32xbf16, #tpu.memory_space<vmem>>) attributes {dimension_semantics = [#tpu.dimension_semantics<parallel>], iteration_bounds = array<i64: 2>, scalar_prefetch = 0 : i64, scratch_operands = 0 : i64, tpu.core_type = #tpu.core_type<tc>, window_params = [{transform_indices = @transform_0, window_bounds = array<i64: 1, 169, 64>}, {pipeline_mode = #tpu.pipeline_mode<synchronous>, transform_indices = @transform_1, window_bounds = array<i64: 256, 32>}, {pipeline_mode = #tpu.pipeline_mode<synchronous>, transform_indices = @transform_2, window_bounds = array<i64: 1, 32>}, {transform_indices = @transform_3, window_bounds = array<i64: 1, 155, 32>}]} {
    %cst = arith.constant 0.000000e+00 : f32
    %0 = vector.broadcast %cst : f32 to vector<155x32xf32>
    %c0 = arith.constant 0 : index
    %c0_0 = arith.constant 0 : index
    %c0_1 = arith.constant 0 : index
    %1 = vector.load %arg1[%c0, %c0_0, %c0_1] : memref<1x169x64xbf16, #tpu.memory_space<vmem>>, vector<1x155x64xbf16>
    %2 = vector.shape_cast %1 : vector<1x155x64xbf16> to vector<155x64xbf16>
    %c0_2 = arith.constant 0 : index
    %c0_3 = arith.constant 0 : index
    %3 = vector.load %arg2[%c0_2, %c0_3] : memref<256x32xbf16, #tpu.memory_space<vmem>>, vector<64x32xbf16>
    %cst_4 = arith.constant dense<0.000000e+00> : vector<155x32xf32>
    %4 = tpu.matmul %2, %3, %cst_4 {dimension_numbers = #tpu.dot_dimension_numbers<[1], [0], [0], [1], [0, 0, 1, 1], [], []>} : vector<155x64xbf16>, vector<64x32xbf16>, vector<155x32xf32> -> vector<155x32xf32>
    %5 = arith.addf %0, %4 : vector<155x32xf32>
    %c0_5 = arith.constant 0 : index
    %c1 = arith.constant 1 : index
    %c0_6 = arith.constant 0 : index
    %6 = vector.load %arg1[%c0_5, %c1, %c0_6] : memref<1x169x64xbf16, #tpu.memory_space<vmem>>, vector<1x155x64xbf16>
    %7 = vector.shape_cast %6 : vector<1x155x64xbf16> to vector<155x64xbf16>
    %c64 = arith.constant 64 : index
    %c0_7 = arith.constant 0 : index
    %8 = vector.load %arg2[%c64, %c0_7] : memref<256x32xbf16, #tpu.memory_space<vmem>>, vector<64x32xbf16>
    %cst_8 = arith.constant dense<0.000000e+00> : vector<155x32xf32>
    %9 = tpu.matmul %7, %8, %cst_8 {dimension_numbers = #tpu.dot_dimension_numbers<[1], [0], [0], [1], [0, 0, 1, 1], [], []>} : vector<155x64xbf16>, vector<64x32xbf16>, vector<155x32xf32> -> vector<155x32xf32>
    %10 = arith.addf %5, %9 : vector<155x32xf32>
    %c0_9 = arith.constant 0 : index
    %c13 = arith.constant 13 : index
    %c0_10 = arith.constant 0 : index
    %11 = vector.load %arg1[%c0_9, %c13, %c0_10] : memref<1x169x64xbf16, #tpu.memory_space<vmem>>, vector<1x155x64xbf16>
    %12 = vector.shape_cast %11 : vector<1x155x64xbf16> to vector<155x64xbf16>
    %c128 = arith.constant 128 : index
    %c0_11 = arith.constant 0 : index
    %13 = vector.load %arg2[%c128, %c0_11] : memref<256x32xbf16, #tpu.memory_space<vmem>>, vector<64x32xbf16>
    %cst_12 = arith.constant dense<0.000000e+00> : vector<155x32xf32>
    %14 = tpu.matmul %12, %13, %cst_12 {dimension_numbers = #tpu.dot_dimension_numbers<[1], [0], [0], [1], [0, 0, 1, 1], [], []>} : vector<155x64xbf16>, vector<64x32xbf16>, vector<155x32xf32> -> vector<155x32xf32>
    %15 = arith.addf %10, %14 : vector<155x32xf32>
    %c0_13 = arith.constant 0 : index
    %c14 = arith.constant 14 : index
    %c0_14 = arith.constant 0 : index
    %16 = vector.load %arg1[%c0_13, %c14, %c0_14] : memref<1x169x64xbf16, #tpu.memory_space<vmem>>, vector<1x155x64xbf16>
    %17 = vector.shape_cast %16 : vector<1x155x64xbf16> to vector<155x64xbf16>
    %c192 = arith.constant 192 : index
    %c0_15 = arith.constant 0 : index
    %18 = vector.load %arg2[%c192, %c0_15] : memref<256x32xbf16, #tpu.memory_space<vmem>>, vector<64x32xbf16>
    %cst_16 = arith.constant dense<0.000000e+00> : vector<155x32xf32>
    %19 = tpu.matmul %17, %18, %cst_16 {dimension_numbers = #tpu.dot_dimension_numbers<[1], [0], [0], [1], [0, 0, 1, 1], [], []>} : vector<155x64xbf16>, vector<64x32xbf16>, vector<155x32xf32> -> vector<155x32xf32>
    %20 = arith.addf %15, %19 : vector<155x32xf32>
    %c0_17 = arith.constant 0 : index
    %c0_18 = arith.constant 0 : index
    %21 = vector.load %arg3[%c0_17, %c0_18] : memref<1x32xf32, #tpu.memory_space<vmem>>, vector<1x32xf32>
    %22 = vector.broadcast %21 : vector<1x32xf32> to vector<155x32xf32>
    %23 = arith.addf %20, %22 : vector<155x32xf32>
    %cst_19 = arith.constant 0.000000e+00 : f32
    %24 = vector.broadcast %cst_19 : f32 to vector<155x32xf32>
    %25 = arith.maximumf %23, %24 : vector<155x32xf32>
    %26 = arith.truncf %25 : vector<155x32xf32> to vector<155x32xbf16>
    %c0_20 = arith.constant 0 : index
    %c0_21 = arith.constant 0 : index
    %c0_22 = arith.constant 0 : index
    %27 = vector.load %arg4[%c0_20, %c0_21, %c0_22] : memref<1x155x32xbf16, #tpu.memory_space<vmem>>, vector<1x155x32xbf16>
    %28 = vector.shape_cast %27 : vector<1x155x32xbf16> to vector<155x32xbf16>
    %29 = vector.shape_cast %26 : vector<155x32xbf16> to vector<1x155x32xbf16>
    tpu.vector_store %arg4[%c0_20, %c0_21, %c0_22], %29 {strides = array<i32>} : memref<1x155x32xbf16, #tpu.memory_space<vmem>>, vector<1x155x32xbf16>,
    return
  }
  func.func @transform_0(%arg0: i32) -> (i32, i32, i32) {
    %c0_i32 = arith.constant 0 : i32
    %c0_i32_0 = arith.constant 0 : i32
    %c0_i32_1 = arith.constant 0 : i32
    return %arg0, %c0_i32, %c0_i32_0 : i32, i32, i32
  }
  func.func @transform_1(%arg0: i32) -> (i32, i32) {
    %c0_i32 = arith.constant 0 : i32
    %c0_i32_0 = arith.constant 0 : i32
    %c0_i32_1 = arith.constant 0 : i32
    return %c0_i32, %c0_i32_0 : i32, i32
  }
  func.func @transform_2(%arg0: i32) -> (i32, i32) {
    %c0_i32 = arith.constant 0 : i32
    %c0_i32_0 = arith.constant 0 : i32
    %c0_i32_1 = arith.constant 0 : i32
    return %c0_i32, %c0_i32_0 : i32, i32
  }
  func.func @transform_3(%arg0: i32) -> (i32, i32, i32) {
    %c0_i32 = arith.constant 0 : i32
    %c0_i32_0 = arith.constant 0 : i32
    %c0_i32_1 = arith.constant 0 : i32
    return %arg0, %c0_i32, %c0_i32_0 : i32, i32, i32
  }
}

module attributes {stable_mosaic.version = 11 : i64} {
  func.func @conv_taps_relu_kernel(%arg0: i32, %arg1: memref<1x36x128xbf16, #tpu.memory_space<vmem>>, %arg2: memref<512x64xbf16, #tpu.memory_space<vmem>>, %arg3: memref<1x64xf32, #tpu.memory_space<vmem>>, %arg4: memref<1x29x64xbf16, #tpu.memory_space<vmem>>) attributes {dimension_semantics = [#tpu.dimension_semantics<parallel>], iteration_bounds = array<i64: 2>, scalar_prefetch = 0 : i64, scratch_operands = 0 : i64, tpu.core_type = #tpu.core_type<tc>, window_params = [{transform_indices = @transform_0, window_bounds = array<i64: 1, 36, 128>}, {pipeline_mode = #tpu.pipeline_mode<synchronous>, transform_indices = @transform_1, window_bounds = array<i64: 512, 64>}, {pipeline_mode = #tpu.pipeline_mode<synchronous>, transform_indices = @transform_2, window_bounds = array<i64: 1, 64>}, {transform_indices = @transform_3, window_bounds = array<i64: 1, 29, 64>}]} {
    %cst = arith.constant 0.000000e+00 : f32
    %0 = vector.broadcast %cst : f32 to vector<29x64xf32>
    %c0 = arith.constant 0 : index
    %c0_0 = arith.constant 0 : index
    %c0_1 = arith.constant 0 : index
    %1 = vector.load %arg1[%c0, %c0_0, %c0_1] : memref<1x36x128xbf16, #tpu.memory_space<vmem>>, vector<1x29x128xbf16>
    %2 = vector.shape_cast %1 : vector<1x29x128xbf16> to vector<29x128xbf16>
    %c0_2 = arith.constant 0 : index
    %c0_3 = arith.constant 0 : index
    %3 = vector.load %arg2[%c0_2, %c0_3] : memref<512x64xbf16, #tpu.memory_space<vmem>>, vector<128x64xbf16>
    %cst_4 = arith.constant dense<0.000000e+00> : vector<29x64xf32>
    %4 = tpu.matmul %2, %3, %cst_4 {dimension_numbers = #tpu.dot_dimension_numbers<[1], [0], [0], [1], [0, 0, 1, 1], [], []>} : vector<29x128xbf16>, vector<128x64xbf16>, vector<29x64xf32> -> vector<29x64xf32>
    %5 = arith.addf %0, %4 : vector<29x64xf32>
    %c0_5 = arith.constant 0 : index
    %c1 = arith.constant 1 : index
    %c0_6 = arith.constant 0 : index
    %6 = vector.load %arg1[%c0_5, %c1, %c0_6] : memref<1x36x128xbf16, #tpu.memory_space<vmem>>, vector<1x29x128xbf16>
    %7 = vector.shape_cast %6 : vector<1x29x128xbf16> to vector<29x128xbf16>
    %c128 = arith.constant 128 : index
    %c0_7 = arith.constant 0 : index
    %8 = vector.load %arg2[%c128, %c0_7] : memref<512x64xbf16, #tpu.memory_space<vmem>>, vector<128x64xbf16>
    %cst_8 = arith.constant dense<0.000000e+00> : vector<29x64xf32>
    %9 = tpu.matmul %7, %8, %cst_8 {dimension_numbers = #tpu.dot_dimension_numbers<[1], [0], [0], [1], [0, 0, 1, 1], [], []>} : vector<29x128xbf16>, vector<128x64xbf16>, vector<29x64xf32> -> vector<29x64xf32>
    %10 = arith.addf %5, %9 : vector<29x64xf32>
    %c0_9 = arith.constant 0 : index
    %c6 = arith.constant 6 : index
    %c0_10 = arith.constant 0 : index
    %11 = vector.load %arg1[%c0_9, %c6, %c0_10] : memref<1x36x128xbf16, #tpu.memory_space<vmem>>, vector<1x29x128xbf16>
    %12 = vector.shape_cast %11 : vector<1x29x128xbf16> to vector<29x128xbf16>
    %c256 = arith.constant 256 : index
    %c0_11 = arith.constant 0 : index
    %13 = vector.load %arg2[%c256, %c0_11] : memref<512x64xbf16, #tpu.memory_space<vmem>>, vector<128x64xbf16>
    %cst_12 = arith.constant dense<0.000000e+00> : vector<29x64xf32>
    %14 = tpu.matmul %12, %13, %cst_12 {dimension_numbers = #tpu.dot_dimension_numbers<[1], [0], [0], [1], [0, 0, 1, 1], [], []>} : vector<29x128xbf16>, vector<128x64xbf16>, vector<29x64xf32> -> vector<29x64xf32>
    %15 = arith.addf %10, %14 : vector<29x64xf32>
    %c0_13 = arith.constant 0 : index
    %c7 = arith.constant 7 : index
    %c0_14 = arith.constant 0 : index
    %16 = vector.load %arg1[%c0_13, %c7, %c0_14] : memref<1x36x128xbf16, #tpu.memory_space<vmem>>, vector<1x29x128xbf16>
    %17 = vector.shape_cast %16 : vector<1x29x128xbf16> to vector<29x128xbf16>
    %c384 = arith.constant 384 : index
    %c0_15 = arith.constant 0 : index
    %18 = vector.load %arg2[%c384, %c0_15] : memref<512x64xbf16, #tpu.memory_space<vmem>>, vector<128x64xbf16>
    %cst_16 = arith.constant dense<0.000000e+00> : vector<29x64xf32>
    %19 = tpu.matmul %17, %18, %cst_16 {dimension_numbers = #tpu.dot_dimension_numbers<[1], [0], [0], [1], [0, 0, 1, 1], [], []>} : vector<29x128xbf16>, vector<128x64xbf16>, vector<29x64xf32> -> vector<29x64xf32>
    %20 = arith.addf %15, %19 : vector<29x64xf32>
    %c0_17 = arith.constant 0 : index
    %c0_18 = arith.constant 0 : index
    %21 = vector.load %arg3[%c0_17, %c0_18] : memref<1x64xf32, #tpu.memory_space<vmem>>, vector<1x64xf32>
    %22 = vector.broadcast %21 : vector<1x64xf32> to vector<29x64xf32>
    %23 = arith.addf %20, %22 : vector<29x64xf32>
    %cst_19 = arith.constant 0.000000e+00 : f32
    %24 = vector.broadcast %cst_19 : f32 to vector<29x64xf32>
    %25 = arith.maximumf %23, %24 : vector<29x64xf32>
    %26 = arith.truncf %25 : vector<29x64xf32> to vector<29x64xbf16>
    %c0_20 = arith.constant 0 : index
    %c0_21 = arith.constant 0 : index
    %c0_22 = arith.constant 0 : index
    %27 = vector.load %arg4[%c0_20, %c0_21, %c0_22] : memref<1x29x64xbf16, #tpu.memory_space<vmem>>, vector<1x29x64xbf16>
    %28 = vector.shape_cast %27 : vector<1x29x64xbf16> to vector<29x64xbf16>
    %29 = vector.shape_cast %26 : vector<29x64xbf16> to vector<1x29x64xbf16>
    tpu.vector_store %arg4[%c0_20, %c0_21, %c0_22], %29 {strides = array<i32>} : memref<1x29x64xbf16, #tpu.memory_space<vmem>>, vector<1x29x64xbf16>,
    return
  }
  func.func @transform_0(%arg0: i32) -> (i32, i32, i32) {
    %c0_i32 = arith.constant 0 : i32
    %c0_i32_0 = arith.constant 0 : i32
    %c0_i32_1 = arith.constant 0 : i32
    return %arg0, %c0_i32, %c0_i32_0 : i32, i32, i32
  }
  func.func @transform_1(%arg0: i32) -> (i32, i32) {
    %c0_i32 = arith.constant 0 : i32
    %c0_i32_0 = arith.constant 0 : i32
    %c0_i32_1 = arith.constant 0 : i32
    return %c0_i32, %c0_i32_0 : i32, i32
  }
  func.func @transform_2(%arg0: i32) -> (i32, i32) {
    %c0_i32 = arith.constant 0 : i32
    %c0_i32_0 = arith.constant 0 : i32
    %c0_i32_1 = arith.constant 0 : i32
    return %c0_i32, %c0_i32_0 : i32, i32
  }
  func.func @transform_3(%arg0: i32) -> (i32, i32, i32) {
    %c0_i32 = arith.constant 0 : i32
    %c0_i32_0 = arith.constant 0 : i32
    %c0_i32_1 = arith.constant 0 : i32
    return %arg0, %c0_i32, %c0_i32_0 : i32, i32, i32
  }
}

module attributes {stable_mosaic.version = 11 : i64} {
  func.func @conv_taps_relu_kernel(%arg0: i32, %arg1: memref<1x25x64xbf16, #tpu.memory_space<vmem>>, %arg2: memref<576x64xbf16, #tpu.memory_space<vmem>>, %arg3: memref<1x64xf32, #tpu.memory_space<vmem>>, %arg4: memref<1x13x64xbf16, #tpu.memory_space<vmem>>) attributes {dimension_semantics = [#tpu.dimension_semantics<parallel>], iteration_bounds = array<i64: 2>, scalar_prefetch = 0 : i64, scratch_operands = 0 : i64, tpu.core_type = #tpu.core_type<tc>, window_params = [{transform_indices = @transform_0, window_bounds = array<i64: 1, 25, 64>}, {pipeline_mode = #tpu.pipeline_mode<synchronous>, transform_indices = @transform_1, window_bounds = array<i64: 576, 64>}, {pipeline_mode = #tpu.pipeline_mode<synchronous>, transform_indices = @transform_2, window_bounds = array<i64: 1, 64>}, {transform_indices = @transform_3, window_bounds = array<i64: 1, 13, 64>}]} {
    %cst = arith.constant 0.000000e+00 : f32
    %0 = vector.broadcast %cst : f32 to vector<13x64xf32>
    %c0 = arith.constant 0 : index
    %c0_0 = arith.constant 0 : index
    %c0_1 = arith.constant 0 : index
    %1 = vector.load %arg1[%c0, %c0_0, %c0_1] : memref<1x25x64xbf16, #tpu.memory_space<vmem>>, vector<1x13x64xbf16>
    %2 = vector.shape_cast %1 : vector<1x13x64xbf16> to vector<13x64xbf16>
    %c0_2 = arith.constant 0 : index
    %c0_3 = arith.constant 0 : index
    %3 = vector.load %arg2[%c0_2, %c0_3] : memref<576x64xbf16, #tpu.memory_space<vmem>>, vector<64x64xbf16>
    %cst_4 = arith.constant dense<0.000000e+00> : vector<13x64xf32>
    %4 = tpu.matmul %2, %3, %cst_4 {dimension_numbers = #tpu.dot_dimension_numbers<[1], [0], [0], [1], [0, 0, 1, 1], [], []>} : vector<13x64xbf16>, vector<64x64xbf16>, vector<13x64xf32> -> vector<13x64xf32>
    %5 = arith.addf %0, %4 : vector<13x64xf32>
    %c0_5 = arith.constant 0 : index
    %c1 = arith.constant 1 : index
    %c0_6 = arith.constant 0 : index
    %6 = vector.load %arg1[%c0_5, %c1, %c0_6] : memref<1x25x64xbf16, #tpu.memory_space<vmem>>, vector<1x13x64xbf16>
    %7 = vector.shape_cast %6 : vector<1x13x64xbf16> to vector<13x64xbf16>
    %c64 = arith.constant 64 : index
    %c0_7 = arith.constant 0 : index
    %8 = vector.load %arg2[%c64, %c0_7] : memref<576x64xbf16, #tpu.memory_space<vmem>>, vector<64x64xbf16>
    %cst_8 = arith.constant dense<0.000000e+00> : vector<13x64xf32>
    %9 = tpu.matmul %7, %8, %cst_8 {dimension_numbers = #tpu.dot_dimension_numbers<[1], [0], [0], [1], [0, 0, 1, 1], [], []>} : vector<13x64xbf16>, vector<64x64xbf16>, vector<13x64xf32> -> vector<13x64xf32>
    %10 = arith.addf %5, %9 : vector<13x64xf32>
    %c0_9 = arith.constant 0 : index
    %c2 = arith.constant 2 : index
    %c0_10 = arith.constant 0 : index
    %11 = vector.load %arg1[%c0_9, %c2, %c0_10] : memref<1x25x64xbf16, #tpu.memory_space<vmem>>, vector<1x13x64xbf16>
    %12 = vector.shape_cast %11 : vector<1x13x64xbf16> to vector<13x64xbf16>
    %c128 = arith.constant 128 : index
    %c0_11 = arith.constant 0 : index
    %13 = vector.load %arg2[%c128, %c0_11] : memref<576x64xbf16, #tpu.memory_space<vmem>>, vector<64x64xbf16>
    %cst_12 = arith.constant dense<0.000000e+00> : vector<13x64xf32>
    %14 = tpu.matmul %12, %13, %cst_12 {dimension_numbers = #tpu.dot_dimension_numbers<[1], [0], [0], [1], [0, 0, 1, 1], [], []>} : vector<13x64xbf16>, vector<64x64xbf16>, vector<13x64xf32> -> vector<13x64xf32>
    %15 = arith.addf %10, %14 : vector<13x64xf32>
    %c0_13 = arith.constant 0 : index
    %c5 = arith.constant 5 : index
    %c0_14 = arith.constant 0 : index
    %16 = vector.load %arg1[%c0_13, %c5, %c0_14] : memref<1x25x64xbf16, #tpu.memory_space<vmem>>, vector<1x13x64xbf16>
    %17 = vector.shape_cast %16 : vector<1x13x64xbf16> to vector<13x64xbf16>
    %c192 = arith.constant 192 : index
    %c0_15 = arith.constant 0 : index
    %18 = vector.load %arg2[%c192, %c0_15] : memref<576x64xbf16, #tpu.memory_space<vmem>>, vector<64x64xbf16>
    %cst_16 = arith.constant dense<0.000000e+00> : vector<13x64xf32>
    %19 = tpu.matmul %17, %18, %cst_16 {dimension_numbers = #tpu.dot_dimension_numbers<[1], [0], [0], [1], [0, 0, 1, 1], [], []>} : vector<13x64xbf16>, vector<64x64xbf16>, vector<13x64xf32> -> vector<13x64xf32>
    %20 = arith.addf %15, %19 : vector<13x64xf32>
    %c0_17 = arith.constant 0 : index
    %c6 = arith.constant 6 : index
    %c0_18 = arith.constant 0 : index
    %21 = vector.load %arg1[%c0_17, %c6, %c0_18] : memref<1x25x64xbf16, #tpu.memory_space<vmem>>, vector<1x13x64xbf16>
    %22 = vector.shape_cast %21 : vector<1x13x64xbf16> to vector<13x64xbf16>
    %c256 = arith.constant 256 : index
    %c0_19 = arith.constant 0 : index
    %23 = vector.load %arg2[%c256, %c0_19] : memref<576x64xbf16, #tpu.memory_space<vmem>>, vector<64x64xbf16>
    %cst_20 = arith.constant dense<0.000000e+00> : vector<13x64xf32>
    %24 = tpu.matmul %22, %23, %cst_20 {dimension_numbers = #tpu.dot_dimension_numbers<[1], [0], [0], [1], [0, 0, 1, 1], [], []>} : vector<13x64xbf16>, vector<64x64xbf16>, vector<13x64xf32> -> vector<13x64xf32>
    %25 = arith.addf %20, %24 : vector<13x64xf32>
    %c0_21 = arith.constant 0 : index
    %c7 = arith.constant 7 : index
    %c0_22 = arith.constant 0 : index
    %26 = vector.load %arg1[%c0_21, %c7, %c0_22] : memref<1x25x64xbf16, #tpu.memory_space<vmem>>, vector<1x13x64xbf16>
    %27 = vector.shape_cast %26 : vector<1x13x64xbf16> to vector<13x64xbf16>
    %c320 = arith.constant 320 : index
    %c0_23 = arith.constant 0 : index
    %28 = vector.load %arg2[%c320, %c0_23] : memref<576x64xbf16, #tpu.memory_space<vmem>>, vector<64x64xbf16>
    %cst_24 = arith.constant dense<0.000000e+00> : vector<13x64xf32>
    %29 = tpu.matmul %27, %28, %cst_24 {dimension_numbers = #tpu.dot_dimension_numbers<[1], [0], [0], [1], [0, 0, 1, 1], [], []>} : vector<13x64xbf16>, vector<64x64xbf16>, vector<13x64xf32> -> vector<13x64xf32>
    %30 = arith.addf %25, %29 : vector<13x64xf32>
    %c0_25 = arith.constant 0 : index
    %c10 = arith.constant 10 : index
    %c0_26 = arith.constant 0 : index
    %31 = vector.load %arg1[%c0_25, %c10, %c0_26] : memref<1x25x64xbf16, #tpu.memory_space<vmem>>, vector<1x13x64xbf16>
    %32 = vector.shape_cast %31 : vector<1x13x64xbf16> to vector<13x64xbf16>
    %c384 = arith.constant 384 : index
    %c0_27 = arith.constant 0 : index
    %33 = vector.load %arg2[%c384, %c0_27] : memref<576x64xbf16, #tpu.memory_space<vmem>>, vector<64x64xbf16>
    %cst_28 = arith.constant dense<0.000000e+00> : vector<13x64xf32>
    %34 = tpu.matmul %32, %33, %cst_28 {dimension_numbers = #tpu.dot_dimension_numbers<[1], [0], [0], [1], [0, 0, 1, 1], [], []>} : vector<13x64xbf16>, vector<64x64xbf16>, vector<13x64xf32> -> vector<13x64xf32>
    %35 = arith.addf %30, %34 : vector<13x64xf32>
    %c0_29 = arith.constant 0 : index
    %c11 = arith.constant 11 : index
    %c0_30 = arith.constant 0 : index
    %36 = vector.load %arg1[%c0_29, %c11, %c0_30] : memref<1x25x64xbf16, #tpu.memory_space<vmem>>, vector<1x13x64xbf16>
    %37 = vector.shape_cast %36 : vector<1x13x64xbf16> to vector<13x64xbf16>
    %c448 = arith.constant 448 : index
    %c0_31 = arith.constant 0 : index
    %38 = vector.load %arg2[%c448, %c0_31] : memref<576x64xbf16, #tpu.memory_space<vmem>>, vector<64x64xbf16>
    %cst_32 = arith.constant dense<0.000000e+00> : vector<13x64xf32>
    %39 = tpu.matmul %37, %38, %cst_32 {dimension_numbers = #tpu.dot_dimension_numbers<[1], [0], [0], [1], [0, 0, 1, 1], [], []>} : vector<13x64xbf16>, vector<64x64xbf16>, vector<13x64xf32> -> vector<13x64xf32>
    %40 = arith.addf %35, %39 : vector<13x64xf32>
    %c0_33 = arith.constant 0 : index
    %c12 = arith.constant 12 : index
    %c0_34 = arith.constant 0 : index
    %41 = vector.load %arg1[%c0_33, %c12, %c0_34] : memref<1x25x64xbf16, #tpu.memory_space<vmem>>, vector<1x13x64xbf16>
    %42 = vector.shape_cast %41 : vector<1x13x64xbf16> to vector<13x64xbf16>
    %c512 = arith.constant 512 : index
    %c0_35 = arith.constant 0 : index
    %43 = vector.load %arg2[%c512, %c0_35] : memref<576x64xbf16, #tpu.memory_space<vmem>>, vector<64x64xbf16>
    %cst_36 = arith.constant dense<0.000000e+00> : vector<13x64xf32>
    %44 = tpu.matmul %42, %43, %cst_36 {dimension_numbers = #tpu.dot_dimension_numbers<[1], [0], [0], [1], [0, 0, 1, 1], [], []>} : vector<13x64xbf16>, vector<64x64xbf16>, vector<13x64xf32> -> vector<13x64xf32>
    %45 = arith.addf %40, %44 : vector<13x64xf32>
    %c0_37 = arith.constant 0 : index
    %c0_38 = arith.constant 0 : index
    %46 = vector.load %arg3[%c0_37, %c0_38] : memref<1x64xf32, #tpu.memory_space<vmem>>, vector<1x64xf32>
    %47 = vector.broadcast %46 : vector<1x64xf32> to vector<13x64xf32>
    %48 = arith.addf %45, %47 : vector<13x64xf32>
    %cst_39 = arith.constant 0.000000e+00 : f32
    %49 = vector.broadcast %cst_39 : f32 to vector<13x64xf32>
    %50 = arith.maximumf %48, %49 : vector<13x64xf32>
    %51 = arith.truncf %50 : vector<13x64xf32> to vector<13x64xbf16>
    %c0_40 = arith.constant 0 : index
    %c0_41 = arith.constant 0 : index
    %c0_42 = arith.constant 0 : index
    %52 = vector.load %arg4[%c0_40, %c0_41, %c0_42] : memref<1x13x64xbf16, #tpu.memory_space<vmem>>, vector<1x13x64xbf16>
    %53 = vector.shape_cast %52 : vector<1x13x64xbf16> to vector<13x64xbf16>
    %54 = vector.shape_cast %51 : vector<13x64xbf16> to vector<1x13x64xbf16>
    tpu.vector_store %arg4[%c0_40, %c0_41, %c0_42], %54 {strides = array<i32>} : memref<1x13x64xbf16, #tpu.memory_space<vmem>>, vector<1x13x64xbf16>,
    return
  }
  func.func @transform_0(%arg0: i32) -> (i32, i32, i32) {
    %c0_i32 = arith.constant 0 : i32
    %c0_i32_0 = arith.constant 0 : i32
    %c0_i32_1 = arith.constant 0 : i32
    return %arg0, %c0_i32, %c0_i32_0 : i32, i32, i32
  }
  func.func @transform_1(%arg0: i32) -> (i32, i32) {
    %c0_i32 = arith.constant 0 : i32
    %c0_i32_0 = arith.constant 0 : i32
    %c0_i32_1 = arith.constant 0 : i32
    return %c0_i32, %c0_i32_0 : i32, i32
  }
  func.func @transform_2(%arg0: i32) -> (i32, i32) {
    %c0_i32 = arith.constant 0 : i32
    %c0_i32_0 = arith.constant 0 : i32
    %c0_i32_1 = arith.constant 0 : i32
    return %c0_i32, %c0_i32_0 : i32, i32
  }
  func.func @transform_3(%arg0: i32) -> (i32, i32, i32) {
    %c0_i32 = arith.constant 0 : i32
    %c0_i32_0 = arith.constant 0 : i32
    %c0_i32_1 = arith.constant 0 : i32
    return %arg0, %c0_i32, %c0_i32_0 : i32, i32, i32
  }
}

module attributes {stable_mosaic.version = 11 : i64} {
  func.func @fused_heads_kernel(%arg0: i32, %arg1: memref<8x576xbf16, #tpu.memory_space<vmem>>, %arg2: memref<576x1024xbf16, #tpu.memory_space<vmem>>, %arg3: memref<1x1024xf32, #tpu.memory_space<vmem>>, %arg4: memref<1024x128xbf16, #tpu.memory_space<vmem>>, %arg5: memref<1x128xf32, #tpu.memory_space<vmem>>, %arg6: memref<8x128xf32, #tpu.memory_space<vmem>>) attributes {dimension_semantics = [#tpu.dimension_semantics<parallel>], iteration_bounds = array<i64: 2>, scalar_prefetch = 0 : i64, scratch_operands = 0 : i64, tpu.core_type = #tpu.core_type<tc>, window_params = [{transform_indices = @transform_0, window_bounds = array<i64: 8, 576>}, {pipeline_mode = #tpu.pipeline_mode<synchronous>, transform_indices = @transform_1, window_bounds = array<i64: 576, 1024>}, {pipeline_mode = #tpu.pipeline_mode<synchronous>, transform_indices = @transform_2, window_bounds = array<i64: 1, 1024>}, {pipeline_mode = #tpu.pipeline_mode<synchronous>, transform_indices = @transform_3, window_bounds = array<i64: 1024, 128>}, {pipeline_mode = #tpu.pipeline_mode<synchronous>, transform_indices = @transform_4, window_bounds = array<i64: 1, 128>}, {transform_indices = @transform_5, window_bounds = array<i64: 8, 128>}]} {
    %c0 = arith.constant 0 : index
    %c0_0 = arith.constant 0 : index
    %0 = vector.load %arg1[%c0, %c0_0] : memref<8x576xbf16, #tpu.memory_space<vmem>>, vector<8x576xbf16>
    %c0_1 = arith.constant 0 : index
    %c0_2 = arith.constant 0 : index
    %1 = vector.load %arg2[%c0_1, %c0_2] : memref<576x1024xbf16, #tpu.memory_space<vmem>>, vector<576x1024xbf16>
    %cst = arith.constant dense<0.000000e+00> : vector<8x1024xf32>
    %2 = tpu.matmul %0, %1, %cst {dimension_numbers = #tpu.dot_dimension_numbers<[1], [0], [0], [1], [0, 0, 1, 1], [], []>} : vector<8x576xbf16>, vector<576x1024xbf16>, vector<8x1024xf32> -> vector<8x1024xf32>
    %c0_3 = arith.constant 0 : index
    %c0_4 = arith.constant 0 : index
    %3 = vector.load %arg3[%c0_3, %c0_4] : memref<1x1024xf32, #tpu.memory_space<vmem>>, vector<1x1024xf32>
    %4 = vector.broadcast %3 : vector<1x1024xf32> to vector<8x1024xf32>
    %5 = arith.addf %2, %4 : vector<8x1024xf32>
    %cst_5 = arith.constant 0.000000e+00 : f32
    %6 = vector.broadcast %cst_5 : f32 to vector<8x1024xf32>
    %7 = arith.maximumf %5, %6 : vector<8x1024xf32>
    %8 = arith.truncf %7 : vector<8x1024xf32> to vector<8x1024xbf16>
    %c0_6 = arith.constant 0 : index
    %c0_7 = arith.constant 0 : index
    %9 = vector.load %arg4[%c0_6, %c0_7] : memref<1024x128xbf16, #tpu.memory_space<vmem>>, vector<1024x128xbf16>
    %cst_8 = arith.constant dense<0.000000e+00> : vector<8x128xf32>
    %10 = tpu.matmul %8, %9, %cst_8 {dimension_numbers = #tpu.dot_dimension_numbers<[1], [0], [0], [1], [0, 0, 1, 1], [], []>} : vector<8x1024xbf16>, vector<1024x128xbf16>, vector<8x128xf32> -> vector<8x128xf32>
    %c0_9 = arith.constant 0 : index
    %c0_10 = arith.constant 0 : index
    %11 = vector.load %arg5[%c0_9, %c0_10] : memref<1x128xf32, #tpu.memory_space<vmem>>, vector<1x128xf32>
    %12 = vector.broadcast %11 : vector<1x128xf32> to vector<8x128xf32>
    %13 = arith.addf %10, %12 : vector<8x128xf32>
    %c0_11 = arith.constant 0 : index
    %c0_12 = arith.constant 0 : index
    %14 = vector.load %arg6[%c0_11, %c0_12] : memref<8x128xf32, #tpu.memory_space<vmem>>, vector<8x128xf32>
    tpu.vector_store %arg6[%c0_11, %c0_12], %13 {strides = array<i32>} : memref<8x128xf32, #tpu.memory_space<vmem>>, vector<8x128xf32>,
    return
  }
  func.func @transform_0(%arg0: i32) -> (i32, i32) {
    %c0_i32 = arith.constant 0 : i32
    %c0_i32_0 = arith.constant 0 : i32
    return %arg0, %c0_i32 : i32, i32
  }
  func.func @transform_1(%arg0: i32) -> (i32, i32) {
    %c0_i32 = arith.constant 0 : i32
    %c0_i32_0 = arith.constant 0 : i32
    %c0_i32_1 = arith.constant 0 : i32
    return %c0_i32, %c0_i32_0 : i32, i32
  }
  func.func @transform_2(%arg0: i32) -> (i32, i32) {
    %c0_i32 = arith.constant 0 : i32
    %c0_i32_0 = arith.constant 0 : i32
    %c0_i32_1 = arith.constant 0 : i32
    return %c0_i32, %c0_i32_0 : i32, i32
  }
  func.func @transform_3(%arg0: i32) -> (i32, i32) {
    %c0_i32 = arith.constant 0 : i32
    %c0_i32_0 = arith.constant 0 : i32
    %c0_i32_1 = arith.constant 0 : i32
    return %c0_i32, %c0_i32_0 : i32, i32
  }
  func.func @transform_4(%arg0: i32) -> (i32, i32) {
    %c0_i32 = arith.constant 0 : i32
    %c0_i32_0 = arith.constant 0 : i32
    %c0_i32_1 = arith.constant 0 : i32
    return %c0_i32, %c0_i32_0 : i32, i32
  }
  func.func @transform_5(%arg0: i32) -> (i32, i32) {
    %c0_i32 = arith.constant 0 : i32
    %c0_i32_0 = arith.constant 0 : i32
    return %arg0, %c0_i32 : i32, i32
  }
}

</mosaic_0001>

<llo_original>
// kernel: atari_a2c_forward.4
$region0: #{atari_a2c_forward.4}
  #allocation0 [shape = 'u32[]', space=smem, size = 0x4, offset = 0x4, fixed_abs, tag = 'smem constant byte address 0x4 - core index']
  #allocation1 [shape = 'u32[144,128]{1,0:T(1,128)}', space=vmem, size = 0x12000, scoped, tag = 'internal scratch']
  %s0 = inlined_call_operand.vmem [shape: bf16[2,169,64], index: 0, kind: input, shape index: {}]
  %s1 = inlined_call_operand.vmem [shape: bf16[256,32], index: 1, kind: input, shape index: {}]
  %s2 = inlined_call_operand.vmem [shape: f32[1,32], index: 2, kind: input, shape index: {}]
  %s3 = inlined_call_operand.vmem [shape: bf16[2,155,32], index: 3, kind: output, shape index: {}]
  %s4 = sld [smem:[#allocation0]]
  $region45: #{atari_a2c_forward.4} parent=0
    _
  %s6 = ssub.s32 1, %s4
  %s7 = scalar_select 0, %s6, %s4
  loop: start=0, step=1, limit=4
  $region2: #{atari_a2c_forward.4} parent=0 // loop_pre_header
    _
  $region3: #{atari_a2c_forward.4} parent=0 // loop_header
    %s9 = sphi 0, %s13
    %p10 = scmp.ge.s32.totalorder %s9, 4
    %s19 = sphi 0, %s21
    %s22 = sphi 0, %s19
    %s23 = sphi 0, %s22
    %s39 = sphi 0, %s23
    %s43 = sphi 0, %s43
    %s45 = sphi 0, %s43
    %s46 = sphi 0, %s45
    %s60 = sphi 0, %s46
    %s64 = sphi 0, %s64
    %s66 = sphi 0, %s64
    %s67 = sphi 0, %s66
    %s81 = sphi 0, %s67
    %s87 = sphi 0, %s89
    %s90 = sphi 0, %s87
    %s91 = sphi 0, %s90
    %s107 = sphi 0, %s91
  $region4: #{atari_a2c_forward.4} parent=0 // loop_header_branch
    %12 = sbr.rel (%p10) target = $region8
  $region5: #{atari_a2c_forward.4} parent=0 // loop_body
    %s14 = ssub.s32 %s9, 1
    %s15 = ssub.s32 %s9, 2
    %s16 = sadd.s32 %s9, 1
    %s17 = ssub.s32 %s9, %s16
    %p18 = scmp.eq.s32.totalorder %s17, 0
    %s20 = sadd.s32 %s19, 1
    %s21 = scalar_select %p18, %s19, %s20
    %p24 = pneg %p18
    %p25 = scmp.eq.s32.totalorder %s9, 1
    %p26 = por %p24, %p25
    %p27 = scmp.ne.s32.totalorder %s19, %s22
    %p28 = scmp.eq.s32.totalorder %s9, 0
    %p29 = por %p27, %p28
    %p30 = scmp.ne.s32.totalorder %s19, %s22
    %p31 = scmp.eq.s32.totalorder %s14, 1
    %p32 = por %p30, %p31
    %p33 = scmp.ne.s32.totalorder %s22, %s23
    %p34 = scmp.eq.s32.totalorder %s14, 0
    %p35 = por %p33, %p34
    %p36 = scmp.ne.s32.totalorder %s22, %s23
    %p37 = scmp.eq.s32.totalorder %s15, 1
    %p38 = por %p36, %p37
    %p40 = scmp.ne.s32.totalorder %s23, %s39
    %p41 = scmp.eq.s32.totalorder %s15, 0
    %p42 = por %p40, %p41
    %s44 = sadd.s32 %s43, 1
    %p47 = scmp.eq.s32.totalorder %s9, 1
    %p48 = scmp.ne.s32.totalorder %s43, %s45
    %p49 = scmp.eq.s32.totalorder %s9, 0
    %p50 = por %p48, %p49
    %p51 = scmp.ne.s32.totalorder %s43, %s45
    %p52 = scmp.eq.s32.totalorder %s14, 1
    %p53 = por %p51, %p52
    %p54 = scmp.ne.s32.totalorder %s45, %s46
    %p55 = scmp.eq.s32.totalorder %s14, 0
    %p56 = por %p54, %p55
    %p57 = scmp.ne.s32.totalorder %s45, %s46
    %p58 = scmp.eq.s32.totalorder %s15, 1
    %p59 = por %p57, %p58
    %p61 = scmp.ne.s32.totalorder %s46, %s60
    %p62 = scmp.eq.s32.totalorder %s15, 0
    %p63 = por %p61, %p62
    %s65 = sadd.s32 %s64, 1
    %p68 = scmp.eq.s32.totalorder %s9, 1
    %p69 = scmp.ne.s32.totalorder %s64, %s66
    %p70 = scmp.eq.s32.totalorder %s9, 0
    %p71 = por %p69, %p70
    %p72 = scmp.ne.s32.totalorder %s64, %s66
    %p73 = scmp.eq.s32.totalorder %s14, 1
    %p74 = por %p72, %p73
    %p75 = scmp.ne.s32.totalorder %s66, %s67
    %p76 = scmp.eq.s32.totalorder %s14, 0
    %p77 = por %p75, %p76
    %p78 = scmp.ne.s32.totalorder %s66, %s67
    %p79 = scmp.eq.s32.totalorder %s15, 1
    %p80 = por %p78, %p79
    %p82 = scmp.ne.s32.totalorder %s67, %s81
    %p83 = scmp.eq.s32.totalorder %s15, 0
    %p84 = por %p82, %p83
    %s85 = ssub.s32 %s9, %s16
    %p86 = scmp.eq.s32.totalorder %s85, 0
    %s88 = sadd.s32 %s87, 1
    %s89 = scalar_select %p86, %s87, %s88
    %p92 = pneg %p86
    %p93 = scmp.eq.s32.totalorder %s9, 1
    %p94 = por %p92, %p93
    %p95 = scmp.ne.s32.totalorder %s87, %s90
    %p96 = scmp.eq.s32.totalorder %s9, 0
    %p97 = por %p95, %p96
    %p98 = scmp.ne.s32.totalorder %s87, %s90
    %p99 = scmp.eq.s32.totalorder %s14, 1
    %p100 = por %p98, %p99
    %p101 = scmp.ne.s32.totalorder %s90, %s91
    %p102 = scmp.eq.s32.totalorder %s14, 0
    %p103 = por %p101, %p102
    %p104 = scmp.ne.s32.totalorder %s90, %s91
    %p105 = scmp.eq.s32.totalorder %s15, 1
    %p106 = por %p104, %p105
    %p108 = scmp.ne.s32.totalorder %s91, %s107
    %p109 = scmp.eq.s32.totalorder %s15, 0
    %p110 = por %p108, %p109
    %p111 = scmp.le.s32.totalorder 1, %s9
    %p112 = scmp.lt.s32.totalorder %s9, 3
    %p113 = pnand %p111, %p112
    %p114 = pneg %p113
    // Predicated region
    $region9: #{atari_a2c_forward.4} parent=5 // pred_check
      _
    $region10: #{atari_a2c_forward.4} parent=5 // pred_check_branch
      %116 = sbr.rel (%p113) target = $region12
    $region11: #{atari_a2c_forward.4} parent=5 // pred_region
      %s117 = ssub.s32 %s9, 1
      // Predicated region
      $region13: #{atari_a2c_forward.4} parent=11 // pred_check
        %p118 = pneg %p56
      $region14: #{atari_a2c_forward.4} parent=11 // pred_check_branch
        %120 = sbr.rel (%p118) target = $region16
      $region15: #{atari_a2c_forward.4} parent=11 // pred_region
        _
      $region16: #{atari_a2c_forward.4} parent=11 // pred_fallthru
        _
      // Predicated region
      $region17: #{atari_a2c_forward.4} parent=11 // pred_check
        %p121 = pneg %p77
      $region18: #{atari_a2c_forward.4} parent=11 // pred_check_branch
        %123 = sbr.rel (%p121) target = $region20
      $region19: #{atari_a2c_forward.4} parent=11 // pred_region
        _
      $region20: #{atari_a2c_forward.4} parent=11 // pred_fallthru
        _
    $region12: #{atari_a2c_forward.4} parent=5 // pred_fallthru
      _
    %p124 = scmp.lt.s32.totalorder %s9, 2
    // Predicated region
    $region21: #{atari_a2c_forward.4} parent=5 // pred_check
      %p125 = pneg %p124
    $region22: #{atari_a2c_forward.4} parent=5 // pred_check_branch
      %127 = sbr.rel (%p125) target = $region24
    $region23: #{atari_a2c_forward.4} parent=5 // pred_region
      // Predicated region
      $region25: #{atari_a2c_forward.4} parent=23 // pred_check
        %p128 = pneg %p29
      $region26: #{atari_a2c_forward.4} parent=23 // pred_check_branch
        %130 = sbr.rel (%p128) target = $region28
      $region27: #{atari_a2c_forward.4} parent=23 // pred_region
        %p131 = scmp.lt.s32.totalorder %s9, 1
        %s132 = scalar_select %p131, %s9, 1
        %s133 = smul.addr %s132, 22
        %s134 = smul.addr %s133, 4
        %s135 = scalar_lea.vmem %s0, %s134
      $region28: #{atari_a2c_forward.4} parent=23 // pred_fallthru
        _
    $region24: #{atari_a2c_forward.4} parent=5 // pred_fallthru
      _
    %p136 = scmp.le.s32.totalorder 1, %s9
    %p137 = scmp.lt.s32.totalorder %s9, 3
    %p138 = pnand %p136, %p137
    %p139 = pneg %p138
    // Predicated region
    $region29: #{atari_a2c_forward.4} parent=5 // pred_check
      _
    $region30: #{atari_a2c_forward.4} parent=5 // pred_check_branch
      %141 = sbr.rel (%p138) target = $region32
    $region31: #{atari_a2c_forward.4} parent=5 // pred_region
      %s142 = ssub.s32 %s9, 1
      %p143 = scmp.lt.s32.totalorder %s14, 1
      %s144 = scalar_select %p143, %s14, 1
      %s145 = smul.addr %s144, 22
      %s146 = smul.addr %s145, 4
      %s147 = scalar_lea.vmem %s0, %s146
      %p148 = pneg %p35
      %p149 = pneg %p32
      %p150 = pneg %p56
      %p151 = pneg %p53
      %p152 = pneg %p77
      %p153 = pneg %p74
      %p154 = pneg %p103
      %p155 = pneg %p100
      %p156 = scmp.lt.s32.totalorder %s14, 1
      %s157 = scalar_select %p156, %s14, 1
      %s158 = smul.addr %s157, 20
      %s159 = smul.addr %s158, 4
      %s160 = scalar_lea.vmem %s3, %s159
      %p161 = scmp.lt.s32.totalorder %s14, 1
      %s162 = scalar_select %p161, %s14, 1
      %s163 = smul.addr %s162, 22
      %s164 = smul.addr %s163, 4
      %s165 = scalar_lea.vmem %s0, %s164
      %p166 = scmp.lt.s32.totalorder %s14, 1
      %s167 = scalar_select %p166, %s14, 1
      %s168 = smul.addr %s167, 20
      %s169 = smul.addr %s168, 4
      %s170 = scalar_lea.vmem %s3, %s169
      %v172 = vld [vmem:[%s165] sm:$0xf]
      %v173 = vld [vmem:[%s165 + $0x4] sm:$0xf]
      %v174 = vld [vmem:[%s165 + $0x8] sm:$0xf]
      %v175 = vld [vmem:[%s165 + $0xc] sm:$0xf]
      %v176 = vld [vmem:[%s165 + $0x10] sm:$0xf]
      %v177 = vld [vmem:[%s165 + $0x14] sm:$0xf]
      %v178 = vld [vmem:[%s165 + $0x18] sm:$0xf]
      %v179 = vld [vmem:[%s165 + $0x1c] sm:$0xf]
      %v180 = vld [vmem:[%s165 + $0x20] sm:$0xf]
      %v181 = vld [vmem:[%s165 + $0x24] sm:$0xf]
      %v182 = vld [vmem:[%s165 + $0x28] sm:$0xf]
      %v183 = vld [vmem:[%s165 + $0x2c] sm:$0xf]
      %v184 = vld [vmem:[%s165 + $0x30] sm:$0xf]
      %v185 = vld [vmem:[%s165 + $0x34] sm:$0xf]
      %v186 = vld [vmem:[%s165 + $0x38] sm:$0xf]
      %v187 = vld [vmem:[%s165 + $0x3c] sm:$0xf]
      %v188 = vld [vmem:[%s165 + $0x40] sm:$0xf]
      %v189 = vld [vmem:[%s165 + $0x44] sm:$0xf]
      %v190 = vld [vmem:[%s165 + $0x48] sm:$0xf]
      %v191 = vld [vmem:[%s165 + $0x4c] sm:$0x3]
      %v192 = vld [vmem:[%s1] sm:$0xf]
      %v193 = vld [vmem:[%s1 + $0x4] sm:$0xf]
      %v194 = vld [vmem:[%s1 + $0x8] sm:$0xf]
      %v195 = vld [vmem:[%s1 + $0xc] sm:$0xf]
      %v196 = vld [vmem:[%s1 + $0x10] sm:$0xf]
      %v197 = vld [vmem:[%s1 + $0x14] sm:$0xf]
      %v198 = vld [vmem:[%s1 + $0x18] sm:$0xf]
      %v199 = vld [vmem:[%s1 + $0x1c] sm:$0xf]
      %v200 = vld [vmem:[%s1 + $0x20] sm:$0xf]
      %v201 = vld [vmem:[%s1 + $0x24] sm:$0xf]
      %v202 = vld [vmem:[%s1 + $0x28] sm:$0xf]
      %v203 = vld [vmem:[%s1 + $0x2c] sm:$0xf]
      %v204 = vld [vmem:[%s1 + $0x30] sm:$0xf]
      %v205 = vld [vmem:[%s1 + $0x34] sm:$0xf]
      %v206 = vld [vmem:[%s1 + $0x38] sm:$0xf]
      %v207 = vld [vmem:[%s1 + $0x3c] sm:$0xf]
      %v228 = vunpack.c.l.b16 %v172
      %v229 = vunpack.c.l.b16 %v173
      %v230 = vunpack.c.l.b16 %v174
      %v231 = vunpack.c.l.b16 %v175
      %v232 = vunpack.c.l.b16 %v176
      %v233 = vunpack.c.l.b16 %v177
      %v234 = vunpack.c.l.b16 %v178
      %v235 = vunpack.c.l.b16 %v179
      %v236 = vunpack.c.l.b16 %v180
      %v237 = vunpack.c.l.b16 %v181
      %v238 = vunpack.c.l.b16 %v182
      %v239 = vunpack.c.l.b16 %v183
      %v240 = vunpack.c.l.b16 %v184
      %v241 = vunpack.c.l.b16 %v185
      %v242 = vunpack.c.l.b16 %v186
      %v243 = vunpack.c.l.b16 %v187
      %v244 = vunpack.c.l.b16 %v188
      %v245 = vunpack.c.l.b16 %v189
      %v246 = vunpack.c.l.b16 %v190
      %v247 = vunpack.c.l.b16 %v191
      %v248 = vpack.c.b16 %v229, %v228
      %v249 = vpack.c.b16 %v231, %v230
      %v250 = vpack.c.b16 %v233, %v232
      %v251 = vpack.c.b16 %v235, %v234
      %v252 = vpack.c.b16 %v237, %v236
      %v253 = vpack.c.b16 %v239, %v238
      %v254 = vpack.c.b16 %v241, %v240
      %v255 = vpack.c.b16 %v243, %v242
      %v256 = vpack.c.b16 %v245, %v244
      %v257 = vpack.c.b16 %v247, %v246
      %vm258 = vsmask.f32 7424
      %v260 = vshrl.u32 %v248, 16
      %v262 = vshll.u32 %v248, 16
      %v264 = vrot.slane %v262, 1
      %v265 = vor.u32 %v260, %v264
      %v267 = vshll.u32 %v249, 16
      %v269 = vrot.slane %v267, 1
      %v270 = vsel %vm258, %v265, %v269
      %v271 = vshrl.u32 %v249, 16
      %v273 = vor.u32 %v271, %v269
      %v275 = vshll.u32 %v250, 16
      %v277 = vrot.slane %v275, 1
      %v278 = vsel %vm258, %v273, %v277
      %v279 = vshrl.u32 %v250, 16
      %v281 = vor.u32 %v279, %v277
      %v283 = vshll.u32 %v251, 16
      %v285 = vrot.slane %v283, 1
      %v286 = vsel %vm258, %v281, %v285
      %v287 = vshrl.u32 %v251, 16
      %v289 = vor.u32 %v287, %v285
      %v291 = vshll.u32 %v252, 16
      %v293 = vrot.slane %v291, 1
      %v294 = vsel %vm258, %v289, %v293
      %v295 = vshrl.u32 %v252, 16
      %v297 = vor.u32 %v295, %v293
      %v299 = vshll.u32 %v253, 16
      %v301 = vrot.slane %v299, 1
      %v302 = vsel %vm258, %v297, %v301
      %v303 = vshrl.u32 %v253, 16
      %v305 = vor.u32 %v303, %v301
      %v307 = vshll.u32 %v254, 16
      %v309 = vrot.slane %v307, 1
      %v310 = vsel %vm258, %v305, %v309
      %v311 = vshrl.u32 %v254, 16
      %v313 = vor.u32 %v311, %v309
      %v315 = vshll.u32 %v255, 16
      %v317 = vrot.slane %v315, 1
      %v318 = vsel %vm258, %v313, %v317
      %v319 = vshrl.u32 %v255, 16
      %v321 = vor.u32 %v319, %v317
      %v323 = vshll.u32 %v256, 16
      %v325 = vrot.slane %v323, 1
      %v326 = vsel %vm258, %v321, %v325
      %v327 = vshrl.u32 %v256, 16
      %v329 = vor.u32 %v327, %v325
      %v331 = vshll.u32 %v257, 16
      %v333 = vrot.slane %v331, 1
      %v334 = vsel %vm258, %v329, %v333
      %v335 = vshrl.u32 %v257, 16
      %v337 = vor.u32 %v335, %v333
      %v346 = vunpack.c.l.b16 %v200
      %v347 = vunpack.c.l.b16 %v201
      %v348 = vunpack.c.l.b16 %v202
      %v349 = vunpack.c.l.b16 %v203
      %v350 = vunpack.c.l.b16 %v204
      %v351 = vunpack.c.l.b16 %v205
      %v352 = vunpack.c.l.b16 %v206
      %v353 = vunpack.c.l.b16 %v207
      %v354 = vpack.c.b16 %v347, %v346
      %v355 = vpack.c.b16 %v349, %v348
      %v356 = vpack.c.b16 %v351, %v350
      %v357 = vpack.c.b16 %v353, %v352
      %vm362 = vcmask 523264
      %v364 = vsel %vm362, %v270, 0
      %v367 = vsel %vm362, %v278, 0
      %v370 = vsel %vm362, %v286, 0
      %v373 = vsel %vm362, %v294, 0
      %v376 = vsel %vm362, %v302, 0
      %v379 = vsel %vm362, %v310, 0
      %v382 = vsel %vm362, %v318, 0
      %v385 = vsel %vm362, %v326, 0
      %v388 = vsel %vm362, %v334, 0
      %v391 = vsel %vm362, %v337, 0
      %393 = vmatprep.subr.bf16.mxu0 0
      %394 = vmatpush1.bf16.msra.mxu0 %v354
      %395 = vmatprep.subr.bf16.mxu0 0
      %396 = vmatpush1.bf16.msra.mxu0 %v355
      %397 = vmatprep.subr.bf16.mxu0 0
      %398 = vmatpush1.bf16.msra.mxu0 %v356
      %399 = vmatprep.subr.bf16.mxu0 0
      %400 = vmatpush1.bf16.msra.mxu0 %v357
      %401 = vmatprep.subr.bf16.mxu0 0
      %402 = vmatpush1.bf16.msra.mxu0 0
      %403 = vmatprep.subr.bf16.mxu0 0
      %404 = vmatpush1.bf16.msra.mxu0 0
      %405 = vmatprep.subr.bf16.mxu0 0
      %406 = vmatpush1.bf16.msra.mxu0 0
      %407 = vmatprep.subr.bf16.mxu0 0
      %408 = vmatpush1.bf16.msra.mxu0 0
      %409 = vmatprep.subr.bf16.mxu0 0
      %410 = vmatpush1.bf16.msra.mxu0 0
      %411 = vmatprep.subr.bf16.mxu0 0
      %412 = vmatpush1.bf16.msra.mxu0 0
      %413 = vmatprep.subr.bf16.mxu0 0
      %414 = vmatpush1.bf16.msra.mxu0 0
      %415 = vmatprep.subr.bf16.mxu0 0
      %416 = vmatpush1.bf16.msra.mxu0 0
      %417 = vmatprep.subr.bf16.mxu0 0
      %418 = vmatpush1.bf16.msra.mxu0 0
      %419 = vmatprep.subr.bf16.mxu0 0
      %420 = vmatpush1.bf16.msra.mxu0 0
      %421 = vmatprep.subr.bf16.mxu0 0
      %422 = vmatpush1.bf16.msra.mxu0 0
      %423 = vmatprep.subr.bf16.mxu0 0
      %424 = vmatpush1.bf16.msra.mxu0 0
      %425 = vmatprep.mubr.bf16.mxu0 0
      %426 = vmatmul.mubr.bf16.gmra.mrb[0].mxu0 %v364
      %v427 = vpop.f32.mrb[0].mxu0
      %v428 = vadd.f32 0.0, %v427
      %v429 = vpop.f32.mrb[0].mxu0
      %v430 = vpop.f32.mrb[0].mxu0
      %v431 = vadd.f32 0.0, %v430
      %v432 = vpop.f32.mrb[0].mxu0
      %433 = vmatprep.mubr.bf16.mxu0 0
      %434 = vmatmul.mubr.bf16.gmra.mrb[0].mxu0 %v367
      %v435 = vpop.f32.mrb[0].mxu0
      %v436 = vadd.f32 0.0, %v435
      %v437 = vpop.f32.mrb[0].mxu0
      %v438 = vpop.f32.mrb[0].mxu0
      %v439 = vadd.f32 0.0, %v438
      %v440 = vpop.f32.mrb[0].mxu0
      %441 = vmatprep.mubr.bf16.mxu0 0
      %442 = vmatmul.mubr.bf16.gmra.mrb[0].mxu0 %v370
      %v443 = vpop.f32.mrb[0].mxu0
      %v444 = vadd.f32 0.0, %v443
      %v445 = vpop.f32.mrb[0].mxu0
      %v446 = vpop.f32.mrb[0].mxu0
      %v447 = vadd.f32 0.0, %v446
      %v448 = vpop.f32.mrb[0].mxu0
      %449 = vmatprep.mubr.bf16.mxu0 0
      %450 = vmatmul.mubr.bf16.gmra.mrb[0].mxu0 %v373
      %v451 = vpop.f32.mrb[0].mxu0
      %v452 = vadd.f32 0.0, %v451
      %v453 = vpop.f32.mrb[0].mxu0
      %v454 = vpop.f32.mrb[0].mxu0
      %v455 = vadd.f32 0.0, %v454
      %v456 = vpop.f32.mrb[0].mxu0
      %457 = vmatprep.mubr.bf16.mxu0 0
      %458 = vmatmul.mubr.bf16.gmra.mrb[0].mxu0 %v376
      %v459 = vpop.f32.mrb[0].mxu0
      %v460 = vadd.f32 0.0, %v459
      %v461 = vpop.f32.mrb[0].mxu0
      %v462 = vpop.f32.mrb[0].mxu0
      %v463 = vadd.f32 0.0, %v462
      %v464 = vpop.f32.mrb[0].mxu0
      %465 = vmatprep.mubr.bf16.mxu0 0
      %466 = vmatmul.mubr.bf16.gmra.mrb[0].mxu0 %v379
      %v467 = vpop.f32.mrb[0].mxu0
      %v468 = vadd.f32 0.0, %v467
      %v469 = vpop.f32.mrb[0].mxu0
      %v470 = vpop.f32.mrb[0].mxu0
      %v471 = vadd.f32 0.0, %v470
      %v472 = vpop.f32.mrb[0].mxu0
      %473 = vmatprep.mubr.bf16.mxu0 0
      %474 = vmatmul.mubr.bf16.gmra.mrb[0].mxu0 %v382
      %v475 = vpop.f32.mrb[0].mxu0
      %v476 = vadd.f32 0.0, %v475
      %v477 = vpop.f32.mrb[0].mxu0
      %v478 = vpop.f32.mrb[0].mxu0
      %v479 = vadd.f32 0.0, %v478
      %v480 = vpop.f32.mrb[0].mxu0
      %481 = vmatprep.mubr.bf16.mxu0 0
      %482 = vmatmul.mubr.bf16.gmra.mrb[0].mxu0 %v385
      %v483 = vpop.f32.mrb[0].mxu0
      %v484 = vadd.f32 0.0, %v483
      %v485 = vpop.f32.mrb[0].mxu0
      %v486 = vpop.f32.mrb[0].mxu0
      %v487 = vadd.f32 0.0, %v486
      %v488 = vpop.f32.mrb[0].mxu0
      %489 = vmatprep.mubr.bf16.mxu0 0
      %490 = vmatmul.mubr.bf16.gmra.mrb[0].mxu0 %v388
      %v491 = vpop.f32.mrb[0].mxu0
      %v492 = vadd.f32 0.0, %v491
      %v493 = vpop.f32.mrb[0].mxu0
      %v494 = vpop.f32.mrb[0].mxu0
      %v495 = vadd.f32 0.0, %v494
      %v496 = vpop.f32.mrb[0].mxu0
      %497 = vmatprep.mubr.bf16.mxu0 0
      %498 = vmatmul.mubr.bf16.gmra.mrb[0].mxu0 %v391
      %v499 = vpop.f32.mrb[0].mxu0
      %v500 = vadd.f32 0.0, %v499
      %v501 = vpop.f32.mrb[0].mxu0
      %v502 = vpop.f32.mrb[0].mxu0
      %v503 = vadd.f32 0.0, %v502
      %v504 = vpop.f32.mrb[0].mxu0
      %505 = vdwg.mxu0
      %v514 = vunpack.c.l.b16 %v192
      %v515 = vunpack.c.l.b16 %v193
      %v516 = vunpack.c.l.b16 %v194
      %v517 = vunpack.c.l.b16 %v195
      %v518 = vunpack.c.l.b16 %v196
      %v519 = vunpack.c.l.b16 %v197
      %v520 = vunpack.c.l.b16 %v198
      %v521 = vunpack.c.l.b16 %v199
      %v522 = vpack.c.b16 %v515, %v514
      %v523 = vpack.c.b16 %v517, %v516
      %v524 = vpack.c.b16 %v519, %v518
      %v525 = vpack.c.b16 %v521, %v520
      %v530 = vsel %vm362, %v248, 0
      %v532 = vsel %vm362, %v249, 0
      %v534 = vsel %vm362, %v250, 0
      %v536 = vsel %vm362, %v251, 0
      %v538 = vsel %vm362, %v252, 0
      %v540 = vsel %vm362, %v253, 0
      %v542 = vsel %vm362, %v254, 0
      %v544 = vsel %vm362, %v255, 0
      %v546 = vsel %vm362, %v256, 0
      %v548 = vsel %vm362, %v257, 0
      %550 = vmatprep.subr.bf16.mxu0 0
      %551 = vmatpush1.bf16.msra.mxu0 %v522
      %552 = vmatprep.subr.bf16.mxu0 0
      %553 = vmatpush1.bf16.msra.mxu0 %v523
      %554 = vmatprep.subr.bf16.mxu0 0
      %555 = vmatpush1.bf16.msra.mxu0 %v524
      %556 = vmatprep.subr.bf16.mxu0 0
      %557 = vmatpush1.bf16.msra.mxu0 %v525
      %558 = vmatprep.subr.bf16.mxu0 0
      %559 = vmatpush1.bf16.msra.mxu0 0
      %560 = vmatprep.subr.bf16.mxu0 0
      %561 = vmatpush1.bf16.msra.mxu0 0
      %562 = vmatprep.subr.bf16.mxu0 0
      %563 = vmatpush1.bf16.msra.mxu0 0
      %564 = vmatprep.subr.bf16.mxu0 0
      %565 = vmatpush1.bf16.msra.mxu0 0
      %566 = vmatprep.subr.bf16.mxu0 0
      %567 = vmatpush1.bf16.msra.mxu0 0
      %568 = vmatprep.subr.bf16.mxu0 0
      %569 = vmatpush1.bf16.msra.mxu0 0
      %570 = vmatprep.subr.bf16.mxu0 0
      %571 = vmatpush1.bf16.msra.mxu0 0
      %572 = vmatprep.subr.bf16.mxu0 0
      %573 = vmatpush1.bf16.msra.mxu0 0
      %574 = vmatprep.subr.bf16.mxu0 0
      %575 = vmatpush1.bf16.msra.mxu0 0
      %576 = vmatprep.subr.bf16.mxu0 0
      %577 = vmatpush1.bf16.msra.mxu0 0
      %578 = vmatprep.subr.bf16.mxu0 0
      %579 = vmatpush1.bf16.msra.mxu0 0
      %580 = vmatprep.subr.bf16.mxu0 0
      %581 = vmatpush1.bf16.msra.mxu0 0
      %582 = vmatprep.mubr.bf16.mxu0 0
      %583 = vmatmul.mubr.bf16.gmra.mrb[0].mxu0 %v530
      %v584 = vpop.f32.mrb[0].mxu0
      %v585 = vadd.f32 %v428, %v584
      %v586 = vpop.f32.mrb[0].mxu0
      %v587 = vpop.f32.mrb[0].mxu0
      %v588 = vadd.f32 %v431, %v587
      %v589 = vpop.f32.mrb[0].mxu0
      %590 = vmatprep.mubr.bf16.mxu0 0
      %591 = vmatmul.mubr.bf16.gmra.mrb[0].mxu0 %v532
      %v592 = vpop.f32.mrb[0].mxu0
      %v593 = vadd.f32 %v436, %v592
      %v594 = vpop.f32.mrb[0].mxu0
      %v595 = vpop.f32.mrb[0].mxu0
      %v596 = vadd.f32 %v439, %v595
      %v597 = vpop.f32.mrb[0].mxu0
      %598 = vmatprep.mubr.bf16.mxu0 0
      %599 = vmatmul.mubr.bf16.gmra.mrb[0].mxu0 %v534
      %v600 = vpop.f32.mrb[0].mxu0
      %v601 = vadd.f32 %v444, %v600
      %v602 = vpop.f32.mrb[0].mxu0
      %v603 = vpop.f32.mrb[0].mxu0
      %v604 = vadd.f32 %v447, %v603
      %v605 = vpop.f32.mrb[0].mxu0
      %606 = vmatprep.mubr.bf16.mxu0 0
      %607 = vmatmul.mubr.bf16.gmra.mrb[0].mxu0 %v536
      %v608 = vpop.f32.mrb[0].mxu0
      %v609 = vadd.f32 %v452, %v608
      %v610 = vpop.f32.mrb[0].mxu0
      %v611 = vpop.f32.mrb[0].mxu0
      %v612 = vadd.f32 %v455, %v611
      %v613 = vpop.f32.mrb[0].mxu0
      %614 = vmatprep.mubr.bf16.mxu0 0
      %615 = vmatmul.mubr.bf16.gmra.mrb[0].mxu0 %v538
      %v616 = vpop.f32.mrb[0].mxu0
      %v617 = vadd.f32 %v460, %v616
      %v618 = vpop.f32.mrb[0].mxu0
      %v619 = vpop.f32.mrb[0].mxu0
      %v620 = vadd.f32 %v463, %v619
      %v621 = vpop.f32.mrb[0].mxu0
      %622 = vmatprep.mubr.bf16.mxu0 0
      %623 = vmatmul.mubr.bf16.gmra.mrb[0].mxu0 %v540
      %v624 = vpop.f32.mrb[0].mxu0
      %v625 = vadd.f32 %v468, %v624
      %v626 = vpop.f32.mrb[0].mxu0
      %v627 = vpop.f32.mrb[0].mxu0
      %v628 = vadd.f32 %v471, %v627
      %v629 = vpop.f32.mrb[0].mxu0
      %630 = vmatprep.mubr.bf16.mxu0 0
      %631 = vmatmul.mubr.bf16.gmra.mrb[0].mxu0 %v542
      %v632 = vpop.f32.mrb[0].mxu0
      %v633 = vadd.f32 %v476, %v632
      %v634 = vpop.f32.mrb[0].mxu0
      %v635 = vpop.f32.mrb[0].mxu0
      %v636 = vadd.f32 %v479, %v635
      %v637 = vpop.f32.mrb[0].mxu0
      %638 = vmatprep.mubr.bf16.mxu0 0
      %639 = vmatmul.mubr.bf16.gmra.mrb[0].mxu0 %v544
      %v640 = vpop.f32.mrb[0].mxu0
      %v641 = vadd.f32 %v484, %v640
      %v642 = vpop.f32.mrb[0].mxu0
      %v643 = vpop.f32.mrb[0].mxu0
      %v644 = vadd.f32 %v487, %v643
      %v645 = vpop.f32.mrb[0].mxu0
      %646 = vmatprep.mubr.bf16.mxu0 0
      %647 = vmatmul.mubr.bf16.gmra.mrb[0].mxu0 %v546
      %v648 = vpop.f32.mrb[0].mxu0
      %v649 = vadd.f32 %v492, %v648
      %v650 = vpop.f32.mrb[0].mxu0
      %v651 = vpop.f32.mrb[0].mxu0
      %v652 = vadd.f32 %v495, %v651
      %v653 = vpop.f32.mrb[0].mxu0
      %654 = vmatprep.mubr.bf16.mxu0 0
      %655 = vmatmul.mubr.bf16.gmra.mrb[0].mxu0 %v548
      %v656 = vpop.f32.mrb[0].mxu0
      %v657 = vadd.f32 %v500, %v656
      %v658 = vpop.f32.mrb[0].mxu0
      %v659 = vpop.f32.mrb[0].mxu0
      %v660 = vadd.f32 %v503, %v659
      %v661 = vpop.f32.mrb[0].mxu0
      %662 = vdwg.mxu0
      %v663 = vld [vmem:[%s165 + $0x4] sm:$0xc]
      %v664 = vld [vmem:[%s165 + $0x8] sm:$0xf]
      %v665 = vld [vmem:[%s165 + $0xc] sm:$0xf]
      %v666 = vld [vmem:[%s165 + $0x10] sm:$0xf]
      %v667 = vld [vmem:[%s165 + $0x14] sm:$0xf]
      %v668 = vld [vmem:[%s165 + $0x18] sm:$0xf]
      %v669 = vld [vmem:[%s165 + $0x1c] sm:$0xf]
      %v670 = vld [vmem:[%s165 + $0x20] sm:$0xf]
      %v671 = vld [vmem:[%s165 + $0x24] sm:$0xf]
      %v672 = vld [vmem:[%s165 + $0x28] sm:$0xf]
      %v673 = vld [vmem:[%s165 + $0x2c] sm:$0xf]
      %v674 = vld [vmem:[%s165 + $0x30] sm:$0xf]
      %v675 = vld [vmem:[%s165 + $0x34] sm:$0xf]
      %v676 = vld [vmem:[%s165 + $0x38] sm:$0xf]
      %v677 = vld [vmem:[%s165 + $0x3c] sm:$0xf]
      %v678 = vld [vmem:[%s165 + $0x40] sm:$0xf]
      %v679 = vld [vmem:[%s165 + $0x44] sm:$0xf]
      %v680 = vld [vmem:[%s165 + $0x48] sm:$0xf]
      %v681 = vld [vmem:[%s165 + $0x4c] sm:$0xf]
      %v682 = vld [vmem:[%s165 + $0x50] sm:$0xf]
      %v683 = vld [vmem:[%s1 + $0x40] sm:$0xf]
      %v684 = vld [vmem:[%s1 + $0x44] sm:$0xf]
      %v685 = vld [vmem:[%s1 + $0x48] sm:$0xf]
      %v686 = vld [vmem:[%s1 + $0x4c] sm:$0xf]
      %v687 = vld [vmem:[%s1 + $0x50] sm:$0xf]
      %v688 = vld [vmem:[%s1 + $0x54] sm:$0xf]
      %v689 = vld [vmem:[%s1 + $0x58] sm:$0xf]
      %v690 = vld [vmem:[%s1 + $0x5c] sm:$0xf]
      %v711 = vunpack.c.l.b16 %v663
      %v712 = vunpack.c.l.b16 %v664
      %v713 = vunpack.c.l.b16 %v665
      %v714 = vunpack.c.l.b16 %v666
      %v715 = vunpack.c.l.b16 %v667
      %v716 = vunpack.c.l.b16 %v668
      %v717 = vunpack.c.l.b16 %v669
      %v718 = vunpack.c.l.b16 %v670
      %v719 = vunpack.c.l.b16 %v671
      %v720 = vunpack.c.l.b16 %v672
      %v721 = vunpack.c.l.b16 %v673
      %v722 = vunpack.c.l.b16 %v674
      %v723 = vunpack.c.l.b16 %v675
      %v724 = vunpack.c.l.b16 %v676
      %v725 = vunpack.c.l.b16 %v677
      %v726 = vunpack.c.l.b16 %v678
      %v727 = vunpack.c.l.b16 %v679
      %v728 = vunpack.c.l.b16 %v680
      %v729 = vunpack.c.l.b16 %v681
      %v730 = vunpack.c.l.b16 %v682
      %v731 = vpack.c.b16 %v712, %v711
      %v732 = vpack.c.b16 %v714, %v713
      %v733 = vpack.c.b16 %v716, %v715
      %v734 = vpack.c.b16 %v718, %v717
      %v735 = vpack.c.b16 %v720, %v719
      %v736 = vpack.c.b16 %v722, %v721
      %v737 = vpack.c.b16 %v724, %v723
      %v738 = vpack.c.b16 %v726, %v725
      %v739 = vpack.c.b16 %v728, %v727
      %v740 = vpack.c.b16 %v730, %v729
      %vm741 = vsmask.f32 5376
      %v743 = vshrl.u32 %v731, 16
      %v745 = vrot.slane %v743, 2
      %v746 = vshll.u32 %v731, 16
      %v748 = vrot.slane %v746, 3
      %v749 = vor.u32 %v745, %v748
      %v751 = vshrl.u32 %v732, 16
      %v753 = vrot.slane %v751, 2
      %v754 = vshll.u32 %v732, 16
      %v756 = vrot.slane %v754, 3
      %v757 = vor.u32 %v753, %v756
      %v758 = vsel %vm741, %v749, %v757
      %v760 = vshrl.u32 %v733, 16
      %v762 = vrot.slane %v760, 2
      %v763 = vshll.u32 %v733, 16
      %v765 = vrot.slane %v763, 3
      %v766 = vor.u32 %v762, %v765
      %v767 = vsel %vm741, %v757, %v766
      %v769 = vshrl.u32 %v734, 16
      %v771 = vrot.slane %v769, 2
      %v772 = vshll.u32 %v734, 16
      %v774 = vrot.slane %v772, 3
      %v775 = vor.u32 %v771, %v774
      %v776 = vsel %vm741, %v766, %v775
      %v778 = vshrl.u32 %v735, 16
      %v780 = vrot.slane %v778, 2
      %v781 = vshll.u32 %v735, 16
      %v783 = vrot.slane %v781, 3
      %v784 = vor.u32 %v780, %v783
      %v785 = vsel %vm741, %v775, %v784
      %v787 = vshrl.u32 %v736, 16
      %v789 = vrot.slane %v787, 2
      %v790 = vshll.u32 %v736, 16
      %v792 = vrot.slane %v790, 3
      %v793 = vor.u32 %v789, %v792
      %v794 = vsel %vm741, %v784, %v793
      %v796 = vshrl.u32 %v737, 16
      %v798 = vrot.slane %v796, 2
      %v799 = vshll.u32 %v737, 16
      %v801 = vrot.slane %v799, 3
      %v802 = vor.u32 %v798, %v801
      %v803 = vsel %vm741, %v793, %v802
      %v805 = vshrl.u32 %v738, 16
      %v807 = vrot.slane %v805, 2
      %v808 = vshll.u32 %v738, 16
      %v810 = vrot.slane %v808, 3
      %v811 = vor.u32 %v807, %v810
      %v812 = vsel %vm741, %v802, %v811
      %v814 = vshrl.u32 %v739, 16
      %v816 = vrot.slane %v814, 2
      %v817 = vshll.u32 %v739, 16
      %v819 = vrot.slane %v817, 3
      %v820 = vor.u32 %v816, %v819
      %v821 = vsel %vm741, %v811, %v820
      %v823 = vshrl.u32 %v740, 16
      %v825 = vrot.slane %v823, 2
      %v826 = vshll.u32 %v740, 16
      %v828 = vrot.slane %v826, 3
      %v829 = vor.u32 %v825, %v828
      %v830 = vsel %vm741, %v820, %v829
      %v839 = vunpack.c.l.b16 %v683
      %v840 = vunpack.c.l.b16 %v684
      %v841 = vunpack.c.l.b16 %v685
      %v842 = vunpack.c.l.b16 %v686
      %v843 = vunpack.c.l.b16 %v687
      %v844 = vunpack.c.l.b16 %v688
      %v845 = vunpack.c.l.b16 %v689
      %v846 = vunpack.c.l.b16 %v690
      %v847 = vpack.c.b16 %v840, %v839
      %v848 = vpack.c.b16 %v842, %v841
      %v849 = vpack.c.b16 %v844, %v843
      %v850 = vpack.c.b16 %v846, %v845
      %v856 = vsel %vm362, %v758, 0
      %v859 = vsel %vm362, %v767, 0
      %v862 = vsel %vm362, %v776, 0
      %v865 = vsel %vm362, %v785, 0
      %v868 = vsel %vm362, %v794, 0
      %v871 = vsel %vm362, %v803, 0
      %v874 = vsel %vm362, %v812, 0
      %v877 = vsel %vm362, %v821, 0
      %v880 = vsel %vm362, %v830, 0
      %v883 = vsel %vm362, %v829, 0
      %885 = vmatprep.subr.bf16.mxu0 0
      %886 = vmatpush1.bf16.msra.mxu0 %v847
      %887 = vmatprep.subr.bf16.mxu0 0
      %888 = vmatpush1.bf16.msra.mxu0 %v848
      %889 = vmatprep.subr.bf16.mxu0 0
      %890 = vmatpush1.bf16.msra.mxu0 %v849
      %891 = vmatprep.subr.bf16.mxu0 0
      %892 = vmatpush1.bf16.msra.mxu0 %v850
      %893 = vmatprep.subr.bf16.mxu0 0
      %894 = vmatpush1.bf16.msra.mxu0 0
      %895 = vmatprep.subr.bf16.mxu0 0
      %896 = vmatpush1.bf16.msra.mxu0 0
      %897 = vmatprep.subr.bf16.mxu0 0
      %898 = vmatpush1.bf16.msra.mxu0 0
      %899 = vmatprep.subr.bf16.mxu0 0
      %900 = vmatpush1.bf16.msra.mxu0 0
      %901 = vmatprep.subr.bf16.mxu0 0
      %902 = vmatpush1.bf16.msra.mxu0 0
      %903 = vmatprep.subr.bf16.mxu0 0
      %904 = vmatpush1.bf16.msra.mxu0 0
      %905 = vmatprep.subr.bf16.mxu0 0
      %906 = vmatpush1.bf16.msra.mxu0 0
      %907 = vmatprep.subr.bf16.mxu0 0
      %908 = vmatpush1.bf16.msra.mxu0 0
      %909 = vmatprep.subr.bf16.mxu0 0
      %910 = vmatpush1.bf16.msra.mxu0 0
      %911 = vmatprep.subr.bf16.mxu0 0
      %912 = vmatpush1.bf16.msra.mxu0 0
      %913 = vmatprep.subr.bf16.mxu0 0
      %914 = vmatpush1.bf16.msra.mxu0 0
      %915 = vmatprep.subr.bf16.mxu0 0
      %916 = vmatpush1.bf16.msra.mxu0 0
      %917 = vmatprep.mubr.bf16.mxu0 0
      %918 = vmatmul.mubr.bf16.gmra.mrb[0].mxu0 %v856
      %v919 = vpop.f32.mrb[0].mxu0
      %v920 = vadd.f32 0.0, %v919
      %v921 = vpop.f32.mrb[0].mxu0
      %v922 = vpop.f32.mrb[0].mxu0
      %v923 = vadd.f32 0.0, %v922
      %v924 = vpop.f32.mrb[0].mxu0
      %925 = vmatprep.mubr.bf16.mxu0 0
      %926 = vmatmul.mubr.bf16.gmra.mrb[0].mxu0 %v859
      %v927 = vpop.f32.mrb[0].mxu0
      %v928 = vadd.f32 0.0, %v927
      %v929 = vpop.f32.mrb[0].mxu0
      %v930 = vpop.f32.mrb[0].mxu0
      %v931 = vadd.f32 0.0, %v930
      %v932 = vpop.f32.mrb[0].mxu0
      %933 = vmatprep.mubr.bf16.mxu0 0
      %934 = vmatmul.mubr.bf16.gmra.mrb[0].mxu0 %v862
      %v935 = vpop.f32.mrb[0].mxu0
      %v936 = vadd.f32 0.0, %v935
      %v937 = vpop.f32.mrb[0].mxu0
      %v938 = vpop.f32.mrb[0].mxu0
      %v939 = vadd.f32 0.0, %v938
      %v940 = vpop.f32.mrb[0].mxu0
      %941 = vmatprep.mubr.bf16.mxu0 0
      %942 = vmatmul.mubr.bf16.gmra.mrb[0].mxu0 %v865
      %v943 = vpop.f32.mrb[0].mxu0
      %v944 = vadd.f32 0.0, %v943
      %v945 = vpop.f32.mrb[0].mxu0
      %v946 = vpop.f32.mrb[0].mxu0
      %v947 = vadd.f32 0.0, %v946
      %v948 = vpop.f32.mrb[0].mxu0
      %949 = vmatprep.mubr.bf16.mxu0 0
      %950 = vmatmul.mubr.bf16.gmra.mrb[0].mxu0 %v868
      %v951 = vpop.f32.mrb[0].mxu0
      %v952 = vadd.f32 0.0, %v951
      %v953 = vpop.f32.mrb[0].mxu0
      %v954 = vpop.f32.mrb[0].mxu0
      %v955 = vadd.f32 0.0, %v954
      %v956 = vpop.f32.mrb[0].mxu0
      %957 = vmatprep.mubr.bf16.mxu0 0
      %958 = vmatmul.mubr.bf16.gmra.mrb[0].mxu0 %v871
      %v959 = vpop.f32.mrb[0].mxu0
      %v960 = vadd.f32 0.0, %v959
      %v961 = vpop.f32.mrb[0].mxu0
      %v962 = vpop.f32.mrb[0].mxu0
      %v963 = vadd.f32 0.0, %v962
      %v964 = vpop.f32.mrb[0].mxu0
      %965 = vmatprep.mubr.bf16.mxu0 0
      %966 = vmatmul.mubr.bf16.gmra.mrb[0].mxu0 %v874
      %v967 = vpop.f32.mrb[0].mxu0
      %v968 = vadd.f32 0.0, %v967
      %v969 = vpop.f32.mrb[0].mxu0
      %v970 = vpop.f32.mrb[0].mxu0
      %v971 = vadd.f32 0.0, %v970
      %v972 = vpop.f32.mrb[0].mxu0
      %973 = vmatprep.mubr.bf16.mxu0 0
      %974 = vmatmul.mubr.bf16.gmra.mrb[0].mxu0 %v877
      %v975 = vpop.f32.mrb[0].mxu0
      %v976 = vadd.f32 0.0, %v975
      %v977 = vpop.f32.mrb[0].mxu0
      %v978 = vpop.f32.mrb[0].mxu0
      %v979 = vadd.f32 0.0, %v978
      %v980 = vpop.f32.mrb[0].mxu0
      %981 = vmatprep.mubr.bf16.mxu0 0
      %982 = vmatmul.mubr.bf16.gmra.mrb[0].mxu0 %v880
      %v983 = vpop.f32.mrb[0].mxu0
      %v984 = vadd.f32 0.0, %v983
      %v985 = vpop.f32.mrb[0].mxu0
      %v986 = vpop.f32.mrb[0].mxu0
      %v987 = vadd.f32 0.0, %v986
      %v988 = vpop.f32.mrb[0].mxu0
      %989 = vmatprep.mubr.bf16.mxu0 0
      %990 = vmatmul.mubr.bf16.gmra.mrb[0].mxu0 %v883
      %v991 = vpop.f32.mrb[0].mxu0
      %v992 = vadd.f32 0.0, %v991
      %v993 = vpop.f32.mrb[0].mxu0
      %v994 = vpop.f32.mrb[0].mxu0
      %v995 = vadd.f32 0.0, %v994
      %v996 = vpop.f32.mrb[0].mxu0
      %997 = vdwg.mxu0
      %v998 = vadd.f32 %v585, %v920
      %v999 = vadd.f32 %v588, %v923
      %v1000 = vadd.f32 %v593, %v928
      %v1001 = vadd.f32 %v596, %v931
      %v1002 = vadd.f32 %v601, %v936
      %v1003 = vadd.f32 %v604, %v939
      %v1004 = vadd.f32 %v609, %v944
      %v1005 = vadd.f32 %v612, %v947
      %v1006 = vadd.f32 %v617, %v952
      %v1007 = vadd.f32 %v620, %v955
      %v1008 = vadd.f32 %v625, %v960
      %v1009 = vadd.f32 %v628, %v963
      %v1010 = vadd.f32 %v633, %v968
      %v1011 = vadd.f32 %v636, %v971
      %v1012 = vadd.f32 %v641, %v976
      %v1013 = vadd.f32 %v644, %v979
      %v1014 = vadd.f32 %v649, %v984
      %v1015 = vadd.f32 %v652, %v987
      %v1016 = vadd.f32 %v657, %v992
      %v1017 = vadd.f32 %v660, %v995
      %v1018 = vld [vmem:[%s165 + $0x4] sm:$0x8]
      %v1019 = vld [vmem:[%s165 + $0x8] sm:$0xf]
      %v1020 = vld [vmem:[%s165 + $0xc] sm:$0xf]
      %v1021 = vld [vmem:[%s165 + $0x10] sm:$0xf]
      %v1022 = vld [vmem:[%s165 + $0x14] sm:$0xf]
      %v1023 = vld [vmem:[%s165 + $0x18] sm:$0xf]
      %v1024 = vld [vmem:[%s165 + $0x1c] sm:$0xf]
      %v1025 = vld [vmem:[%s165 + $0x20] sm:$0xf]
      %v1026 = vld [vmem:[%s165 + $0x24] sm:$0xf]
      %v1027 = vld [vmem:[%s165 + $0x28] sm:$0xf]
      %v1028 = vld [vmem:[%s165 + $0x2c] sm:$0xf]
      %v1029 = vld [vmem:[%s165 + $0x30] sm:$0xf]
      %v1030 = vld [vmem:[%s165 + $0x34] sm:$0xf]
      %v1031 = vld [vmem:[%s165 + $0x38] sm:$0xf]
      %v1032 = vld [vmem:[%s165 + $0x3c] sm:$0xf]
      %v1033 = vld [vmem:[%s165 + $0x40] sm:$0xf]
      %v1034 = vld [vmem:[%s165 + $0x44] sm:$0xf]
      %v1035 = vld [vmem:[%s165 + $0x48] sm:$0xf]
      %v1036 = vld [vmem:[%s165 + $0x4c] sm:$0xf]
      %v1037 = vld [vmem:[%s165 + $0x50] sm:$0xf]
      %v1038 = vld [vmem:[%s165 + $0x54] sm:$0x1]
      %v1039 = vld [vmem:[%s1 + $0x60] sm:$0xf]
      %v1040 = vld [vmem:[%s1 + $0x64] sm:$0xf]
      %v1041 = vld [vmem:[%s1 + $0x68] sm:$0xf]
      %v1042 = vld [vmem:[%s1 + $0x6c] sm:$0xf]
      %v1043 = vld [vmem:[%s1 + $0x70] sm:$0xf]
      %v1044 = vld [vmem:[%s1 + $0x74] sm:$0xf]
      %v1045 = vld [vmem:[%s1 + $0x78] sm:$0xf]
      %v1046 = vld [vmem:[%s1 + $0x7c] sm:$0xf]
      %v1068 = vunpack.c.l.b16 %v1018
      %v1069 = vunpack.c.l.b16 %v1019
      %v1070 = vunpack.c.l.b16 %v1020
      %v1071 = vunpack.c.l.b16 %v1021
      %v1072 = vunpack.c.l.b16 %v1022
      %v1073 = vunpack.c.l.b16 %v1023
      %v1074 = vunpack.c.l.b16 %v1024
      %v1075 = vunpack.c.l.b16 %v1025
      %v1076 = vunpack.c.l.b16 %v1026
      %v1077 = vunpack.c.l.b16 %v1027
      %v1078 = vunpack.c.l.b16 %v1028
      %v1079 = vunpack.c.l.b16 %v1029
      %v1080 = vunpack.c.l.b16 %v1030
      %v1081 = vunpack.c.l.b16 %v1031
      %v1082 = vunpack.c.l.b16 %v1032
      %v1083 = vunpack.c.l.b16 %v1033
      %v1084 = vunpack.c.l.b16 %v1034
      %v1085 = vunpack.c.l.b16 %v1035
      %v1086 = vunpack.c.l.b16 %v1036
      %v1087 = vunpack.c.l.b16 %v1037
      %v1088 = vunpack.c.l.b16 %v1038
      %v1089 = vpack.c.b16 %v1069, %v1068
      %v1090 = vpack.c.b16 %v1071, %v1070
      %v1091 = vpack.c.b16 %v1073, %v1072
      %v1092 = vpack.c.b16 %v1075, %v1074
      %v1093 = vpack.c.b16 %v1077, %v1076
      %v1094 = vpack.c.b16 %v1079, %v1078
      %v1095 = vpack.c.b16 %v1081, %v1080
      %v1096 = vpack.c.b16 %v1083, %v1082
      %v1097 = vpack.c.b16 %v1085, %v1084
      %v1098 = vpack.c.b16 %v1087, %v1086
      %v1099 = vpack.c.b16 %v1088, %v1088
      %vm1100 = vcmask 1044480
      %v1101 = vrot.slane %v1089, 3
      %v1102 = vrot.slane %v1090, 3
      %v1103 = vsel %vm1100, %v1101, %v1102
      %v1104 = vrot.slane %v1091, 3
      %v1105 = vsel %vm1100, %v1102, %v1104
      %v1106 = vrot.slane %v1092, 3
      %v1107 = vsel %vm1100, %v1104, %v1106
      %v1108 = vrot.slane %v1093, 3
      %v1109 = vsel %vm1100, %v1106, %v1108
      %v1110 = vrot.slane %v1094, 3
      %v1111 = vsel %vm1100, %v1108, %v1110
      %v1112 = vrot.slane %v1095, 3
      %v1113 = vsel %vm1100, %v1110, %v1112
      %v1114 = vrot.slane %v1096, 3
      %v1115 = vsel %vm1100, %v1112, %v1114
      %v1116 = vrot.slane %v1097, 3
      %v1117 = vsel %vm1100, %v1114, %v1116
      %v1118 = vrot.slane %v1098, 3
      %v1119 = vsel %vm1100, %v1116, %v1118
      %v1120 = vrot.slane %v1099, 3
      %v1121 = vsel %vm1100, %v1118, %v1120
      %v1130 = vunpack.c.l.b16 %v1039
      %v1131 = vunpack.c.l.b16 %v1040
      %v1132 = vunpack.c.l.b16 %v1041
      %v1133 = vunpack.c.l.b16 %v1042
      %v1134 = vunpack.c.l.b16 %v1043
      %v1135 = vunpack.c.l.b16 %v1044
      %v1136 = vunpack.c.l.b16 %v1045
      %v1137 = vunpack.c.l.b16 %v1046
      %v1138 = vpack.c.b16 %v1131, %v1130
      %v1139 = vpack.c.b16 %v1133, %v1132
      %v1140 = vpack.c.b16 %v1135, %v1134
      %v1141 = vpack.c.b16 %v1137, %v1136
      %v1147 = vsel %vm362, %v1103, 0
      %v1150 = vsel %vm362, %v1105, 0
      %v1153 = vsel %vm362, %v1107, 0
      %v1156 = vsel %vm362, %v1109, 0
      %v1159 = vsel %vm362, %v1111, 0
      %v1162 = vsel %vm362, %v1113, 0
      %v1165 = vsel %vm362, %v1115, 0
      %v1168 = vsel %vm362, %v1117, 0
      %v1171 = vsel %vm362, %v1119, 0
      %v1174 = vsel %vm362, %v1121, 0
      %1176 = vmatprep.subr.bf16.mxu0 0
      %1177 = vmatpush1.bf16.msra.mxu0 %v1138
      %1178 = vmatprep.subr.bf16.mxu0 0
      %1179 = vmatpush1.bf16.msra.mxu0 %v1139
      %1180 = vmatprep.subr.bf16.mxu0 0
      %1181 = vmatpush1.bf16.msra.mxu0 %v1140
      %1182 = vmatprep.subr.bf16.mxu0 0
      %1183 = vmatpush1.bf16.msra.mxu0 %v1141
      %1184 = vmatprep.subr.bf16.mxu0 0
      %1185 = vmatpush1.bf16.msra.mxu0 0
      %1186 = vmatprep.subr.bf16.mxu0 0
      %1187 = vmatpush1.bf16.msra.mxu0 0
      %1188 = vmatprep.subr.bf16.mxu0 0
      %1189 = vmatpush1.bf16.msra.mxu0 0
      %1190 = vmatprep.subr.bf16.mxu0 0
      %1191 = vmatpush1.bf16.msra.mxu0 0
      %1192 = vmatprep.subr.bf16.mxu0 0
      %1193 = vmatpush1.bf16.msra.mxu0 0
      %1194 = vmatprep.subr.bf16.mxu0 0
      %1195 = vmatpush1.bf16.msra.mxu0 0
      %1196 = vmatprep.subr.bf16.mxu0 0
      %1197 = vmatpush1.bf16.msra.mxu0 0
      %1198 = vmatprep.subr.bf16.mxu0 0
      %1199 = vmatpush1.bf16.msra.mxu0 0
      %1200 = vmatprep.subr.bf16.mxu0 0
      %1201 = vmatpush1.bf16.msra.mxu0 0
      %1202 = vmatprep.subr.bf16.mxu0 0
      %1203 = vmatpush1.bf16.msra.mxu0 0
      %1204 = vmatprep.subr.bf16.mxu0 0
      %1205 = vmatpush1.bf16.msra.mxu0 0
      %1206 = vmatprep.subr.bf16.mxu0 0
      %1207 = vmatpush1.bf16.msra.mxu0 0
      %1208 = vmatprep.mubr.bf16.mxu0 0
      %1209 = vmatmul.mubr.bf16.gmra.mrb[0].mxu0 %v1147
      %v1210 = vpop.f32.mrb[0].mxu0
      %v1211 = vadd.f32 0.0, %v1210
      %v1212 = vpop.f32.mrb[0].mxu0
      %v1213 = vpop.f32.mrb[0].mxu0
      %v1214 = vadd.f32 0.0, %v1213
      %v1215 = vpop.f32.mrb[0].mxu0
      %1216 = vmatprep.mubr.bf16.mxu0 0
      %1217 = vmatmul.mubr.bf16.gmra.mrb[0].mxu0 %v1150
      %v1218 = vpop.f32.mrb[0].mxu0
      %v1219 = vadd.f32 0.0, %v1218
      %v1220 = vpop.f32.mrb[0].mxu0
      %v1221 = vpop.f32.mrb[0].mxu0
      %v1222 = vadd.f32 0.0, %v1221
      %v1223 = vpop.f32.mrb[0].mxu0
      %1224 = vmatprep.mubr.bf16.mxu0 0
      %1225 = vmatmul.mubr.bf16.gmra.mrb[0].mxu0 %v1153
      %v1226 = vpop.f32.mrb[0].mxu0
      %v1227 = vadd.f32 0.0, %v1226
      %v1228 = vpop.f32.mrb[0].mxu0
      %v1229 = vpop.f32.mrb[0].mxu0
      %v1230 = vadd.f32 0.0, %v1229
      %v1231 = vpop.f32.mrb[0].mxu0
      %1232 = vmatprep.mubr.bf16.mxu0 0
      %1233 = vmatmul.mubr.bf16.gmra.mrb[0].mxu0 %v1156
      %v1234 = vpop.f32.mrb[0].mxu0
      %v1235 = vadd.f32 0.0, %v1234
      %v1236 = vpop.f32.mrb[0].mxu0
      %v1237 = vpop.f32.mrb[0].mxu0
      %v1238 = vadd.f32 0.0, %v1237
      %v1239 = vpop.f32.mrb[0].mxu0
      %1240 = vmatprep.mubr.bf16.mxu0 0
      %1241 = vmatmul.mubr.bf16.gmra.mrb[0].mxu0 %v1159
      %v1242 = vpop.f32.mrb[0].mxu0
      %v1243 = vadd.f32 0.0, %v1242
      %v1244 = vpop.f32.mrb[0].mxu0
      %v1245 = vpop.f32.mrb[0].mxu0
      %v1246 = vadd.f32 0.0, %v1245
      %v1247 = vpop.f32.mrb[0].mxu0
      %1248 = vmatprep.mubr.bf16.mxu0 0
      %1249 = vmatmul.mubr.bf16.gmra.mrb[0].mxu0 %v1162
      %v1250 = vpop.f32.mrb[0].mxu0
      %v1251 = vadd.f32 0.0, %v1250
      %v1252 = vpop.f32.mrb[0].mxu0
      %v1253 = vpop.f32.mrb[0].mxu0
      %v1254 = vadd.f32 0.0, %v1253
      %v1255 = vpop.f32.mrb[0].mxu0
      %1256 = vmatprep.mubr.bf16.mxu0 0
      %1257 = vmatmul.mubr.bf16.gmra.mrb[0].mxu0 %v1165
      %v1258 = vpop.f32.mrb[0].mxu0
      %v1259 = vadd.f32 0.0, %v1258
      %v1260 = vpop.f32.mrb[0].mxu0
      %v1261 = vpop.f32.mrb[0].mxu0
      %v1262 = vadd.f32 0.0, %v1261
      %v1263 = vpop.f32.mrb[0].mxu0
      %1264 = vmatprep.mubr.bf16.mxu0 0
      %1265 = vmatmul.mubr.bf16.gmra.mrb[0].mxu0 %v1168
      %v1266 = vpop.f32.mrb[0].mxu0
      %v1267 = vadd.f32 0.0, %v1266
      %v1268 = vpop.f32.mrb[0].mxu0
      %v1269 = vpop.f32.mrb[0].mxu0
      %v1270 = vadd.f32 0.0, %v1269
      %v1271 = vpop.f32.mrb[0].mxu0
      %1272 = vmatprep.mubr.bf16.mxu0 0
      %1273 = vmatmul.mubr.bf16.gmra.mrb[0].mxu0 %v1171
      %v1274 = vpop.f32.mrb[0].mxu0
      %v1275 = vadd.f32 0.0, %v1274
      %v1276 = vpop.f32.mrb[0].mxu0
      %v1277 = vpop.f32.mrb[0].mxu0
      %v1278 = vadd.f32 0.0, %v1277
      %v1279 = vpop.f32.mrb[0].mxu0
      %1280 = vmatprep.mubr.bf16.mxu0 0
      %1281 = vmatmul.mubr.bf16.gmra.mrb[0].mxu0 %v1174
      %v1282 = vpop.f32.mrb[0].mxu0
      %v1283 = vadd.f32 0.0, %v1282
      %v1284 = vpop.f32.mrb[0].mxu0
      %v1285 = vpop.f32.mrb[0].mxu0
      %v1286 = vadd.f32 0.0, %v1285
      %v1287 = vpop.f32.mrb[0].mxu0
      %1288 = vdwg.mxu0
      %v1289 = vadd.f32 %v998, %v1211
      %v1290 = vadd.f32 %v999, %v1214
      %v1291 = vadd.f32 %v1000, %v1219
      %v1292 = vadd.f32 %v1001, %v1222
      %v1293 = vadd.f32 %v1002, %v1227
      %v1294 = vadd.f32 %v1003, %v1230
      %v1295 = vadd.f32 %v1004, %v1235
      %v1296 = vadd.f32 %v1005, %v1238
      %v1297 = vadd.f32 %v1006, %v1243
      %v1298 = vadd.f32 %v1007, %v1246
      %v1299 = vadd.f32 %v1008, %v1251
      %v1300 = vadd.f32 %v1009, %v1254
      %v1301 = vadd.f32 %v1010, %v1259
      %v1302 = vadd.f32 %v1011, %v1262
      %v1303 = vadd.f32 %v1012, %v1267
      %v1304 = vadd.f32 %v1013, %v1270
      %v1305 = vadd.f32 %v1014, %v1275
      %v1306 = vadd.f32 %v1015, %v1278
      %v1307 = vadd.f32 %v1016, %v1283
      %v1308 = vadd.f32 %v1017, %v1286
      %v1309 = vld [vmem:[%s2] sm:$0x1]
      %v1311 = vlaneseq
      %v1312 = vshrl.u32 %v1311, 7
      %v1313 = vsub.s32 0, %v1312
      %v1314 = vrot.slane %v1309, %v1313
      %v1316 = vadd.f32 %v1289, %v1314
      %v1317 = vadd.f32 %v1290, %v1314
      %v1318 = vadd.f32 %v1291, %v1314
      %v1319 = vadd.f32 %v1292, %v1314
      %v1320 = vadd.f32 %v1293, %v1314
      %v1321 = vadd.f32 %v1294, %v1314
      %v1322 = vadd.f32 %v1295, %v1314
      %v1323 = vadd.f32 %v1296, %v1314
      %v1324 = vadd.f32 %v1297, %v1314
      %v1325 = vadd.f32 %v1298, %v1314
      %v1326 = vadd.f32 %v1299, %v1314
      %v1327 = vadd.f32 %v1300, %v1314
      %v1328 = vadd.f32 %v1301, %v1314
      %v1329 = vadd.f32 %v1302, %v1314
      %v1330 = vadd.f32 %v1303, %v1314
      %v1331 = vadd.f32 %v1304, %v1314
      %v1332 = vadd.f32 %v1305, %v1314
      %v1333 = vadd.f32 %v1306, %v1314
      %v1334 = vadd.f32 %v1307, %v1314
      %v1335 = vadd.f32 %v1308, %v1314
      %v1336 = vmax.f32 %v1316, 0.0
      %v1337 = vmax.f32 %v1317, 0.0
      %v1338 = vmax.f32 %v1318, 0.0
      %v1339 = vmax.f32 %v1319, 0.0
      %v1340 = vmax.f32 %v1320, 0.0
      %v1341 = vmax.f32 %v1321, 0.0
      %v1342 = vmax.f32 %v1322, 0.0
      %v1343 = vmax.f32 %v1323, 0.0
      %v1344 = vmax.f32 %v1324, 0.0
      %v1345 = vmax.f32 %v1325, 0.0
      %v1346 = vmax.f32 %v1326, 0.0
      %v1347 = vmax.f32 %v1327, 0.0
      %v1348 = vmax.f32 %v1328, 0.0
      %v1349 = vmax.f32 %v1329, 0.0
      %v1350 = vmax.f32 %v1330, 0.0
      %v1351 = vmax.f32 %v1331, 0.0
      %v1352 = vmax.f32 %v1332, 0.0
      %v1353 = vmax.f32 %v1333, 0.0
      %v1354 = vmax.f32 %v1334, 0.0
      %v1355 = vmax.f32 %v1335, 0.0
      %v1356 = vpack.c.bf16 %v1337, %v1336
      %v1357 = vpack.c.bf16 %v1339, %v1338
      %v1358 = vpack.c.bf16 %v1341, %v1340
      %v1359 = vpack.c.bf16 %v1343, %v1342
      %v1360 = vpack.c.bf16 %v1345, %v1344
      %v1361 = vpack.c.bf16 %v1347, %v1346
      %v1362 = vpack.c.bf16 %v1349, %v1348
      %v1363 = vpack.c.bf16 %v1351, %v1350
      %v1364 = vpack.c.bf16 %v1353, %v1352
      %v1365 = vpack.c.bf16 %v1355, %v1354
      %v1376 = vunpack.c.l.b16 %v1356
      %v1377 = vunpack.c.h.b16 %v1356
      %v1378 = vunpack.c.l.b16 %v1357
      %v1379 = vunpack.c.h.b16 %v1357
      %v1380 = vunpack.c.l.b16 %v1358
      %v1381 = vunpack.c.h.b16 %v1358
      %v1382 = vunpack.c.l.b16 %v1359
      %v1383 = vunpack.c.h.b16 %v1359
      %v1384 = vunpack.c.l.b16 %v1360
      %v1385 = vunpack.c.h.b16 %v1360
      %v1386 = vunpack.c.l.b16 %v1361
      %v1387 = vunpack.c.h.b16 %v1361
      %v1388 = vunpack.c.l.b16 %v1362
      %v1389 = vunpack.c.h.b16 %v1362
      %v1390 = vunpack.c.l.b16 %v1363
      %v1391 = vunpack.c.h.b16 %v1363
      %v1392 = vunpack.c.l.b16 %v1364
      %v1393 = vunpack.c.h.b16 %v1364
      %v1394 = vunpack.c.l.b16 %v1365
      %v1395 = vunpack.c.h.b16 %v1365
      %v1396 = vpack.c.b16 %v1376, %v1376
      %v1397 = vpack.c.b16 %v1377, %v1377
      %v1398 = vpack.c.b16 %v1378, %v1378
      %v1399 = vpack.c.b16 %v1379, %v1379
      %v1400 = vpack.c.b16 %v1380, %v1380
      %v1401 = vpack.c.b16 %v1381, %v1381
      %v1402 = vpack.c.b16 %v1382, %v1382
      %v1403 = vpack.c.b16 %v1383, %v1383
      %v1404 = vpack.c.b16 %v1384, %v1384
      %v1405 = vpack.c.b16 %v1385, %v1385
      %v1406 = vpack.c.b16 %v1386, %v1386
      %v1407 = vpack.c.b16 %v1387, %v1387
      %v1408 = vpack.c.b16 %v1388, %v1388
      %v1409 = vpack.c.b16 %v1389, %v1389
      %v1410 = vpack.c.b16 %v1390, %v1390
      %v1411 = vpack.c.b16 %v1391, %v1391
      %v1412 = vpack.c.b16 %v1392, %v1392
      %v1413 = vpack.c.b16 %v1393, %v1393
      %v1414 = vpack.c.b16 %v1394, %v1394
      %v1415 = vpack.c.b16 %v1395, %v1395
      %vm1436 = vcmask 257024
      %1437 = vst.msk [vmem:[%s170] sm:$0xf] %vm1436, %v1396
      %1438 = vst.msk [vmem:[%s170 + $0x4] sm:$0xf] %vm1436, %v1397
      %1439 = vst.msk [vmem:[%s170 + $0x8] sm:$0xf] %vm1436, %v1398
      %1440 = vst.msk [vmem:[%s170 + $0xc] sm:$0xf] %vm1436, %v1399
      %1441 = vst.msk [vmem:[%s170 + $0x10] sm:$0xf] %vm1436, %v1400
      %1442 = vst.msk [vmem:[%s170 + $0x14] sm:$0xf] %vm1436, %v1401
      %1443 = vst.msk [vmem:[%s170 + $0x18] sm:$0xf] %vm1436, %v1402
      %1444 = vst.msk [vmem:[%s170 + $0x1c] sm:$0xf] %vm1436, %v1403
      %1445 = vst.msk [vmem:[%s170 + $0x20] sm:$0xf] %vm1436, %v1404
      %1446 = vst.msk [vmem:[%s170 + $0x24] sm:$0xf] %vm1436, %v1405
      %1447 = vst.msk [vmem:[%s170 + $0x28] sm:$0xf] %vm1436, %v1406
      %1448 = vst.msk [vmem:[%s170 + $0x2c] sm:$0xf] %vm1436, %v1407
      %1449 = vst.msk [vmem:[%s170 + $0x30] sm:$0xf] %vm1436, %v1408
      %1450 = vst.msk [vmem:[%s170 + $0x34] sm:$0xf] %vm1436, %v1409
      %1451 = vst.msk [vmem:[%s170 + $0x38] sm:$0xf] %vm1436, %v1410
      %1452 = vst.msk [vmem:[%s170 + $0x3c] sm:$0xf] %vm1436, %v1411
      %1453 = vst.msk [vmem:[%s170 + $0x40] sm:$0xf] %vm1436, %v1412
      %1454 = vst.msk [vmem:[%s170 + $0x44] sm:$0xf] %vm1436, %v1413
      %1455 = vst.msk [vmem:[%s170 + $0x48] sm:$0xf] %vm1436, %v1414
      %vm1456 = vcmask 254976
      %vm1457 = vsmask.f32 1280
      %vm1458 = vmand %vm1456, %vm1457
      %v1459 = vld [vmem:[%s170 + $0x4c] sm:$0x3]
      %v1460 = vsel %vm1458, %v1415, %v1459
      %1461 = vst [vmem:[%s170 + $0x4c] sm:$0x3] %v1460
      %p1462 = scmp.lt.s32.totalorder %s14, 1
      %s1463 = scalar_select %p1462, %s14, 1
      %s1464 = smul.addr %s1463, 20
      %s1465 = smul.addr %s1464, 4
      %s1466 = scalar_lea.vmem %s3, %s1465
      // Predicated region
      $region33: #{atari_a2c_forward.4} parent=31 // pred_check
        %p1467 = pneg %p100
      $region34: #{atari_a2c_forward.4} parent=31 // pred_check_branch
        %1469 = sbr.rel (%p1467) target = $region36
      $region35: #{atari_a2c_forward.4} parent=31 // pred_region
        _
      $region36: #{atari_a2c_forward.4} parent=31 // pred_fallthru
        _
    $region32: #{atari_a2c_forward.4} parent=5 // pred_fallthru
      _
    %p1470 = scmp.le.s32.totalorder 2, %s9
    // Predicated region
    $region37: #{atari_a2c_forward.4} parent=5 // pred_check
      %p1471 = pneg %p1470
    $region38: #{atari_a2c_forward.4} parent=5 // pred_check_branch
      %1473 = sbr.rel (%p1471) target = $region40
    $region39: #{atari_a2c_forward.4} parent=5 // pred_region
      %s1474 = ssub.s32 %s9, 2
      // Predicated region
      $region41: #{atari_a2c_forward.4} parent=39 // pred_check
        %p1475 = pneg %p106
      $region42: #{atari_a2c_forward.4} parent=39 // pred_check_branch
        %1477 = sbr.rel (%p1475) target = $region44
      $region43: #{atari_a2c_forward.4} parent=39 // pred_region
        %p1478 = scmp.lt.s32.totalorder %s15, 1
        %s1479 = scalar_select %p1478, %s15, 1
        %s1480 = smul.addr %s1479, 20
        %s1481 = smul.addr %s1480, 4
        %s1482 = scalar_lea.vmem %s3, %s1481
      $region44: #{atari_a2c_forward.4} parent=39 // pred_fallthru
        _
    $region40: #{atari_a2c_forward.4} parent=5 // pred_fallthru
      _
  $region6: #{atari_a2c_forward.4} parent=0 // loop_footer
    %s13 = sadd.s32 1, %s9
  $region7: #{atari_a2c_forward.4} parent=0 // loop_footer_branch
    %8 = sbr.rel target = $region3
  $region8: #{atari_a2c_forward.4} parent=0 // loop_exit
    _

// kernel: atari_a2c_forward.5
$region0: #{atari_a2c_forward.5}
  #allocation0 [shape = 'u32[]', space=smem, size = 0x4, offset = 0x4, fixed_abs, tag = 'smem constant byte address 0x4 - core index']
  #allocation1 [shape = 'u32[144,128]{1,0:T(1,128)}', space=vmem, size = 0x12000, scoped, tag = 'internal scratch']
  %s0 = inlined_call_operand.vmem [shape: bf16[2,36,128], index: 0, kind: input, shape index: {}]
  %s1 = inlined_call_operand.vmem [shape: bf16[512,64], index: 1, kind: input, shape index: {}]
  %s2 = inlined_call_operand.vmem [shape: f32[1,64], index: 2, kind: input, shape index: {}]
  %s3 = inlined_call_operand.vmem [shape: bf16[2,29,64], index: 3, kind: output, shape index: {}]
  %s4 = sld [smem:[#allocation0]]
  $region45: #{atari_a2c_forward.5} parent=0
    _
  %s6 = ssub.s32 1, %s4
  %s7 = scalar_select 0, %s6, %s4
  loop: start=0, step=1, limit=4
  $region2: #{atari_a2c_forward.5} parent=0 // loop_pre_header
    _
  $region3: #{atari_a2c_forward.5} parent=0 // loop_header
    %s9 = sphi 0, %s13
    %p10 = scmp.ge.s32.totalorder %s9, 4
    %s19 = sphi 0, %s21
    %s22 = sphi 0, %s19
    %s23 = sphi 0, %s22
    %s39 = sphi 0, %s23
    %s43 = sphi 0, %s43
    %s45 = sphi 0, %s43
    %s46 = sphi 0, %s45
    %s60 = sphi 0, %s46
    %s64 = sphi 0, %s64
    %s66 = sphi 0, %s64
    %s67 = sphi 0, %s66
    %s81 = sphi 0, %s67
    %s87 = sphi 0, %s89
    %s90 = sphi 0, %s87
    %s91 = sphi 0, %s90
    %s107 = sphi 0, %s91
  $region4: #{atari_a2c_forward.5} parent=0 // loop_header_branch
    %12 = sbr.rel (%p10) target = $region8
  $region5: #{atari_a2c_forward.5} parent=0 // loop_body
    %s14 = ssub.s32 %s9, 1
    %s15 = ssub.s32 %s9, 2
    %s16 = sadd.s32 %s9, 1
    %s17 = ssub.s32 %s9, %s16
    %p18 = scmp.eq.s32.totalorder %s17, 0
    %s20 = sadd.s32 %s19, 1
    %s21 = scalar_select %p18, %s19, %s20
    %p24 = pneg %p18
    %p25 = scmp.eq.s32.totalorder %s9, 1
    %p26 = por %p24, %p25
    %p27 = scmp.ne.s32.totalorder %s19, %s22
    %p28 = scmp.eq.s32.totalorder %s9, 0
    %p29 = por %p27, %p28
    %p30 = scmp.ne.s32.totalorder %s19, %s22
    %p31 = scmp.eq.s32.totalorder %s14, 1
    %p32 = por %p30, %p31
    %p33 = scmp.ne.s32.totalorder %s22, %s23
    %p34 = scmp.eq.s32.totalorder %s14, 0
    %p35 = por %p33, %p34
    %p36 = scmp.ne.s32.totalorder %s22, %s23
    %p37 = scmp.eq.s32.totalorder %s15, 1
    %p38 = por %p36, %p37
    %p40 = scmp.ne.s32.totalorder %s23, %s39
    %p41 = scmp.eq.s32.totalorder %s15, 0
    %p42 = por %p40, %p41
    %s44 = sadd.s32 %s43, 1
    %p47 = scmp.eq.s32.totalorder %s9, 1
    %p48 = scmp.ne.s32.totalorder %s43, %s45
    %p49 = scmp.eq.s32.totalorder %s9, 0
    %p50 = por %p48, %p49
    %p51 = scmp.ne.s32.totalorder %s43, %s45
    %p52 = scmp.eq.s32.totalorder %s14, 1
    %p53 = por %p51, %p52
    %p54 = scmp.ne.s32.totalorder %s45, %s46
    %p55 = scmp.eq.s32.totalorder %s14, 0
    %p56 = por %p54, %p55
    %p57 = scmp.ne.s32.totalorder %s45, %s46
    %p58 = scmp.eq.s32.totalorder %s15, 1
    %p59 = por %p57, %p58
    %p61 = scmp.ne.s32.totalorder %s46, %s60
    %p62 = scmp.eq.s32.totalorder %s15, 0
    %p63 = por %p61, %p62
    %s65 = sadd.s32 %s64, 1
    %p68 = scmp.eq.s32.totalorder %s9, 1
    %p69 = scmp.ne.s32.totalorder %s64, %s66
    %p70 = scmp.eq.s32.totalorder %s9, 0
    %p71 = por %p69, %p70
    %p72 = scmp.ne.s32.totalorder %s64, %s66
    %p73 = scmp.eq.s32.totalorder %s14, 1
    %p74 = por %p72, %p73
    %p75 = scmp.ne.s32.totalorder %s66, %s67
    %p76 = scmp.eq.s32.totalorder %s14, 0
    %p77 = por %p75, %p76
    %p78 = scmp.ne.s32.totalorder %s66, %s67
    %p79 = scmp.eq.s32.totalorder %s15, 1
    %p80 = por %p78, %p79
    %p82 = scmp.ne.s32.totalorder %s67, %s81
    %p83 = scmp.eq.s32.totalorder %s15, 0
    %p84 = por %p82, %p83
    %s85 = ssub.s32 %s9, %s16
    %p86 = scmp.eq.s32.totalorder %s85, 0
    %s88 = sadd.s32 %s87, 1
    %s89 = scalar_select %p86, %s87, %s88
    %p92 = pneg %p86
    %p93 = scmp.eq.s32.totalorder %s9, 1
    %p94 = por %p92, %p93
    %p95 = scmp.ne.s32.totalorder %s87, %s90
    %p96 = scmp.eq.s32.totalorder %s9, 0
    %p97 = por %p95, %p96
    %p98 = scmp.ne.s32.totalorder %s87, %s90
    %p99 = scmp.eq.s32.totalorder %s14, 1
    %p100 = por %p98, %p99
    %p101 = scmp.ne.s32.totalorder %s90, %s91
    %p102 = scmp.eq.s32.totalorder %s14, 0
    %p103 = por %p101, %p102
    %p104 = scmp.ne.s32.totalorder %s90, %s91
    %p105 = scmp.eq.s32.totalorder %s15, 1
    %p106 = por %p104, %p105
    %p108 = scmp.ne.s32.totalorder %s91, %s107
    %p109 = scmp.eq.s32.totalorder %s15, 0
    %p110 = por %p108, %p109
    %p111 = scmp.le.s32.totalorder 1, %s9
    %p112 = scmp.lt.s32.totalorder %s9, 3
    %p113 = pnand %p111, %p112
    %p114 = pneg %p113
    // Predicated region
    $region9: #{atari_a2c_forward.5} parent=5 // pred_check
      _
    $region10: #{atari_a2c_forward.5} parent=5 // pred_check_branch
      %116 = sbr.rel (%p113) target = $region12
    $region11: #{atari_a2c_forward.5} parent=5 // pred_region
      %s117 = ssub.s32 %s9, 1
      // Predicated region
      $region13: #{atari_a2c_forward.5} parent=11 // pred_check
        %p118 = pneg %p56
      $region14: #{atari_a2c_forward.5} parent=11 // pred_check_branch
        %120 = sbr.rel (%p118) target = $region16
      $region15: #{atari_a2c_forward.5} parent=11 // pred_region
        _
      $region16: #{atari_a2c_forward.5} parent=11 // pred_fallthru
        _
      // Predicated region
      $region17: #{atari_a2c_forward.5} parent=11 // pred_check
        %p121 = pneg %p77
      $region18: #{atari_a2c_forward.5} parent=11 // pred_check_branch
        %123 = sbr.rel (%p121) target = $region20
      $region19: #{atari_a2c_forward.5} parent=11 // pred_region
        _
      $region20: #{atari_a2c_forward.5} parent=11 // pred_fallthru
        _
    $region12: #{atari_a2c_forward.5} parent=5 // pred_fallthru
      _
    %p124 = scmp.lt.s32.totalorder %s9, 2
    // Predicated region
    $region21: #{atari_a2c_forward.5} parent=5 // pred_check
      %p125 = pneg %p124
    $region22: #{atari_a2c_forward.5} parent=5 // pred_check_branch
      %127 = sbr.rel (%p125) target = $region24
    $region23: #{atari_a2c_forward.5} parent=5 // pred_region
      // Predicated region
      $region25: #{atari_a2c_forward.5} parent=23 // pred_check
        %p128 = pneg %p29
      $region26: #{atari_a2c_forward.5} parent=23 // pred_check_branch
        %130 = sbr.rel (%p128) target = $region28
      $region27: #{atari_a2c_forward.5} parent=23 // pred_region
        %p131 = scmp.lt.s32.totalorder %s9, 1
        %s132 = scalar_select %p131, %s9, 1
        %s133 = smul.addr %s132, 5
        %s134 = smul.addr %s133, 4
        %s135 = scalar_lea.vmem %s0, %s134
      $region28: #{atari_a2c_forward.5} parent=23 // pred_fallthru
        _
    $region24: #{atari_a2c_forward.5} parent=5 // pred_fallthru
      _
    %p136 = scmp.le.s32.totalorder 1, %s9
    %p137 = scmp.lt.s32.totalorder %s9, 3
    %p138 = pnand %p136, %p137
    %p139 = pneg %p138
    // Predicated region
    $region29: #{atari_a2c_forward.5} parent=5 // pred_check
      _
    $region30: #{atari_a2c_forward.5} parent=5 // pred_check_branch
      %141 = sbr.rel (%p138) target = $region32
    $region31: #{atari_a2c_forward.5} parent=5 // pred_region
      %s142 = ssub.s32 %s9, 1
      %p143 = scmp.lt.s32.totalorder %s14, 1
      %s144 = scalar_select %p143, %s14, 1
      %s145 = smul.addr %s144, 5
      %s146 = smul.addr %s145, 4
      %s147 = scalar_lea.vmem %s0, %s146
      %p148 = pneg %p35
      %p149 = pneg %p32
      %p150 = pneg %p56
      %p151 = pneg %p53
      %p152 = pneg %p77
      %p153 = pneg %p74
      %p154 = pneg %p103
      %p155 = pneg %p100
      %p156 = scmp.lt.s32.totalorder %s14, 1
      %s157 = scalar_select %p156, %s14, 1
      %s158 = smul.addr %s157, 4
      %s159 = smul.addr %s158, 4
      %s160 = scalar_lea.vmem %s3, %s159
      %p161 = scmp.lt.s32.totalorder %s14, 1
      %s162 = scalar_select %p161, %s14, 1
      %s163 = smul.addr %s162, 5
      %s164 = smul.addr %s163, 4
      %s165 = scalar_lea.vmem %s0, %s164
      %p166 = scmp.lt.s32.totalorder %s14, 1
      %s167 = scalar_select %p166, %s14, 1
      %s168 = smul.addr %s167, 4
      %s169 = smul.addr %s168, 4
      %s170 = scalar_lea.vmem %s3, %s169
      %v172 = vld [vmem:[%s165] sm:$0xf]
      %v173 = vld [vmem:[%s165 + $0x4] sm:$0xf]
      %v174 = vld [vmem:[%s165 + $0x8] sm:$0xf]
      %v175 = vld [vmem:[%s165 + $0xc] sm:$0x7]
      %v176 = vld [vmem:[%s1] sm:$0xf]
      %v177 = vld [vmem:[%s1 + $0x4] sm:$0xf]
      %v178 = vld [vmem:[%s1 + $0x8] sm:$0xf]
      %v179 = vld [vmem:[%s1 + $0xc] sm:$0xf]
      %v180 = vld [vmem:[%s1 + $0x10] sm:$0xf]
      %v181 = vld [vmem:[%s1 + $0x14] sm:$0xf]
      %v182 = vld [vmem:[%s1 + $0x18] sm:$0xf]
      %v183 = vld [vmem:[%s1 + $0x1c] sm:$0xf]
      %v184 = vld [vmem:[%s1 + $0x20] sm:$0xf]
      %v185 = vld [vmem:[%s1 + $0x24] sm:$0xf]
      %v186 = vld [vmem:[%s1 + $0x28] sm:$0xf]
      %v187 = vld [vmem:[%s1 + $0x2c] sm:$0xf]
      %v188 = vld [vmem:[%s1 + $0x30] sm:$0xf]
      %v189 = vld [vmem:[%s1 + $0x34] sm:$0xf]
      %v190 = vld [vmem:[%s1 + $0x38] sm:$0xf]
      %v191 = vld [vmem:[%s1 + $0x3c] sm:$0xf]
      %v192 = vld [vmem:[%s1 + $0x40] sm:$0xf]
      %v193 = vld [vmem:[%s1 + $0x44] sm:$0xf]
      %v194 = vld [vmem:[%s1 + $0x48] sm:$0xf]
      %v195 = vld [vmem:[%s1 + $0x4c] sm:$0xf]
      %v196 = vld [vmem:[%s1 + $0x50] sm:$0xf]
      %v197 = vld [vmem:[%s1 + $0x54] sm:$0xf]
      %v198 = vld [vmem:[%s1 + $0x58] sm:$0xf]
      %v199 = vld [vmem:[%s1 + $0x5c] sm:$0xf]
      %v200 = vld [vmem:[%s1 + $0x60] sm:$0xf]
      %v201 = vld [vmem:[%s1 + $0x64] sm:$0xf]
      %v202 = vld [vmem:[%s1 + $0x68] sm:$0xf]
      %v203 = vld [vmem:[%s1 + $0x6c] sm:$0xf]
      %v204 = vld [vmem:[%s1 + $0x70] sm:$0xf]
      %v205 = vld [vmem:[%s1 + $0x74] sm:$0xf]
      %v206 = vld [vmem:[%s1 + $0x78] sm:$0xf]
      %v207 = vld [vmem:[%s1 + $0x7c] sm:$0xf]
      %v212 = vunpack.c.l.b16 %v172
      %v213 = vunpack.c.l.b16 %v173
      %v214 = vunpack.c.l.b16 %v174
      %v215 = vunpack.c.l.b16 %v175
      %v216 = vpack.c.b16 %v213, %v212
      %v217 = vpack.c.b16 %v215, %v214
      %vm218 = vsmask.f32 7424
      %v220 = vshrl.u32 %v216, 16
      %v222 = vshll.u32 %v216, 16
      %v224 = vrot.slane %v222, 1
      %v225 = vor.u32 %v220, %v224
      %v227 = vshll.u32 %v217, 16
      %v229 = vrot.slane %v227, 1
      %v230 = vsel %vm218, %v225, %v229
      %v231 = vshrl.u32 %v217, 16
      %v233 = vor.u32 %v231, %v229
      %v252 = vunpack.c.l.b16 %v192
      %v253 = vunpack.c.l.b16 %v193
      %v254 = vunpack.c.l.b16 %v194
      %v255 = vunpack.c.l.b16 %v195
      %v256 = vunpack.c.l.b16 %v196
      %v257 = vunpack.c.l.b16 %v197
      %v258 = vunpack.c.l.b16 %v198
      %v259 = vunpack.c.l.b16 %v199
      %v260 = vunpack.c.l.b16 %v200
      %v261 = vunpack.c.l.b16 %v201
      %v262 = vunpack.c.l.b16 %v202
      %v263 = vunpack.c.l.b16 %v203
      %v264 = vunpack.c.l.b16 %v204
      %v265 = vunpack.c.l.b16 %v205
      %v266 = vunpack.c.l.b16 %v206
      %v267 = vunpack.c.l.b16 %v207
      %v268 = vpack.c.b16 %v253, %v252
      %v269 = vpack.c.b16 %v255, %v254
      %v270 = vpack.c.b16 %v257, %v256
      %v271 = vpack.c.b16 %v259, %v258
      %v272 = vpack.c.b16 %v261, %v260
      %v273 = vpack.c.b16 %v263, %v262
      %v274 = vpack.c.b16 %v265, %v264
      %v275 = vpack.c.b16 %v267, %v266
      %284 = vmatprep.subr.bf16.mxu0 0
      %285 = vmatpush1.bf16.msra.mxu0 %v268
      %286 = vmatprep.subr.bf16.mxu0 0
      %287 = vmatpush1.bf16.msra.mxu0 %v269
      %288 = vmatprep.subr.bf16.mxu0 0
      %289 = vmatpush1.bf16.msra.mxu0 %v270
      %290 = vmatprep.subr.bf16.mxu0 0
      %291 = vmatpush1.bf16.msra.mxu0 %v271
      %292 = vmatprep.subr.bf16.mxu0 0
      %293 = vmatpush1.bf16.msra.mxu0 %v272
      %294 = vmatprep.subr.bf16.mxu0 0
      %295 = vmatpush1.bf16.msra.mxu0 %v273
      %296 = vmatprep.subr.bf16.mxu0 0
      %297 = vmatpush1.bf16.msra.mxu0 %v274
      %298 = vmatprep.subr.bf16.mxu0 0
      %299 = vmatpush1.bf16.msra.mxu0 %v275
      %300 = vmatprep.subr.bf16.mxu0 0
      %301 = vmatpush1.bf16.msra.mxu0 0
      %302 = vmatprep.subr.bf16.mxu0 0
      %303 = vmatpush1.bf16.msra.mxu0 0
      %304 = vmatprep.subr.bf16.mxu0 0
      %305 = vmatpush1.bf16.msra.mxu0 0
      %306 = vmatprep.subr.bf16.mxu0 0
      %307 = vmatpush1.bf16.msra.mxu0 0
      %308 = vmatprep.subr.bf16.mxu0 0
      %309 = vmatpush1.bf16.msra.mxu0 0
      %310 = vmatprep.subr.bf16.mxu0 0
      %311 = vmatpush1.bf16.msra.mxu0 0
      %312 = vmatprep.subr.bf16.mxu0 0
      %313 = vmatpush1.bf16.msra.mxu0 0
      %314 = vmatprep.subr.bf16.mxu0 0
      %315 = vmatpush1.bf16.msra.mxu0 0
      %316 = vmatprep.mubr.bf16.mxu0 0
      %317 = vmatmul.mubr.bf16.gmra.mrb[0].mxu0 %v230
      %v318 = vpop.f32.mrb[0].mxu0
      %v319 = vadd.f32 0.0, %v318
      %v320 = vpop.f32.mrb[0].mxu0
      %v321 = vpop.f32.mrb[0].mxu0
      %v322 = vadd.f32 0.0, %v321
      %v323 = vpop.f32.mrb[0].mxu0
      %324 = vmatprep.mubr.bf16.mxu0 0
      %325 = vmatmul.mubr.bf16.gmra.mrb[0].mxu0 %v233
      %v326 = vpop.f32.mrb[0].mxu0
      %v327 = vadd.f32 0.0, %v326
      %v328 = vpop.f32.mrb[0].mxu0
      %v329 = vpop.f32.mrb[0].mxu0
      %v330 = vadd.f32 0.0, %v329
      %v331 = vpop.f32.mrb[0].mxu0
      %332 = vdwg.mxu0
      %v351 = vunpack.c.l.b16 %v176
      %v352 = vunpack.c.l.b16 %v177
      %v353 = vunpack.c.l.b16 %v178
      %v354 = vunpack.c.l.b16 %v179
      %v355 = vunpack.c.l.b16 %v180
      %v356 = vunpack.c.l.b16 %v181
      %v357 = vunpack.c.l.b16 %v182
      %v358 = vunpack.c.l.b16 %v183
      %v359 = vunpack.c.l.b16 %v184
      %v360 = vunpack.c.l.b16 %v185
      %v361 = vunpack.c.l.b16 %v186
      %v362 = vunpack.c.l.b16 %v187
      %v363 = vunpack.c.l.b16 %v188
      %v364 = vunpack.c.l.b16 %v189
      %v365 = vunpack.c.l.b16 %v190
      %v366 = vunpack.c.l.b16 %v191
      %v367 = vpack.c.b16 %v352, %v351
      %v368 = vpack.c.b16 %v354, %v353
      %v369 = vpack.c.b16 %v356, %v355
      %v370 = vpack.c.b16 %v358, %v357
      %v371 = vpack.c.b16 %v360, %v359
      %v372 = vpack.c.b16 %v362, %v361
      %v373 = vpack.c.b16 %v364, %v363
      %v374 = vpack.c.b16 %v366, %v365
      %383 = vmatprep.subr.bf16.mxu0 0
      %384 = vmatpush1.bf16.msra.mxu0 %v367
      %385 = vmatprep.subr.bf16.mxu0 0
      %386 = vmatpush1.bf16.msra.mxu0 %v368
      %387 = vmatprep.subr.bf16.mxu0 0
      %388 = vmatpush1.bf16.msra.mxu0 %v369
      %389 = vmatprep.subr.bf16.mxu0 0
      %390 = vmatpush1.bf16.msra.mxu0 %v370
      %391 = vmatprep.subr.bf16.mxu0 0
      %392 = vmatpush1.bf16.msra.mxu0 %v371
      %393 = vmatprep.subr.bf16.mxu0 0
      %394 = vmatpush1.bf16.msra.mxu0 %v372
      %395 = vmatprep.subr.bf16.mxu0 0
      %396 = vmatpush1.bf16.msra.mxu0 %v373
      %397 = vmatprep.subr.bf16.mxu0 0
      %398 = vmatpush1.bf16.msra.mxu0 %v374
      %399 = vmatprep.subr.bf16.mxu0 0
      %400 = vmatpush1.bf16.msra.mxu0 0
      %401 = vmatprep.subr.bf16.mxu0 0
      %402 = vmatpush1.bf16.msra.mxu0 0
      %403 = vmatprep.subr.bf16.mxu0 0
      %404 = vmatpush1.bf16.msra.mxu0 0
      %405 = vmatprep.subr.bf16.mxu0 0
      %406 = vmatpush1.bf16.msra.mxu0 0
      %407 = vmatprep.subr.bf16.mxu0 0
      %408 = vmatpush1.bf16.msra.mxu0 0
      %409 = vmatprep.subr.bf16.mxu0 0
      %410 = vmatpush1.bf16.msra.mxu0 0
      %411 = vmatprep.subr.bf16.mxu0 0
      %412 = vmatpush1.bf16.msra.mxu0 0
      %413 = vmatprep.subr.bf16.mxu0 0
      %414 = vmatpush1.bf16.msra.mxu0 0
      %415 = vmatprep.mubr.bf16.mxu0 0
      %416 = vmatmul.mubr.bf16.gmra.mrb[0].mxu0 %v216
      %v417 = vpop.f32.mrb[0].mxu0
      %v418 = vadd.f32 %v319, %v417
      %v419 = vpop.f32.mrb[0].mxu0
      %v420 = vpop.f32.mrb[0].mxu0
      %v421 = vadd.f32 %v322, %v420
      %v422 = vpop.f32.mrb[0].mxu0
      %423 = vmatprep.mubr.bf16.mxu0 0
      %424 = vmatmul.mubr.bf16.gmra.mrb[0].mxu0 %v217
      %v425 = vpop.f32.mrb[0].mxu0
      %v426 = vadd.f32 %v327, %v425
      %v427 = vpop.f32.mrb[0].mxu0
      %v428 = vpop.f32.mrb[0].mxu0
      %v429 = vadd.f32 %v330, %v428
      %v430 = vpop.f32.mrb[0].mxu0
      %431 = vdwg.mxu0
      %v432 = vld [vmem:[%s165] sm:$0x8]
      %v433 = vld [vmem:[%s165 + $0x4] sm:$0xf]
      %v434 = vld [vmem:[%s165 + $0x8] sm:$0xf]
      %v435 = vld [vmem:[%s165 + $0xc] sm:$0xf]
      %v436 = vld [vmem:[%s165 + $0x10] sm:$0x3]
      %v437 = vld [vmem:[%s1 + $0x80] sm:$0xf]
      %v438 = vld [vmem:[%s1 + $0x84] sm:$0xf]
      %v439 = vld [vmem:[%s1 + $0x88] sm:$0xf]
      %v440 = vld [vmem:[%s1 + $0x8c] sm:$0xf]
      %v441 = vld [vmem:[%s1 + $0x90] sm:$0xf]
      %v442 = vld [vmem:[%s1 + $0x94] sm:$0xf]
      %v443 = vld [vmem:[%s1 + $0x98] sm:$0xf]
      %v444 = vld [vmem:[%s1 + $0x9c] sm:$0xf]
      %v445 = vld [vmem:[%s1 + $0xa0] sm:$0xf]
      %v446 = vld [vmem:[%s1 + $0xa4] sm:$0xf]
      %v447 = vld [vmem:[%s1 + $0xa8] sm:$0xf]
      %v448 = vld [vmem:[%s1 + $0xac] sm:$0xf]
      %v449 = vld [vmem:[%s1 + $0xb0] sm:$0xf]
      %v450 = vld [vmem:[%s1 + $0xb4] sm:$0xf]
      %v451 = vld [vmem:[%s1 + $0xb8] sm:$0xf]
      %v452 = vld [vmem:[%s1 + $0xbc] sm:$0xf]
      %v458 = vunpack.c.l.b16 %v432
      %v459 = vunpack.c.l.b16 %v433
      %v460 = vunpack.c.l.b16 %v434
      %v461 = vunpack.c.l.b16 %v435
      %v462 = vunpack.c.l.b16 %v436
      %v463 = vpack.c.b16 %v459, %v458
      %v464 = vpack.c.b16 %v461, %v460
      %v465 = vpack.c.b16 %v462, %v462
      %vm466 = vcmask 1044480
      %v467 = vrot.slane %v463, 3
      %v468 = vrot.slane %v464, 3
      %v469 = vsel %vm466, %v467, %v468
      %v470 = vrot.slane %v465, 3
      %v471 = vsel %vm466, %v468, %v470
      %v490 = vunpack.c.l.b16 %v437
      %v491 = vunpack.c.l.b16 %v438
      %v492 = vunpack.c.l.b16 %v439
      %v493 = vunpack.c.l.b16 %v440
      %v494 = vunpack.c.l.b16 %v441
      %v495 = vunpack.c.l.b16 %v442
      %v496 = vunpack.c.l.b16 %v443
      %v497 = vunpack.c.l.b16 %v444
      %v498 = vunpack.c.l.b16 %v445
      %v499 = vunpack.c.l.b16 %v446
      %v500 = vunpack.c.l.b16 %v447
      %v501 = vunpack.c.l.b16 %v448
      %v502 = vunpack.c.l.b16 %v449
      %v503 = vunpack.c.l.b16 %v450
      %v504 = vunpack.c.l.b16 %v451
      %v505 = vunpack.c.l.b16 %v452
      %v506 = vpack.c.b16 %v491, %v490
      %v507 = vpack.c.b16 %v493, %v492
      %v508 = vpack.c.b16 %v495, %v494
      %v509 = vpack.c.b16 %v497, %v496
      %v510 = vpack.c.b16 %v499, %v498
      %v511 = vpack.c.b16 %v501, %v500
      %v512 = vpack.c.b16 %v503, %v502
      %v513 = vpack.c.b16 %v505, %v504
      %522 = vmatprep.subr.bf16.mxu0 0
      %523 = vmatpush1.bf16.msra.mxu0 %v506
      %524 = vmatprep.subr.bf16.mxu0 0
      %525 = vmatpush1.bf16.msra.mxu0 %v507
      %526 = vmatprep.subr.bf16.mxu0 0
      %527 = vmatpush1.bf16.msra.mxu0 %v508
      %528 = vmatprep.subr.bf16.mxu0 0
      %529 = vmatpush1.bf16.msra.mxu0 %v509
      %530 = vmatprep.subr.bf16.mxu0 0
      %531 = vmatpush1.bf16.msra.mxu0 %v510
      %532 = vmatprep.subr.bf16.mxu0 0
      %533 = vmatpush1.bf16.msra.mxu0 %v511
      %534 = vmatprep.subr.bf16.mxu0 0
      %535 = vmatpush1.bf16.msra.mxu0 %v512
      %536 = vmatprep.subr.bf16.mxu0 0
      %537 = vmatpush1.bf16.msra.mxu0 %v513
      %538 = vmatprep.subr.bf16.mxu0 0
      %539 = vmatpush1.bf16.msra.mxu0 0
      %540 = vmatprep.subr.bf16.mxu0 0
      %541 = vmatpush1.bf16.msra.mxu0 0
      %542 = vmatprep.subr.bf16.mxu0 0
      %543 = vmatpush1.bf16.msra.mxu0 0
      %544 = vmatprep.subr.bf16.mxu0 0
      %545 = vmatpush1.bf16.msra.mxu0 0
      %546 = vmatprep.subr.bf16.mxu0 0
      %547 = vmatpush1.bf16.msra.mxu0 0
      %548 = vmatprep.subr.bf16.mxu0 0
      %549 = vmatpush1.bf16.msra.mxu0 0
      %550 = vmatprep.subr.bf16.mxu0 0
      %551 = vmatpush1.bf16.msra.mxu0 0
      %552 = vmatprep.subr.bf16.mxu0 0
      %553 = vmatpush1.bf16.msra.mxu0 0
      %554 = vmatprep.mubr.bf16.mxu0 0
      %555 = vmatmul.mubr.bf16.gmra.mrb[0].mxu0 %v469
      %v556 = vpop.f32.mrb[0].mxu0
      %v557 = vadd.f32 0.0, %v556
      %v558 = vpop.f32.mrb[0].mxu0
      %v559 = vpop.f32.mrb[0].mxu0
      %v560 = vadd.f32 0.0, %v559
      %v561 = vpop.f32.mrb[0].mxu0
      %562 = vmatprep.mubr.bf16.mxu0 0
      %563 = vmatmul.mubr.bf16.gmra.mrb[0].mxu0 %v471
      %v564 = vpop.f32.mrb[0].mxu0
      %v565 = vadd.f32 0.0, %v564
      %v566 = vpop.f32.mrb[0].mxu0
      %v567 = vpop.f32.mrb[0].mxu0
      %v568 = vadd.f32 0.0, %v567
      %v569 = vpop.f32.mrb[0].mxu0
      %570 = vdwg.mxu0
      %v571 = vadd.f32 %v418, %v557
      %v572 = vadd.f32 %v421, %v560
      %v573 = vadd.f32 %v426, %v565
      %v574 = vadd.f32 %v429, %v568
      %v575 = vld [vmem:[%s1 + $0xc0] sm:$0xf]
      %v576 = vld [vmem:[%s1 + $0xc4] sm:$0xf]
      %v577 = vld [vmem:[%s1 + $0xc8] sm:$0xf]
      %v578 = vld [vmem:[%s1 + $0xcc] sm:$0xf]
      %v579 = vld [vmem:[%s1 + $0xd0] sm:$0xf]
      %v580 = vld [vmem:[%s1 + $0xd4] sm:$0xf]
      %v581 = vld [vmem:[%s1 + $0xd8] sm:$0xf]
      %v582 = vld [vmem:[%s1 + $0xdc] sm:$0xf]
      %v583 = vld [vmem:[%s1 + $0xe0] sm:$0xf]
      %v584 = vld [vmem:[%s1 + $0xe4] sm:$0xf]
      %v585 = vld [vmem:[%s1 + $0xe8] sm:$0xf]
      %v586 = vld [vmem:[%s1 + $0xec] sm:$0xf]
      %v587 = vld [vmem:[%s1 + $0xf0] sm:$0xf]
      %v588 = vld [vmem:[%s1 + $0xf4] sm:$0xf]
      %v589 = vld [vmem:[%s1 + $0xf8] sm:$0xf]
      %v590 = vld [vmem:[%s1 + $0xfc] sm:$0xf]
      %vm591 = vsmask.f32 4352
      %v593 = vshrl.u32 %v463, 16
      %v595 = vrot.slane %v593, 3
      %v596 = vshll.u32 %v463, 16
      %v598 = vrot.slane %v596, 4
      %v599 = vor.u32 %v595, %v598
      %v601 = vshrl.u32 %v464, 16
      %v603 = vrot.slane %v601, 3
      %v604 = vshll.u32 %v464, 16
      %v606 = vrot.slane %v604, 4
      %v607 = vor.u32 %v603, %v606
      %v608 = vsel %vm591, %v599, %v607
      %v610 = vshrl.u32 %v465, 16
      %v612 = vrot.slane %v610, 3
      %v613 = vshll.u32 %v465, 16
      %v615 = vrot.slane %v613, 4
      %v616 = vor.u32 %v612, %v615
      %v617 = vsel %vm591, %v607, %v616
      %v636 = vunpack.c.l.b16 %v575
      %v637 = vunpack.c.l.b16 %v576
      %v638 = vunpack.c.l.b16 %v577
      %v639 = vunpack.c.l.b16 %v578
      %v640 = vunpack.c.l.b16 %v579
      %v641 = vunpack.c.l.b16 %v580
      %v642 = vunpack.c.l.b16 %v581
      %v643 = vunpack.c.l.b16 %v582
      %v644 = vunpack.c.l.b16 %v583
      %v645 = vunpack.c.l.b16 %v584
      %v646 = vunpack.c.l.b16 %v585
      %v647 = vunpack.c.l.b16 %v586
      %v648 = vunpack.c.l.b16 %v587
      %v649 = vunpack.c.l.b16 %v588
      %v650 = vunpack.c.l.b16 %v589
      %v651 = vunpack.c.l.b16 %v590
      %v652 = vpack.c.b16 %v637, %v636
      %v653 = vpack.c.b16 %v639, %v638
      %v654 = vpack.c.b16 %v641, %v640
      %v655 = vpack.c.b16 %v643, %v642
      %v656 = vpack.c.b16 %v645, %v644
      %v657 = vpack.c.b16 %v647, %v646
      %v658 = vpack.c.b16 %v649, %v648
      %v659 = vpack.c.b16 %v651, %v650
      %668 = vmatprep.subr.bf16.mxu0 0
      %669 = vmatpush1.bf16.msra.mxu0 %v652
      %670 = vmatprep.subr.bf16.mxu0 0
      %671 = vmatpush1.bf16.msra.mxu0 %v653
      %672 = vmatprep.subr.bf16.mxu0 0
      %673 = vmatpush1.bf16.msra.mxu0 %v654
      %674 = vmatprep.subr.bf16.mxu0 0
      %675 = vmatpush1.bf16.msra.mxu0 %v655
      %676 = vmatprep.subr.bf16.mxu0 0
      %677 = vmatpush1.bf16.msra.mxu0 %v656
      %678 = vmatprep.subr.bf16.mxu0 0
      %679 = vmatpush1.bf16.msra.mxu0 %v657
      %680 = vmatprep.subr.bf16.mxu0 0
      %681 = vmatpush1.bf16.msra.mxu0 %v658
      %682 = vmatprep.subr.bf16.mxu0 0
      %683 = vmatpush1.bf16.msra.mxu0 %v659
      %684 = vmatprep.subr.bf16.mxu0 0
      %685 = vmatpush1.bf16.msra.mxu0 0
      %686 = vmatprep.subr.bf16.mxu0 0
      %687 = vmatpush1.bf16.msra.mxu0 0
      %688 = vmatprep.subr.bf16.mxu0 0
      %689 = vmatpush1.bf16.msra.mxu0 0
      %690 = vmatprep.subr.bf16.mxu0 0
      %691 = vmatpush1.bf16.msra.mxu0 0
      %692 = vmatprep.subr.bf16.mxu0 0
      %693 = vmatpush1.bf16.msra.mxu0 0
      %694 = vmatprep.subr.bf16.mxu0 0
      %695 = vmatpush1.bf16.msra.mxu0 0
      %696 = vmatprep.subr.bf16.mxu0 0
      %697 = vmatpush1.bf16.msra.mxu0 0
      %698 = vmatprep.subr.bf16.mxu0 0
      %699 = vmatpush1.bf16.msra.mxu0 0
      %700 = vmatprep.mubr.bf16.mxu0 0
      %701 = vmatmul.mubr.bf16.gmra.mrb[0].mxu0 %v608
      %v702 = vpop.f32.mrb[0].mxu0
      %v703 = vadd.f32 0.0, %v702
      %v704 = vpop.f32.mrb[0].mxu0
      %v705 = vpop.f32.mrb[0].mxu0
      %v706 = vadd.f32 0.0, %v705
      %v707 = vpop.f32.mrb[0].mxu0
      %708 = vmatprep.mubr.bf16.mxu0 0
      %709 = vmatmul.mubr.bf16.gmra.mrb[0].mxu0 %v617
      %v710 = vpop.f32.mrb[0].mxu0
      %v711 = vadd.f32 0.0, %v710
      %v712 = vpop.f32.mrb[0].mxu0
      %v713 = vpop.f32.mrb[0].mxu0
      %v714 = vadd.f32 0.0, %v713
      %v715 = vpop.f32.mrb[0].mxu0
      %716 = vdwg.mxu0
      %v717 = vadd.f32 %v571, %v703
      %v718 = vadd.f32 %v572, %v706
      %v719 = vadd.f32 %v573, %v711
      %v720 = vadd.f32 %v574, %v714
      %v721 = vld [vmem:[%s2] sm:$0x1]
      %v723 = vlaneseq
      %v724 = vshrl.u32 %v723, 7
      %v725 = vsub.s32 0, %v724
      %v726 = vrot.slane %v721, %v725
      %v728 = vadd.f32 %v717, %v726
      %v729 = vadd.f32 %v718, %v726
      %v730 = vadd.f32 %v719, %v726
      %v731 = vadd.f32 %v720, %v726
      %v732 = vmax.f32 %v728, 0.0
      %v733 = vmax.f32 %v729, 0.0
      %v734 = vmax.f32 %v730, 0.0
      %v735 = vmax.f32 %v731, 0.0
      %v736 = vpack.c.bf16 %v733, %v732
      %v737 = vpack.c.bf16 %v735, %v734
      %v740 = vunpack.c.l.b16 %v736
      %v741 = vunpack.c.h.b16 %v736
      %v742 = vunpack.c.l.b16 %v737
      %v743 = vunpack.c.h.b16 %v737
      %v744 = vpack.c.b16 %v740, %v740
      %v745 = vpack.c.b16 %v741, %v741
      %v746 = vpack.c.b16 %v742, %v742
      %v747 = vpack.c.b16 %v743, %v743
      %vm752 = vcmask 519168
      %753 = vst.msk [vmem:[%s170] sm:$0xf] %vm752, %v744
      %754 = vst.msk [vmem:[%s170 + $0x4] sm:$0xf] %vm752, %v745
      %755 = vst.msk [vmem:[%s170 + $0x8] sm:$0xf] %vm752, %v746
      %vm756 = vcmask 518144
      %vm757 = vsmask.f32 2304
      %vm758 = vmand %vm756, %vm757
      %v759 = vld [vmem:[%s170 + $0xc] sm:$0x7]
      %v760 = vsel %vm758, %v747, %v759
      %761 = vst [vmem:[%s170 + $0xc] sm:$0x7] %v760
      %p762 = scmp.lt.s32.totalorder %s14, 1
      %s763 = scalar_select %p762, %s14, 1
      %s764 = smul.addr %s763, 4
      %s765 = smul.addr %s764, 4
      %s766 = scalar_lea.vmem %s3, %s765
      // Predicated region
      $region33: #{atari_a2c_forward.5} parent=31 // pred_check
        %p767 = pneg %p100
      $region34: #{atari_a2c_forward.5} parent=31 // pred_check_branch
        %769 = sbr.rel (%p767) target = $region36
      $region35: #{atari_a2c_forward.5} parent=31 // pred_region
        _
      $region36: #{atari_a2c_forward.5} parent=31 // pred_fallthru
        _
    $region32: #{atari_a2c_forward.5} parent=5 // pred_fallthru
      _
    %p770 = scmp.le.s32.totalorder 2, %s9
    // Predicated region
    $region37: #{atari_a2c_forward.5} parent=5 // pred_check
      %p771 = pneg %p770
    $region38: #{atari_a2c_forward.5} parent=5 // pred_check_branch
      %773 = sbr.rel (%p771) target = $region40
    $region39: #{atari_a2c_forward.5} parent=5 // pred_region
      %s774 = ssub.s32 %s9, 2
      // Predicated region
      $region41: #{atari_a2c_forward.5} parent=39 // pred_check
        %p775 = pneg %p106
      $region42: #{atari_a2c_forward.5} parent=39 // pred_check_branch
        %777 = sbr.rel (%p775) target = $region44
      $region43: #{atari_a2c_forward.5} parent=39 // pred_region
        %p778 = scmp.lt.s32.totalorder %s15, 1
        %s779 = scalar_select %p778, %s15, 1
        %s780 = smul.addr %s779, 4
        %s781 = smul.addr %s780, 4
        %s782 = scalar_lea.vmem %s3, %s781
      $region44: #{atari_a2c_forward.5} parent=39 // pred_fallthru
        _
    $region40: #{atari_a2c_forward.5} parent=5 // pred_fallthru
      _
  $region6: #{atari_a2c_forward.5} parent=0 // loop_footer
    %s13 = sadd.s32 1, %s9
  $region7: #{atari_a2c_forward.5} parent=0 // loop_footer_branch
    %8 = sbr.rel target = $region3
  $region8: #{atari_a2c_forward.5} parent=0 // loop_exit
    _

// kernel: atari_a2c_forward.6
$region0: #{atari_a2c_forward.6}
  #allocation0 [shape = 'u32[]', space=smem, size = 0x4, offset = 0x4, fixed_abs, tag = 'smem constant byte address 0x4 - core index']
  #allocation1 [shape = 'u32[144,128]{1,0:T(1,128)}', space=vmem, size = 0x12000, scoped, tag = 'internal scratch']
  %s0 = inlined_call_operand.vmem [shape: bf16[2,25,64], index: 0, kind: input, shape index: {}]
  %s1 = inlined_call_operand.vmem [shape: bf16[576,64], index: 1, kind: input, shape index: {}]
  %s2 = inlined_call_operand.vmem [shape: f32[1,64], index: 2, kind: input, shape index: {}]
  %s3 = inlined_call_operand.vmem [shape: bf16[2,13,64], index: 3, kind: output, shape index: {}]
  %s4 = sld [smem:[#allocation0]]
  $region45: #{atari_a2c_forward.6} parent=0
    _
  %s6 = ssub.s32 1, %s4
  %s7 = scalar_select 0, %s6, %s4
  loop: start=0, step=1, limit=4
  $region2: #{atari_a2c_forward.6} parent=0 // loop_pre_header
    _
  $region3: #{atari_a2c_forward.6} parent=0 // loop_header
    %s9 = sphi 0, %s13
    %p10 = scmp.ge.s32.totalorder %s9, 4
    %s19 = sphi 0, %s21
    %s22 = sphi 0, %s19
    %s23 = sphi 0, %s22
    %s39 = sphi 0, %s23
    %s43 = sphi 0, %s43
    %s45 = sphi 0, %s43
    %s46 = sphi 0, %s45
    %s60 = sphi 0, %s46
    %s64 = sphi 0, %s64
    %s66 = sphi 0, %s64
    %s67 = sphi 0, %s66
    %s81 = sphi 0, %s67
    %s87 = sphi 0, %s89
    %s90 = sphi 0, %s87
    %s91 = sphi 0, %s90
    %s107 = sphi 0, %s91
  $region4: #{atari_a2c_forward.6} parent=0 // loop_header_branch
    %12 = sbr.rel (%p10) target = $region8
  $region5: #{atari_a2c_forward.6} parent=0 // loop_body
    %s14 = ssub.s32 %s9, 1
    %s15 = ssub.s32 %s9, 2
    %s16 = sadd.s32 %s9, 1
    %s17 = ssub.s32 %s9, %s16
    %p18 = scmp.eq.s32.totalorder %s17, 0
    %s20 = sadd.s32 %s19, 1
    %s21 = scalar_select %p18, %s19, %s20
    %p24 = pneg %p18
    %p25 = scmp.eq.s32.totalorder %s9, 1
    %p26 = por %p24, %p25
    %p27 = scmp.ne.s32.totalorder %s19, %s22
    %p28 = scmp.eq.s32.totalorder %s9, 0
    %p29 = por %p27, %p28
    %p30 = scmp.ne.s32.totalorder %s19, %s22
    %p31 = scmp.eq.s32.totalorder %s14, 1
    %p32 = por %p30, %p31
    %p33 = scmp.ne.s32.totalorder %s22, %s23
    %p34 = scmp.eq.s32.totalorder %s14, 0
    %p35 = por %p33, %p34
    %p36 = scmp.ne.s32.totalorder %s22, %s23
    %p37 = scmp.eq.s32.totalorder %s15, 1
    %p38 = por %p36, %p37
    %p40 = scmp.ne.s32.totalorder %s23, %s39
    %p41 = scmp.eq.s32.totalorder %s15, 0
    %p42 = por %p40, %p41
    %s44 = sadd.s32 %s43, 1
    %p47 = scmp.eq.s32.totalorder %s9, 1
    %p48 = scmp.ne.s32.totalorder %s43, %s45
    %p49 = scmp.eq.s32.totalorder %s9, 0
    %p50 = por %p48, %p49
    %p51 = scmp.ne.s32.totalorder %s43, %s45
    %p52 = scmp.eq.s32.totalorder %s14, 1
    %p53 = por %p51, %p52
    %p54 = scmp.ne.s32.totalorder %s45, %s46
    %p55 = scmp.eq.s32.totalorder %s14, 0
    %p56 = por %p54, %p55
    %p57 = scmp.ne.s32.totalorder %s45, %s46
    %p58 = scmp.eq.s32.totalorder %s15, 1
    %p59 = por %p57, %p58
    %p61 = scmp.ne.s32.totalorder %s46, %s60
    %p62 = scmp.eq.s32.totalorder %s15, 0
    %p63 = por %p61, %p62
    %s65 = sadd.s32 %s64, 1
    %p68 = scmp.eq.s32.totalorder %s9, 1
    %p69 = scmp.ne.s32.totalorder %s64, %s66
    %p70 = scmp.eq.s32.totalorder %s9, 0
    %p71 = por %p69, %p70
    %p72 = scmp.ne.s32.totalorder %s64, %s66
    %p73 = scmp.eq.s32.totalorder %s14, 1
    %p74 = por %p72, %p73
    %p75 = scmp.ne.s32.totalorder %s66, %s67
    %p76 = scmp.eq.s32.totalorder %s14, 0
    %p77 = por %p75, %p76
    %p78 = scmp.ne.s32.totalorder %s66, %s67
    %p79 = scmp.eq.s32.totalorder %s15, 1
    %p80 = por %p78, %p79
    %p82 = scmp.ne.s32.totalorder %s67, %s81
    %p83 = scmp.eq.s32.totalorder %s15, 0
    %p84 = por %p82, %p83
    %s85 = ssub.s32 %s9, %s16
    %p86 = scmp.eq.s32.totalorder %s85, 0
    %s88 = sadd.s32 %s87, 1
    %s89 = scalar_select %p86, %s87, %s88
    %p92 = pneg %p86
    %p93 = scmp.eq.s32.totalorder %s9, 1
    %p94 = por %p92, %p93
    %p95 = scmp.ne.s32.totalorder %s87, %s90
    %p96 = scmp.eq.s32.totalorder %s9, 0
    %p97 = por %p95, %p96
    %p98 = scmp.ne.s32.totalorder %s87, %s90
    %p99 = scmp.eq.s32.totalorder %s14, 1
    %p100 = por %p98, %p99
    %p101 = scmp.ne.s32.totalorder %s90, %s91
    %p102 = scmp.eq.s32.totalorder %s14, 0
    %p103 = por %p101, %p102
    %p104 = scmp.ne.s32.totalorder %s90, %s91
    %p105 = scmp.eq.s32.totalorder %s15, 1
    %p106 = por %p104, %p105
    %p108 = scmp.ne.s32.totalorder %s91, %s107
    %p109 = scmp.eq.s32.totalorder %s15, 0
    %p110 = por %p108, %p109
    %p111 = scmp.le.s32.totalorder 1, %s9
    %p112 = scmp.lt.s32.totalorder %s9, 3
    %p113 = pnand %p111, %p112
    %p114 = pneg %p113
    // Predicated region
    $region9: #{atari_a2c_forward.6} parent=5 // pred_check
      _
    $region10: #{atari_a2c_forward.6} parent=5 // pred_check_branch
      %116 = sbr.rel (%p113) target = $region12
    $region11: #{atari_a2c_forward.6} parent=5 // pred_region
      %s117 = ssub.s32 %s9, 1
      // Predicated region
      $region13: #{atari_a2c_forward.6} parent=11 // pred_check
        %p118 = pneg %p56
      $region14: #{atari_a2c_forward.6} parent=11 // pred_check_branch
        %120 = sbr.rel (%p118) target = $region16
      $region15: #{atari_a2c_forward.6} parent=11 // pred_region
        _
      $region16: #{atari_a2c_forward.6} parent=11 // pred_fallthru
        _
      // Predicated region
      $region17: #{atari_a2c_forward.6} parent=11 // pred_check
        %p121 = pneg %p77
      $region18: #{atari_a2c_forward.6} parent=11 // pred_check_branch
        %123 = sbr.rel (%p121) target = $region20
      $region19: #{atari_a2c_forward.6} parent=11 // pred_region
        _
      $region20: #{atari_a2c_forward.6} parent=11 // pred_fallthru
        _
    $region12: #{atari_a2c_forward.6} parent=5 // pred_fallthru
      _
    %p124 = scmp.lt.s32.totalorder %s9, 2
    // Predicated region
    $region21: #{atari_a2c_forward.6} parent=5 // pred_check
      %p125 = pneg %p124
    $region22: #{atari_a2c_forward.6} parent=5 // pred_check_branch
      %127 = sbr.rel (%p125) target = $region24
    $region23: #{atari_a2c_forward.6} parent=5 // pred_region
      // Predicated region
      $region25: #{atari_a2c_forward.6} parent=23 // pred_check
        %p128 = pneg %p29
      $region26: #{atari_a2c_forward.6} parent=23 // pred_check_branch
        %130 = sbr.rel (%p128) target = $region28
      $region27: #{atari_a2c_forward.6} parent=23 // pred_region
        %p131 = scmp.lt.s32.totalorder %s9, 1
        %s132 = scalar_select %p131, %s9, 1
        %s133 = smul.addr %s132, 4
        %s134 = smul.addr %s133, 4
        %s135 = scalar_lea.vmem %s0, %s134
      $region28: #{atari_a2c_forward.6} parent=23 // pred_fallthru
        _
    $region24: #{atari_a2c_forward.6} parent=5 // pred_fallthru
      _
    %p136 = scmp.le.s32.totalorder 1, %s9
    %p137 = scmp.lt.s32.totalorder %s9, 3
    %p138 = pnand %p136, %p137
    %p139 = pneg %p138
    // Predicated region
    $region29: #{atari_a2c_forward.6} parent=5 // pred_check
      _
    $region30: #{atari_a2c_forward.6} parent=5 // pred_check_branch
      %141 = sbr.rel (%p138) target = $region32
    $region31: #{atari_a2c_forward.6} parent=5 // pred_region
      %s142 = ssub.s32 %s9, 1
      %p143 = scmp.lt.s32.totalorder %s14, 1
      %s144 = scalar_select %p143, %s14, 1
      %s145 = smul.addr %s144, 4
      %s146 = smul.addr %s145, 4
      %s147 = scalar_lea.vmem %s0, %s146
      %p148 = pneg %p35
      %p149 = pneg %p32
      %p150 = pneg %p56
      %p151 = pneg %p53
      %p152 = pneg %p77
      %p153 = pneg %p74
      %p154 = pneg %p103
      %p155 = pneg %p100
      %p156 = scmp.lt.s32.totalorder %s14, 1
      %s157 = scalar_select %p156, %s14, 1
      %s158 = smul.addr %s157, 2
      %s159 = smul.addr %s158, 4
      %s160 = scalar_lea.vmem %s3, %s159
      %p161 = scmp.lt.s32.totalorder %s14, 1
      %s162 = scalar_select %p161, %s14, 1
      %s163 = smul.addr %s162, 4
      %s164 = smul.addr %s163, 4
      %s165 = scalar_lea.vmem %s0, %s164
      %p166 = scmp.lt.s32.totalorder %s14, 1
      %s167 = scalar_select %p166, %s14, 1
      %s168 = smul.addr %s167, 2
      %s169 = smul.addr %s168, 4
      %s170 = scalar_lea.vmem %s3, %s169
      %v172 = vld [vmem:[%s165] sm:$0xf]
      %v173 = vld [vmem:[%s165 + $0x4] sm:$0x7]
      %v174 = vld [vmem:[%s1] sm:$0xf]
      %v175 = vld [vmem:[%s1 + $0x4] sm:$0xf]
      %v176 = vld [vmem:[%s1 + $0x8] sm:$0xf]
      %v177 = vld [vmem:[%s1 + $0xc] sm:$0xf]
      %v178 = vld [vmem:[%s1 + $0x10] sm:$0xf]
      %v179 = vld [vmem:[%s1 + $0x14] sm:$0xf]
      %v180 = vld [vmem:[%s1 + $0x18] sm:$0xf]
      %v181 = vld [vmem:[%s1 + $0x1c] sm:$0xf]
      %v182 = vld [vmem:[%s1 + $0x20] sm:$0xf]
      %v183 = vld [vmem:[%s1 + $0x24] sm:$0xf]
      %v184 = vld [vmem:[%s1 + $0x28] sm:$0xf]
      %v185 = vld [vmem:[%s1 + $0x2c] sm:$0xf]
      %v186 = vld [vmem:[%s1 + $0x30] sm:$0xf]
      %v187 = vld [vmem:[%s1 + $0x34] sm:$0xf]
      %v188 = vld [vmem:[%s1 + $0x38] sm:$0xf]
      %v189 = vld [vmem:[%s1 + $0x3c] sm:$0xf]
      %v192 = vunpack.c.l.b16 %v172
      %v193 = vunpack.c.l.b16 %v173
      %v194 = vpack.c.b16 %v193, %v192
      %v196 = vshrl.u32 %v194, 16
      %v198 = vshll.u32 %v194, 16
      %v200 = vrot.slane %v198, 1
      %v201 = vor.u32 %v196, %v200
      %v210 = vunpack.c.l.b16 %v182
      %v211 = vunpack.c.l.b16 %v183
      %v212 = vunpack.c.l.b16 %v184
      %v213 = vunpack.c.l.b16 %v185
      %v214 = vunpack.c.l.b16 %v186
      %v215 = vunpack.c.l.b16 %v187
      %v216 = vunpack.c.l.b16 %v188
      %v217 = vunpack.c.l.b16 %v189
      %v218 = vpack.c.b16 %v211, %v210
      %v219 = vpack.c.b16 %v213, %v212
      %v220 = vpack.c.b16 %v215, %v214
      %v221 = vpack.c.b16 %v217, %v216
      %vm226 = vcmask 523264
      %v228 = vsel %vm226, %v201, 0
      %230 = vmatprep.subr.bf16.mxu0 0
      %231 = vmatpush1.bf16.msra.mxu0 %v218
      %232 = vmatprep.subr.bf16.mxu0 0
      %233 = vmatpush1.bf16.msra.mxu0 %v219
      %234 = vmatprep.subr.bf16.mxu0 0
      %235 = vmatpush1.bf16.msra.mxu0 %v220
      %236 = vmatprep.subr.bf16.mxu0 0
      %237 = vmatpush1.bf16.msra.mxu0 %v221
      %238 = vmatprep.subr.bf16.mxu0 0
      %239 = vmatpush1.bf16.msra.mxu0 0
      %240 = vmatprep.subr.bf16.mxu0 0
      %241 = vmatpush1.bf16.msra.mxu0 0
      %242 = vmatprep.subr.bf16.mxu0 0
      %243 = vmatpush1.bf16.msra.mxu0 0
      %244 = vmatprep.subr.bf16.mxu0 0
      %245 = vmatpush1.bf16.msra.mxu0 0
      %246 = vmatprep.subr.bf16.mxu0 0
      %247 = vmatpush1.bf16.msra.mxu0 0
      %248 = vmatprep.subr.bf16.mxu0 0
      %249 = vmatpush1.bf16.msra.mxu0 0
      %250 = vmatprep.subr.bf16.mxu0 0
      %251 = vmatpush1.bf16.msra.mxu0 0
      %252 = vmatprep.subr.bf16.mxu0 0
      %253 = vmatpush1.bf16.msra.mxu0 0
      %254 = vmatprep.subr.bf16.mxu0 0
      %255 = vmatpush1.bf16.msra.mxu0 0
      %256 = vmatprep.subr.bf16.mxu0 0
      %257 = vmatpush1.bf16.msra.mxu0 0
      %258 = vmatprep.subr.bf16.mxu0 0
      %259 = vmatpush1.bf16.msra.mxu0 0
      %260 = vmatprep.subr.bf16.mxu0 0
      %261 = vmatpush1.bf16.msra.mxu0 0
      %262 = vmatprep.mubr.bf16.mxu0 0
      %263 = vmatmul.mubr.bf16.gmra.mrb[0].mxu0 %v228
      %v264 = vpop.f32.mrb[0].mxu0
      %v265 = vadd.f32 0.0, %v264
      %v266 = vpop.f32.mrb[0].mxu0
      %v267 = vpop.f32.mrb[0].mxu0
      %v268 = vadd.f32 0.0, %v267
      %v269 = vpop.f32.mrb[0].mxu0
      %270 = vdwg.mxu0
      %v279 = vunpack.c.l.b16 %v174
      %v280 = vunpack.c.l.b16 %v175
      %v281 = vunpack.c.l.b16 %v176
      %v282 = vunpack.c.l.b16 %v177
      %v283 = vunpack.c.l.b16 %v178
      %v284 = vunpack.c.l.b16 %v179
      %v285 = vunpack.c.l.b16 %v180
      %v286 = vunpack.c.l.b16 %v181
      %v287 = vpack.c.b16 %v280, %v279
      %v288 = vpack.c.b16 %v282, %v281
      %v289 = vpack.c.b16 %v284, %v283
      %v290 = vpack.c.b16 %v286, %v285
      %v295 = vsel %vm226, %v194, 0
      %297 = vmatprep.subr.bf16.mxu0 0
      %298 = vmatpush1.bf16.msra.mxu0 %v287
      %299 = vmatprep.subr.bf16.mxu0 0
      %300 = vmatpush1.bf16.msra.mxu0 %v288
      %301 = vmatprep.subr.bf16.mxu0 0
      %302 = vmatpush1.bf16.msra.mxu0 %v289
      %303 = vmatprep.subr.bf16.mxu0 0
      %304 = vmatpush1.bf16.msra.mxu0 %v290
      %305 = vmatprep.subr.bf16.mxu0 0
      %306 = vmatpush1.bf16.msra.mxu0 0
      %307 = vmatprep.subr.bf16.mxu0 0
      %308 = vmatpush1.bf16.msra.mxu0 0
      %309 = vmatprep.subr.bf16.mxu0 0
      %310 = vmatpush1.bf16.msra.mxu0 0
      %311 = vmatprep.subr.bf16.mxu0 0
      %312 = vmatpush1.bf16.msra.mxu0 0
      %313 = vmatprep.subr.bf16.mxu0 0
      %314 = vmatpush1.bf16.msra.mxu0 0
      %315 = vmatprep.subr.bf16.mxu0 0
      %316 = vmatpush1.bf16.msra.mxu0 0
      %317 = vmatprep.subr.bf16.mxu0 0
      %318 = vmatpush1.bf16.msra.mxu0 0
      %319 = vmatprep.subr.bf16.mxu0 0
      %320 = vmatpush1.bf16.msra.mxu0 0
      %321 = vmatprep.subr.bf16.mxu0 0
      %322 = vmatpush1.bf16.msra.mxu0 0
      %323 = vmatprep.subr.bf16.mxu0 0
      %324 = vmatpush1.bf16.msra.mxu0 0
      %325 = vmatprep.subr.bf16.mxu0 0
      %326 = vmatpush1.bf16.msra.mxu0 0
      %327 = vmatprep.subr.bf16.mxu0 0
      %328 = vmatpush1.bf16.msra.mxu0 0
      %329 = vmatprep.mubr.bf16.mxu0 0
      %330 = vmatmul.mubr.bf16.gmra.mrb[0].mxu0 %v295
      %v331 = vpop.f32.mrb[0].mxu0
      %v332 = vadd.f32 %v265, %v331
      %v333 = vpop.f32.mrb[0].mxu0
      %v334 = vpop.f32.mrb[0].mxu0
      %v335 = vadd.f32 %v268, %v334
      %v336 = vpop.f32.mrb[0].mxu0
      %337 = vdwg.mxu0
      %v338 = vld [vmem:[%s165] sm:$0xe]
      %v339 = vld [vmem:[%s165 + $0x4] sm:$0xf]
      %v340 = vld [vmem:[%s1 + $0x40] sm:$0xf]
      %v341 = vld [vmem:[%s1 + $0x44] sm:$0xf]
      %v342 = vld [vmem:[%s1 + $0x48] sm:$0xf]
      %v343 = vld [vmem:[%s1 + $0x4c] sm:$0xf]
      %v344 = vld [vmem:[%s1 + $0x50] sm:$0xf]
      %v345 = vld [vmem:[%s1 + $0x54] sm:$0xf]
      %v346 = vld [vmem:[%s1 + $0x58] sm:$0xf]
      %v347 = vld [vmem:[%s1 + $0x5c] sm:$0xf]
      %v350 = vunpack.c.l.b16 %v338
      %v351 = vunpack.c.l.b16 %v339
      %v352 = vpack.c.b16 %v351, %v350
      %v353 = vrot.slane %v352, 1
      %v362 = vunpack.c.l.b16 %v340
      %v363 = vunpack.c.l.b16 %v341
      %v364 = vunpack.c.l.b16 %v342
      %v365 = vunpack.c.l.b16 %v343
      %v366 = vunpack.c.l.b16 %v344
      %v367 = vunpack.c.l.b16 %v345
      %v368 = vunpack.c.l.b16 %v346
      %v369 = vunpack.c.l.b16 %v347
      %v370 = vpack.c.b16 %v363, %v362
      %v371 = vpack.c.b16 %v365, %v364
      %v372 = vpack.c.b16 %v367, %v366
      %v373 = vpack.c.b16 %v369, %v368
      %v379 = vsel %vm226, %v353, 0
      %381 = vmatprep.subr.bf16.mxu0 0
      %382 = vmatpush1.bf16.msra.mxu0 %v370
      %383 = vmatprep.subr.bf16.mxu0 0
      %384 = vmatpush1.bf16.msra.mxu0 %v371
      %385 = vmatprep.subr.bf16.mxu0 0
      %386 = vmatpush1.bf16.msra.mxu0 %v372
      %387 = vmatprep.subr.bf16.mxu0 0
      %388 = vmatpush1.bf16.msra.mxu0 %v373
      %389 = vmatprep.subr.bf16.mxu0 0
      %390 = vmatpush1.bf16.msra.mxu0 0
      %391 = vmatprep.subr.bf16.mxu0 0
      %392 = vmatpush1.bf16.msra.mxu0 0
      %393 = vmatprep.subr.bf16.mxu0 0
      %394 = vmatpush1.bf16.msra.mxu0 0
      %395 = vmatprep.subr.bf16.mxu0 0
      %396 = vmatpush1.bf16.msra.mxu0 0
      %397 = vmatprep.subr.bf16.mxu0 0
      %398 = vmatpush1.bf16.msra.mxu0 0
      %399 = vmatprep.subr.bf16.mxu0 0
      %400 = vmatpush1.bf16.msra.mxu0 0
      %401 = vmatprep.subr.bf16.mxu0 0
      %402 = vmatpush1.bf16.msra.mxu0 0
      %403 = vmatprep.subr.bf16.mxu0 0
      %404 = vmatpush1.bf16.msra.mxu0 0
      %405 = vmatprep.subr.bf16.mxu0 0
      %406 = vmatpush1.bf16.msra.mxu0 0
      %407 = vmatprep.subr.bf16.mxu0 0
      %408 = vmatpush1.bf16.msra.mxu0 0
      %409 = vmatprep.subr.bf16.mxu0 0
      %410 = vmatpush1.bf16.msra.mxu0 0
      %411 = vmatprep.subr.bf16.mxu0 0
      %412 = vmatpush1.bf16.msra.mxu0 0
      %413 = vmatprep.mubr.bf16.mxu0 0
      %414 = vmatmul.mubr.bf16.gmra.mrb[0].mxu0 %v379
      %v415 = vpop.f32.mrb[0].mxu0
      %v416 = vadd.f32 0.0, %v415
      %v417 = vpop.f32.mrb[0].mxu0
      %v418 = vpop.f32.mrb[0].mxu0
      %v419 = vadd.f32 0.0, %v418
      %v420 = vpop.f32.mrb[0].mxu0
      %421 = vdwg.mxu0
      %v422 = vadd.f32 %v332, %v416
      %v423 = vadd.f32 %v335, %v419
      %v424 = vld [vmem:[%s165] sm:$0xc]
      %v425 = vld [vmem:[%s165 + $0x4] sm:$0xf]
      %v426 = vld [vmem:[%s165 + $0x8] sm:$0x1]
      %v427 = vld [vmem:[%s1 + $0x60] sm:$0xf]
      %v428 = vld [vmem:[%s1 + $0x64] sm:$0xf]
      %v429 = vld [vmem:[%s1 + $0x68] sm:$0xf]
      %v430 = vld [vmem:[%s1 + $0x6c] sm:$0xf]
      %v431 = vld [vmem:[%s1 + $0x70] sm:$0xf]
      %v432 = vld [vmem:[%s1 + $0x74] sm:$0xf]
      %v433 = vld [vmem:[%s1 + $0x78] sm:$0xf]
      %v434 = vld [vmem:[%s1 + $0x7c] sm:$0xf]
      %v438 = vunpack.c.l.b16 %v424
      %v439 = vunpack.c.l.b16 %v425
      %v440 = vunpack.c.l.b16 %v426
      %v441 = vpack.c.b16 %v439, %v438
      %v442 = vpack.c.b16 %v440, %v440
      %vm443 = vsmask.f32 5376
      %v445 = vshrl.u32 %v441, 16
      %v447 = vrot.slane %v445, 2
      %v448 = vshll.u32 %v441, 16
      %v450 = vrot.slane %v448, 3
      %v451 = vor.u32 %v447, %v450
      %v453 = vshrl.u32 %v442, 16
      %v455 = vrot.slane %v453, 2
      %v456 = vshll.u32 %v442, 16
      %v458 = vrot.slane %v456, 3
      %v459 = vor.u32 %v455, %v458
      %v460 = vsel %vm443, %v451, %v459
      %v469 = vunpack.c.l.b16 %v427
      %v470 = vunpack.c.l.b16 %v428
      %v471 = vunpack.c.l.b16 %v429
      %v472 = vunpack.c.l.b16 %v430
      %v473 = vunpack.c.l.b16 %v431
      %v474 = vunpack.c.l.b16 %v432
      %v475 = vunpack.c.l.b16 %v433
      %v476 = vunpack.c.l.b16 %v434
      %v477 = vpack.c.b16 %v470, %v469
      %v478 = vpack.c.b16 %v472, %v471
      %v479 = vpack.c.b16 %v474, %v473
      %v480 = vpack.c.b16 %v476, %v475
      %v486 = vsel %vm226, %v460, 0
      %488 = vmatprep.subr.bf16.mxu0 0
      %489 = vmatpush1.bf16.msra.mxu0 %v477
      %490 = vmatprep.subr.bf16.mxu0 0
      %491 = vmatpush1.bf16.msra.mxu0 %v478
      %492 = vmatprep.subr.bf16.mxu0 0
      %493 = vmatpush1.bf16.msra.mxu0 %v479
      %494 = vmatprep.subr.bf16.mxu0 0
      %495 = vmatpush1.bf16.msra.mxu0 %v480
      %496 = vmatprep.subr.bf16.mxu0 0
      %497 = vmatpush1.bf16.msra.mxu0 0
      %498 = vmatprep.subr.bf16.mxu0 0
      %499 = vmatpush1.bf16.msra.mxu0 0
      %500 = vmatprep.subr.bf16.mxu0 0
      %501 = vmatpush1.bf16.msra.mxu0 0
      %502 = vmatprep.subr.bf16.mxu0 0
      %503 = vmatpush1.bf16.msra.mxu0 0
      %504 = vmatprep.subr.bf16.mxu0 0
      %505 = vmatpush1.bf16.msra.mxu0 0
      %506 = vmatprep.subr.bf16.mxu0 0
      %507 = vmatpush1.bf16.msra.mxu0 0
      %508 = vmatprep.subr.bf16.mxu0 0
      %509 = vmatpush1.bf16.msra.mxu0 0
      %510 = vmatprep.subr.bf16.mxu0 0
      %511 = vmatpush1.bf16.msra.mxu0 0
      %512 = vmatprep.subr.bf16.mxu0 0
      %513 = vmatpush1.bf16.msra.mxu0 0
      %514 = vmatprep.subr.bf16.mxu0 0
      %515 = vmatpush1.bf16.msra.mxu0 0
      %516 = vmatprep.subr.bf16.mxu0 0
      %517 = vmatpush1.bf16.msra.mxu0 0
      %518 = vmatprep.subr.bf16.mxu0 0
      %519 = vmatpush1.bf16.msra.mxu0 0
      %520 = vmatprep.mubr.bf16.mxu0 0
      %521 = vmatmul.mubr.bf16.gmra.mrb[0].mxu0 %v486
      %v522 = vpop.f32.mrb[0].mxu0
      %v523 = vadd.f32 0.0, %v522
      %v524 = vpop.f32.mrb[0].mxu0
      %v525 = vpop.f32.mrb[0].mxu0
      %v526 = vadd.f32 0.0, %v525
      %v527 = vpop.f32.mrb[0].mxu0
      %528 = vdwg.mxu0
      %v529 = vadd.f32 %v422, %v523
      %v530 = vadd.f32 %v423, %v526
      %v531 = vld [vmem:[%s165] sm:$0x8]
      %v532 = vld [vmem:[%s165 + $0x8] sm:$0x3]
      %v533 = vld [vmem:[%s1 + $0x80] sm:$0xf]
      %v534 = vld [vmem:[%s1 + $0x84] sm:$0xf]
      %v535 = vld [vmem:[%s1 + $0x88] sm:$0xf]
      %v536 = vld [vmem:[%s1 + $0x8c] sm:$0xf]
      %v537 = vld [vmem:[%s1 + $0x90] sm:$0xf]
      %v538 = vld [vmem:[%s1 + $0x94] sm:$0xf]
      %v539 = vld [vmem:[%s1 + $0x98] sm:$0xf]
      %v540 = vld [vmem:[%s1 + $0x9c] sm:$0xf]
      %v543 = vunpack.c.l.b16 %v531
      %v544 = vunpack.c.l.b16 %v532
      %v545 = vpack.c.b16 %v439, %v543
      %v546 = vpack.c.b16 %v544, %v544
      %vm547 = vcmask 1044480
      %v548 = vrot.slane %v545, 3
      %v549 = vrot.slane %v546, 3
      %v550 = vsel %vm547, %v548, %v549
      %v559 = vunpack.c.l.b16 %v533
      %v560 = vunpack.c.l.b16 %v534
      %v561 = vunpack.c.l.b16 %v535
      %v562 = vunpack.c.l.b16 %v536
      %v563 = vunpack.c.l.b16 %v537
      %v564 = vunpack.c.l.b16 %v538
      %v565 = vunpack.c.l.b16 %v539
      %v566 = vunpack.c.l.b16 %v540
      %v567 = vpack.c.b16 %v560, %v559
      %v568 = vpack.c.b16 %v562, %v561
      %v569 = vpack.c.b16 %v564, %v563
      %v570 = vpack.c.b16 %v566, %v565
      %v576 = vsel %vm226, %v550, 0
      %578 = vmatprep.subr.bf16.mxu0 0
      %579 = vmatpush1.bf16.msra.mxu0 %v567
      %580 = vmatprep.subr.bf16.mxu0 0
      %581 = vmatpush1.bf16.msra.mxu0 %v568
      %582 = vmatprep.subr.bf16.mxu0 0
      %583 = vmatpush1.bf16.msra.mxu0 %v569
      %584 = vmatprep.subr.bf16.mxu0 0
      %585 = vmatpush1.bf16.msra.mxu0 %v570
      %586 = vmatprep.subr.bf16.mxu0 0
      %587 = vmatpush1.bf16.msra.mxu0 0
      %588 = vmatprep.subr.bf16.mxu0 0
      %589 = vmatpush1.bf16.msra.mxu0 0
      %590 = vmatprep.subr.bf16.mxu0 0
      %591 = vmatpush1.bf16.msra.mxu0 0
      %592 = vmatprep.subr.bf16.mxu0 0
      %593 = vmatpush1.bf16.msra.mxu0 0
      %594 = vmatprep.subr.bf16.mxu0 0
      %595 = vmatpush1.bf16.msra.mxu0 0
      %596 = vmatprep.subr.bf16.mxu0 0
      %597 = vmatpush1.bf16.msra.mxu0 0
      %598 = vmatprep.subr.bf16.mxu0 0
      %599 = vmatpush1.bf16.msra.mxu0 0
      %600 = vmatprep.subr.bf16.mxu0 0
      %601 = vmatpush1.bf16.msra.mxu0 0
      %602 = vmatprep.subr.bf16.mxu0 0
      %603 = vmatpush1.bf16.msra.mxu0 0
      %604 = vmatprep.subr.bf16.mxu0 0
      %605 = vmatpush1.bf16.msra.mxu0 0
      %606 = vmatprep.subr.bf16.mxu0 0
      %607 = vmatpush1.bf16.msra.mxu0 0
      %608 = vmatprep.subr.bf16.mxu0 0
      %609 = vmatpush1.bf16.msra.mxu0 0
      %610 = vmatprep.mubr.bf16.mxu0 0
      %611 = vmatmul.mubr.bf16.gmra.mrb[0].mxu0 %v576
      %v612 = vpop.f32.mrb[0].mxu0
      %v613 = vadd.f32 0.0, %v612
      %v614 = vpop.f32.mrb[0].mxu0
      %v615 = vpop.f32.mrb[0].mxu0
      %v616 = vadd.f32 0.0, %v615
      %v617 = vpop.f32.mrb[0].mxu0
      %618 = vdwg.mxu0
      %v619 = vadd.f32 %v529, %v613
      %v620 = vadd.f32 %v530, %v616
      %v621 = vld [vmem:[%s1 + $0xa0] sm:$0xf]
      %v622 = vld [vmem:[%s1 + $0xa4] sm:$0xf]
      %v623 = vld [vmem:[%s1 + $0xa8] sm:$0xf]
      %v624 = vld [vmem:[%s1 + $0xac] sm:$0xf]
      %v625 = vld [vmem:[%s1 + $0xb0] sm:$0xf]
      %v626 = vld [vmem:[%s1 + $0xb4] sm:$0xf]
      %v627 = vld [vmem:[%s1 + $0xb8] sm:$0xf]
      %v628 = vld [vmem:[%s1 + $0xbc] sm:$0xf]
      %vm629 = vsmask.f32 4352
      %v631 = vshrl.u32 %v545, 16
      %v633 = vrot.slane %v631, 3
      %v634 = vshll.u32 %v545, 16
      %v636 = vrot.slane %v634, 4
      %v637 = vor.u32 %v633, %v636
      %v639 = vshrl.u32 %v546, 16
      %v641 = vrot.slane %v639, 3
      %v642 = vshll.u32 %v546, 16
      %v644 = vrot.slane %v642, 4
      %v645 = vor.u32 %v641, %v644
      %v646 = vsel %vm629, %v637, %v645
      %v655 = vunpack.c.l.b16 %v621
      %v656 = vunpack.c.l.b16 %v622
      %v657 = vunpack.c.l.b16 %v623
      %v658 = vunpack.c.l.b16 %v624
      %v659 = vunpack.c.l.b16 %v625
      %v660 = vunpack.c.l.b16 %v626
      %v661 = vunpack.c.l.b16 %v627
      %v662 = vunpack.c.l.b16 %v628
      %v663 = vpack.c.b16 %v656, %v655
      %v664 = vpack.c.b16 %v658, %v657
      %v665 = vpack.c.b16 %v660, %v659
      %v666 = vpack.c.b16 %v662, %v661
      %v672 = vsel %vm226, %v646, 0
      %674 = vmatprep.subr.bf16.mxu0 0
      %675 = vmatpush1.bf16.msra.mxu0 %v663
      %676 = vmatprep.subr.bf16.mxu0 0
      %677 = vmatpush1.bf16.msra.mxu0 %v664
      %678 = vmatprep.subr.bf16.mxu0 0
      %679 = vmatpush1.bf16.msra.mxu0 %v665
      %680 = vmatprep.subr.bf16.mxu0 0
      %681 = vmatpush1.bf16.msra.mxu0 %v666
      %682 = vmatprep.subr.bf16.mxu0 0
      %683 = vmatpush1.bf16.msra.mxu0 0
      %684 = vmatprep.subr.bf16.mxu0 0
      %685 = vmatpush1.bf16.msra.mxu0 0
      %686 = vmatprep.subr.bf16.mxu0 0
      %687 = vmatpush1.bf16.msra.mxu0 0
      %688 = vmatprep.subr.bf16.mxu0 0
      %689 = vmatpush1.bf16.msra.mxu0 0
      %690 = vmatprep.subr.bf16.mxu0 0
      %691 = vmatpush1.bf16.msra.mxu0 0
      %692 = vmatprep.subr.bf16.mxu0 0
      %693 = vmatpush1.bf16.msra.mxu0 0
      %694 = vmatprep.subr.bf16.mxu0 0
      %695 = vmatpush1.bf16.msra.mxu0 0
      %696 = vmatprep.subr.bf16.mxu0 0
      %697 = vmatpush1.bf16.msra.mxu0 0
      %698 = vmatprep.subr.bf16.mxu0 0
      %699 = vmatpush1.bf16.msra.mxu0 0
      %700 = vmatprep.subr.bf16.mxu0 0
      %701 = vmatpush1.bf16.msra.mxu0 0
      %702 = vmatprep.subr.bf16.mxu0 0
      %703 = vmatpush1.bf16.msra.mxu0 0
      %704 = vmatprep.subr.bf16.mxu0 0
      %705 = vmatpush1.bf16.msra.mxu0 0
      %706 = vmatprep.mubr.bf16.mxu0 0
      %707 = vmatmul.mubr.bf16.gmra.mrb[0].mxu0 %v672
      %v708 = vpop.f32.mrb[0].mxu0
      %v709 = vadd.f32 0.0, %v708
      %v710 = vpop.f32.mrb[0].mxu0
      %v711 = vpop.f32.mrb[0].mxu0
      %v712 = vadd.f32 0.0, %v711
      %v713 = vpop.f32.mrb[0].mxu0
      %714 = vdwg.mxu0
      %v715 = vadd.f32 %v619, %v709
      %v716 = vadd.f32 %v620, %v712
      %v717 = vld [vmem:[%s165 + $0x4] sm:$0xe]
      %v718 = vld [vmem:[%s165 + $0x8] sm:$0xf]
      %v719 = vld [vmem:[%s1 + $0xc0] sm:$0xf]
      %v720 = vld [vmem:[%s1 + $0xc4] sm:$0xf]
      %v721 = vld [vmem:[%s1 + $0xc8] sm:$0xf]
      %v722 = vld [vmem:[%s1 + $0xcc] sm:$0xf]
      %v723 = vld [vmem:[%s1 + $0xd0] sm:$0xf]
      %v724 = vld [vmem:[%s1 + $0xd4] sm:$0xf]
      %v725 = vld [vmem:[%s1 + $0xd8] sm:$0xf]
      %v726 = vld [vmem:[%s1 + $0xdc] sm:$0xf]
      %v729 = vunpack.c.l.b16 %v717
      %v730 = vunpack.c.l.b16 %v718
      %v731 = vpack.c.b16 %v730, %v729
      %v732 = vrot.slane %v731, 1
      %v741 = vunpack.c.l.b16 %v719
      %v742 = vunpack.c.l.b16 %v720
      %v743 = vunpack.c.l.b16 %v721
      %v744 = vunpack.c.l.b16 %v722
      %v745 = vunpack.c.l.b16 %v723
      %v746 = vunpack.c.l.b16 %v724
      %v747 = vunpack.c.l.b16 %v725
      %v748 = vunpack.c.l.b16 %v726
      %v749 = vpack.c.b16 %v742, %v741
      %v750 = vpack.c.b16 %v744, %v743
      %v751 = vpack.c.b16 %v746, %v745
      %v752 = vpack.c.b16 %v748, %v747
      %v758 = vsel %vm226, %v732, 0
      %760 = vmatprep.subr.bf16.mxu0 0
      %761 = vmatpush1.bf16.msra.mxu0 %v749
      %762 = vmatprep.subr.bf16.mxu0 0
      %763 = vmatpush1.bf16.msra.mxu0 %v750
      %764 = vmatprep.subr.bf16.mxu0 0
      %765 = vmatpush1.bf16.msra.mxu0 %v751
      %766 = vmatprep.subr.bf16.mxu0 0
      %767 = vmatpush1.bf16.msra.mxu0 %v752
      %768 = vmatprep.subr.bf16.mxu0 0
      %769 = vmatpush1.bf16.msra.mxu0 0
      %770 = vmatprep.subr.bf16.mxu0 0
      %771 = vmatpush1.bf16.msra.mxu0 0
      %772 = vmatprep.subr.bf16.mxu0 0
      %773 = vmatpush1.bf16.msra.mxu0 0
      %774 = vmatprep.subr.bf16.mxu0 0
      %775 = vmatpush1.bf16.msra.mxu0 0
      %776 = vmatprep.subr.bf16.mxu0 0
      %777 = vmatpush1.bf16.msra.mxu0 0
      %778 = vmatprep.subr.bf16.mxu0 0
      %779 = vmatpush1.bf16.msra.mxu0 0
      %780 = vmatprep.subr.bf16.mxu0 0
      %781 = vmatpush1.bf16.msra.mxu0 0
      %782 = vmatprep.subr.bf16.mxu0 0
      %783 = vmatpush1.bf16.msra.mxu0 0
      %784 = vmatprep.subr.bf16.mxu0 0
      %785 = vmatpush1.bf16.msra.mxu0 0
      %786 = vmatprep.subr.bf16.mxu0 0
      %787 = vmatpush1.bf16.msra.mxu0 0
      %788 = vmatprep.subr.bf16.mxu0 0
      %789 = vmatpush1.bf16.msra.mxu0 0
      %790 = vmatprep.subr.bf16.mxu0 0
      %791 = vmatpush1.bf16.msra.mxu0 0
      %792 = vmatprep.mubr.bf16.mxu0 0
      %793 = vmatmul.mubr.bf16.gmra.mrb[0].mxu0 %v758
      %v794 = vpop.f32.mrb[0].mxu0
      %v795 = vadd.f32 0.0, %v794
      %v796 = vpop.f32.mrb[0].mxu0
      %v797 = vpop.f32.mrb[0].mxu0
      %v798 = vadd.f32 0.0, %v797
      %v799 = vpop.f32.mrb[0].mxu0
      %800 = vdwg.mxu0
      %v801 = vadd.f32 %v715, %v795
      %v802 = vadd.f32 %v716, %v798
      %v803 = vld [vmem:[%s1 + $0xe0] sm:$0xf]
      %v804 = vld [vmem:[%s1 + $0xe4] sm:$0xf]
      %v805 = vld [vmem:[%s1 + $0xe8] sm:$0xf]
      %v806 = vld [vmem:[%s1 + $0xec] sm:$0xf]
      %v807 = vld [vmem:[%s1 + $0xf0] sm:$0xf]
      %v808 = vld [vmem:[%s1 + $0xf4] sm:$0xf]
      %v809 = vld [vmem:[%s1 + $0xf8] sm:$0xf]
      %v810 = vld [vmem:[%s1 + $0xfc] sm:$0xf]
      %v812 = vshrl.u32 %v731, 16
      %v814 = vrot.slane %v812, 1
      %v815 = vshll.u32 %v731, 16
      %v817 = vrot.slane %v815, 2
      %v818 = vor.u32 %v814, %v817
      %v827 = vunpack.c.l.b16 %v803
      %v828 = vunpack.c.l.b16 %v804
      %v829 = vunpack.c.l.b16 %v805
      %v830 = vunpack.c.l.b16 %v806
      %v831 = vunpack.c.l.b16 %v807
      %v832 = vunpack.c.l.b16 %v808
      %v833 = vunpack.c.l.b16 %v809
      %v834 = vunpack.c.l.b16 %v810
      %v835 = vpack.c.b16 %v828, %v827
      %v836 = vpack.c.b16 %v830, %v829
      %v837 = vpack.c.b16 %v832, %v831
      %v838 = vpack.c.b16 %v834, %v833
      %v844 = vsel %vm226, %v818, 0
      %846 = vmatprep.subr.bf16.mxu0 0
      %847 = vmatpush1.bf16.msra.mxu0 %v835
      %848 = vmatprep.subr.bf16.mxu0 0
      %849 = vmatpush1.bf16.msra.mxu0 %v836
      %850 = vmatprep.subr.bf16.mxu0 0
      %851 = vmatpush1.bf16.msra.mxu0 %v837
      %852 = vmatprep.subr.bf16.mxu0 0
      %853 = vmatpush1.bf16.msra.mxu0 %v838
      %854 = vmatprep.subr.bf16.mxu0 0
      %855 = vmatpush1.bf16.msra.mxu0 0
      %856 = vmatprep.subr.bf16.mxu0 0
      %857 = vmatpush1.bf16.msra.mxu0 0
      %858 = vmatprep.subr.bf16.mxu0 0
      %859 = vmatpush1.bf16.msra.mxu0 0
      %860 = vmatprep.subr.bf16.mxu0 0
      %861 = vmatpush1.bf16.msra.mxu0 0
      %862 = vmatprep.subr.bf16.mxu0 0
      %863 = vmatpush1.bf16.msra.mxu0 0
      %864 = vmatprep.subr.bf16.mxu0 0
      %865 = vmatpush1.bf16.msra.mxu0 0
      %866 = vmatprep.subr.bf16.mxu0 0
      %867 = vmatpush1.bf16.msra.mxu0 0
      %868 = vmatprep.subr.bf16.mxu0 0
      %869 = vmatpush1.bf16.msra.mxu0 0
      %870 = vmatprep.subr.bf16.mxu0 0
      %871 = vmatpush1.bf16.msra.mxu0 0
      %872 = vmatprep.subr.bf16.mxu0 0
      %873 = vmatpush1.bf16.msra.mxu0 0
      %874 = vmatprep.subr.bf16.mxu0 0
      %875 = vmatpush1.bf16.msra.mxu0 0
      %876 = vmatprep.subr.bf16.mxu0 0
      %877 = vmatpush1.bf16.msra.mxu0 0
      %878 = vmatprep.mubr.bf16.mxu0 0
      %879 = vmatmul.mubr.bf16.gmra.mrb[0].mxu0 %v844
      %v880 = vpop.f32.mrb[0].mxu0
      %v881 = vadd.f32 0.0, %v880
      %v882 = vpop.f32.mrb[0].mxu0
      %v883 = vpop.f32.mrb[0].mxu0
      %v884 = vadd.f32 0.0, %v883
      %v885 = vpop.f32.mrb[0].mxu0
      %886 = vdwg.mxu0
      %v887 = vadd.f32 %v801, %v881
      %v888 = vadd.f32 %v802, %v884
      %v889 = vld [vmem:[%s165 + $0x4] sm:$0xc]
      %v890 = vld [vmem:[%s165 + $0x8] sm:$0xf]
      %v891 = vld [vmem:[%s165 + $0xc] sm:$0x1]
      %v892 = vld [vmem:[%s1 + $0x100] sm:$0xf]
      %v893 = vld [vmem:[%s1 + $0x104] sm:$0xf]
      %v894 = vld [vmem:[%s1 + $0x108] sm:$0xf]
      %v895 = vld [vmem:[%s1 + $0x10c] sm:$0xf]
      %v896 = vld [vmem:[%s1 + $0x110] sm:$0xf]
      %v897 = vld [vmem:[%s1 + $0x114] sm:$0xf]
      %v898 = vld [vmem:[%s1 + $0x118] sm:$0xf]
      %v899 = vld [vmem:[%s1 + $0x11c] sm:$0xf]
      %v903 = vunpack.c.l.b16 %v889
      %v904 = vunpack.c.l.b16 %v890
      %v905 = vunpack.c.l.b16 %v891
      %v906 = vpack.c.b16 %v904, %v903
      %v907 = vpack.c.b16 %v905, %v905
      %vm908 = vcmask 1045504
      %v909 = vrot.slane %v906, 2
      %v910 = vrot.slane %v907, 2
      %v911 = vsel %vm908, %v909, %v910
      %v920 = vunpack.c.l.b16 %v892
      %v921 = vunpack.c.l.b16 %v893
      %v922 = vunpack.c.l.b16 %v894
      %v923 = vunpack.c.l.b16 %v895
      %v924 = vunpack.c.l.b16 %v896
      %v925 = vunpack.c.l.b16 %v897
      %v926 = vunpack.c.l.b16 %v898
      %v927 = vunpack.c.l.b16 %v899
      %v928 = vpack.c.b16 %v921, %v920
      %v929 = vpack.c.b16 %v923, %v922
      %v930 = vpack.c.b16 %v925, %v924
      %v931 = vpack.c.b16 %v927, %v926
      %v937 = vsel %vm226, %v911, 0
      %939 = vmatprep.subr.bf16.mxu0 0
      %940 = vmatpush1.bf16.msra.mxu0 %v928
      %941 = vmatprep.subr.bf16.mxu0 0
      %942 = vmatpush1.bf16.msra.mxu0 %v929
      %943 = vmatprep.subr.bf16.mxu0 0
      %944 = vmatpush1.bf16.msra.mxu0 %v930
      %945 = vmatprep.subr.bf16.mxu0 0
      %946 = vmatpush1.bf16.msra.mxu0 %v931
      %947 = vmatprep.subr.bf16.mxu0 0
      %948 = vmatpush1.bf16.msra.mxu0 0
      %949 = vmatprep.subr.bf16.mxu0 0
      %950 = vmatpush1.bf16.msra.mxu0 0
      %951 = vmatprep.subr.bf16.mxu0 0
      %952 = vmatpush1.bf16.msra.mxu0 0
      %953 = vmatprep.subr.bf16.mxu0 0
      %954 = vmatpush1.bf16.msra.mxu0 0
      %955 = vmatprep.subr.bf16.mxu0 0
      %956 = vmatpush1.bf16.msra.mxu0 0
      %957 = vmatprep.subr.bf16.mxu0 0
      %958 = vmatpush1.bf16.msra.mxu0 0
      %959 = vmatprep.subr.bf16.mxu0 0
      %960 = vmatpush1.bf16.msra.mxu0 0
      %961 = vmatprep.subr.bf16.mxu0 0
      %962 = vmatpush1.bf16.msra.mxu0 0
      %963 = vmatprep.subr.bf16.mxu0 0
      %964 = vmatpush1.bf16.msra.mxu0 0
      %965 = vmatprep.subr.bf16.mxu0 0
      %966 = vmatpush1.bf16.msra.mxu0 0
      %967 = vmatprep.subr.bf16.mxu0 0
      %968 = vmatpush1.bf16.msra.mxu0 0
      %969 = vmatprep.subr.bf16.mxu0 0
      %970 = vmatpush1.bf16.msra.mxu0 0
      %971 = vmatprep.mubr.bf16.mxu0 0
      %972 = vmatmul.mubr.bf16.gmra.mrb[0].mxu0 %v937
      %v973 = vpop.f32.mrb[0].mxu0
      %v974 = vadd.f32 0.0, %v973
      %v975 = vpop.f32.mrb[0].mxu0
      %v976 = vpop.f32.mrb[0].mxu0
      %v977 = vadd.f32 0.0, %v976
      %v978 = vpop.f32.mrb[0].mxu0
      %979 = vdwg.mxu0
      %v980 = vadd.f32 %v887, %v974
      %v981 = vadd.f32 %v888, %v977
      %v982 = vld [vmem:[%s2] sm:$0x1]
      %v984 = vlaneseq
      %v985 = vshrl.u32 %v984, 7
      %v986 = vsub.s32 0, %v985
      %v987 = vrot.slane %v982, %v986
      %v989 = vadd.f32 %v980, %v987
      %v990 = vadd.f32 %v981, %v987
      %v991 = vmax.f32 %v989, 0.0
      %v992 = vmax.f32 %v990, 0.0
      %v993 = vpack.c.bf16 %v992, %v991
      %v995 = vunpack.c.l.b16 %v993
      %v996 = vunpack.c.h.b16 %v993
      %v997 = vpack.c.b16 %v995, %v995
      %v998 = vpack.c.b16 %v996, %v996
      %vm1001 = vcmask 519168
      %1002 = vst.msk [vmem:[%s170] sm:$0xf] %vm1001, %v997
      %vm1003 = vcmask 518144
      %vm1004 = vsmask.f32 2304
      %vm1005 = vmand %vm1003, %vm1004
      %v1006 = vld [vmem:[%s170 + $0x4] sm:$0x7]
      %v1007 = vsel %vm1005, %v998, %v1006
      %1008 = vst [vmem:[%s170 + $0x4] sm:$0x7] %v1007
      %p1009 = scmp.lt.s32.totalorder %s14, 1
      %s1010 = scalar_select %p1009, %s14, 1
      %s1011 = smul.addr %s1010, 2
      %s1012 = smul.addr %s1011, 4
      %s1013 = scalar_lea.vmem %s3, %s1012
      // Predicated region
      $region33: #{atari_a2c_forward.6} parent=31 // pred_check
        %p1014 = pneg %p100
      $region34: #{atari_a2c_forward.6} parent=31 // pred_check_branch
        %1016 = sbr.rel (%p1014) target = $region36
      $region35: #{atari_a2c_forward.6} parent=31 // pred_region
        _
      $region36: #{atari_a2c_forward.6} parent=31 // pred_fallthru
        _
    $region32: #{atari_a2c_forward.6} parent=5 // pred_fallthru
      _
    %p1017 = scmp.le.s32.totalorder 2, %s9
    // Predicated region
    $region37: #{atari_a2c_forward.6} parent=5 // pred_check
      %p1018 = pneg %p1017
    $region38: #{atari_a2c_forward.6} parent=5 // pred_check_branch
      %1020 = sbr.rel (%p1018) target = $region40
    $region39: #{atari_a2c_forward.6} parent=5 // pred_region
      %s1021 = ssub.s32 %s9, 2
      // Predicated region
      $region41: #{atari_a2c_forward.6} parent=39 // pred_check
        %p1022 = pneg %p106
      $region42: #{atari_a2c_forward.6} parent=39 // pred_check_branch
        %1024 = sbr.rel (%p1022) target = $region44
      $region43: #{atari_a2c_forward.6} parent=39 // pred_region
        %p1025 = scmp.lt.s32.totalorder %s15, 1
        %s1026 = scalar_select %p1025, %s15, 1
        %s1027 = smul.addr %s1026, 2
        %s1028 = smul.addr %s1027, 4
        %s1029 = scalar_lea.vmem %s3, %s1028
      $region44: #{atari_a2c_forward.6} parent=39 // pred_fallthru
        _
    $region40: #{atari_a2c_forward.6} parent=5 // pred_fallthru
      _
  $region6: #{atari_a2c_forward.6} parent=0 // loop_footer
    %s13 = sadd.s32 1, %s9
  $region7: #{atari_a2c_forward.6} parent=0 // loop_footer_branch
    %8 = sbr.rel target = $region3
  $region8: #{atari_a2c_forward.6} parent=0 // loop_exit
    _

// kernel: atari_a2c_forward.7
$region0: #{atari_a2c_forward.7}
  #allocation0 [shape = 'u32[]', space=smem, size = 0x4, offset = 0x4, fixed_abs, tag = 'smem constant byte address 0x4 - core index']
  #allocation1 [shape = 'u32[144,128]{1,0:T(1,128)}', space=vmem, size = 0x12000, scoped, tag = 'internal scratch']
  %s0 = inlined_call_operand.vmem [shape: bf16[16,576], index: 0, kind: input, shape index: {}]
  %s1 = inlined_call_operand.vmem [shape: bf16[576,1024], index: 1, kind: input, shape index: {}]
  %s2 = inlined_call_operand.vmem [shape: f32[1,1024], index: 2, kind: input, shape index: {}]
  %s3 = inlined_call_operand.vmem [shape: bf16[1024,128], index: 3, kind: input, shape index: {}]
  %s4 = inlined_call_operand.vmem [shape: f32[1,128], index: 4, kind: input, shape index: {}]
  %s5 = inlined_call_operand.vmem [shape: f32[16,128], index: 5, kind: output, shape index: {}]
  %s6 = sld [smem:[#allocation0]]
  $region53: #{atari_a2c_forward.7} parent=0
    _
  %s8 = ssub.s32 1, %s6
  %s9 = scalar_select 0, %s8, %s6
  loop: start=0, step=1, limit=4
  $region2: #{atari_a2c_forward.7} parent=0 // loop_pre_header
    _
  $region3: #{atari_a2c_forward.7} parent=0 // loop_header
    %s11 = sphi 0, %s15
    %p12 = scmp.ge.s32.totalorder %s11, 4
    %s21 = sphi 0, %s23
    %s24 = sphi 0, %s21
    %s25 = sphi 0, %s24
    %s41 = sphi 0, %s25
    %s45 = sphi 0, %s45
    %s47 = sphi 0, %s45
    %s48 = sphi 0, %s47
    %s62 = sphi 0, %s48
    %s66 = sphi 0, %s66
    %s68 = sphi 0, %s66
    %s69 = sphi 0, %s68
    %s83 = sphi 0, %s69
    %s87 = sphi 0, %s87
    %s89 = sphi 0, %s87
    %s90 = sphi 0, %s89
    %s104 = sphi 0, %s90
    %s108 = sphi 0, %s108
    %s110 = sphi 0, %s108
    %s111 = sphi 0, %s110
    %s125 = sphi 0, %s111
    %s131 = sphi 0, %s133
    %s134 = sphi 0, %s131
    %s135 = sphi 0, %s134
    %s151 = sphi 0, %s135
  $region4: #{atari_a2c_forward.7} parent=0 // loop_header_branch
    %14 = sbr.rel (%p12) target = $region8
  $region5: #{atari_a2c_forward.7} parent=0 // loop_body
    %s16 = ssub.s32 %s11, 1
    %s17 = ssub.s32 %s11, 2
    %s18 = sadd.s32 %s11, 1
    %s19 = ssub.s32 %s11, %s18
    %p20 = scmp.eq.s32.totalorder %s19, 0
    %s22 = sadd.s32 %s21, 1
    %s23 = scalar_select %p20, %s21, %s22
    %p26 = pneg %p20
    %p27 = scmp.eq.s32.totalorder %s11, 1
    %p28 = por %p26, %p27
    %p29 = scmp.ne.s32.totalorder %s21, %s24
    %p30 = scmp.eq.s32.totalorder %s11, 0
    %p31 = por %p29, %p30
    %p32 = scmp.ne.s32.totalorder %s21, %s24
    %p33 = scmp.eq.s32.totalorder %s16, 1
    %p34 = por %p32, %p33
    %p35 = scmp.ne.s32.totalorder %s24, %s25
    %p36 = scmp.eq.s32.totalorder %s16, 0
    %p37 = por %p35, %p36
    %p38 = scmp.ne.s32.totalorder %s24, %s25
    %p39 = scmp.eq.s32.totalorder %s17, 1
    %p40 = por %p38, %p39
    %p42 = scmp.ne.s32.totalorder %s25, %s41
    %p43 = scmp.eq.s32.totalorder %s17, 0
    %p44 = por %p42, %p43
    %s46 = sadd.s32 %s45, 1
    %p49 = scmp.eq.s32.totalorder %s11, 1
    %p50 = scmp.ne.s32.totalorder %s45, %s47
    %p51 = scmp.eq.s32.totalorder %s11, 0
    %p52 = por %p50, %p51
    %p53 = scmp.ne.s32.totalorder %s45, %s47
    %p54 = scmp.eq.s32.totalorder %s16, 1
    %p55 = por %p53, %p54
    %p56 = scmp.ne.s32.totalorder %s47, %s48
    %p57 = scmp.eq.s32.totalorder %s16, 0
    %p58 = por %p56, %p57
    %p59 = scmp.ne.s32.totalorder %s47, %s48
    %p60 = scmp.eq.s32.totalorder %s17, 1
    %p61 = por %p59, %p60
    %p63 = scmp.ne.s32.totalorder %s48, %s62
    %p64 = scmp.eq.s32.totalorder %s17, 0
    %p65 = por %p63, %p64
    %s67 = sadd.s32 %s66, 1
    %p70 = scmp.eq.s32.totalorder %s11, 1
    %p71 = scmp.ne.s32.totalorder %s66, %s68
    %p72 = scmp.eq.s32.totalorder %s11, 0
    %p73 = por %p71, %p72
    %p74 = scmp.ne.s32.totalorder %s66, %s68
    %p75 = scmp.eq.s32.totalorder %s16, 1
    %p76 = por %p74, %p75
    %p77 = scmp.ne.s32.totalorder %s68, %s69
    %p78 = scmp.eq.s32.totalorder %s16, 0
    %p79 = por %p77, %p78
    %p80 = scmp.ne.s32.totalorder %s68, %s69
    %p81 = scmp.eq.s32.totalorder %s17, 1
    %p82 = por %p80, %p81
    %p84 = scmp.ne.s32.totalorder %s69, %s83
    %p85 = scmp.eq.s32.totalorder %s17, 0
    %p86 = por %p84, %p85
    %s88 = sadd.s32 %s87, 1
    %p91 = scmp.eq.s32.totalorder %s11, 1
    %p92 = scmp.ne.s32.totalorder %s87, %s89
    %p93 = scmp.eq.s32.totalorder %s11, 0
    %p94 = por %p92, %p93
    %p95 = scmp.ne.s32.totalorder %s87, %s89
    %p96 = scmp.eq.s32.totalorder %s16, 1
    %p97 = por %p95, %p96
    %p98 = scmp.ne.s32.totalorder %s89, %s90
    %p99 = scmp.eq.s32.totalorder %s16, 0
    %p100 = por %p98, %p99
    %p101 = scmp.ne.s32.totalorder %s89, %s90
    %p102 = scmp.eq.s32.totalorder %s17, 1
    %p103 = por %p101, %p102
    %p105 = scmp.ne.s32.totalorder %s90, %s104
    %p106 = scmp.eq.s32.totalorder %s17, 0
    %p107 = por %p105, %p106
    %s109 = sadd.s32 %s108, 1
    %p112 = scmp.eq.s32.totalorder %s11, 1
    %p113 = scmp.ne.s32.totalorder %s108, %s110
    %p114 = scmp.eq.s32.totalorder %s11, 0
    %p115 = por %p113, %p114
    %p116 = scmp.ne.s32.totalorder %s108, %s110
    %p117 = scmp.eq.s32.totalorder %s16, 1
    %p118 = por %p116, %p117
    %p119 = scmp.ne.s32.totalorder %s110, %s111
    %p120 = scmp.eq.s32.totalorder %s16, 0
    %p121 = por %p119, %p120
    %p122 = scmp.ne.s32.totalorder %s110, %s111
    %p123 = scmp.eq.s32.totalorder %s17, 1
    %p124 = por %p122, %p123
    %p126 = scmp.ne.s32.totalorder %s111, %s125
    %p127 = scmp.eq.s32.totalorder %s17, 0
    %p128 = por %p126, %p127
    %s129 = ssub.s32 %s11, %s18
    %p130 = scmp.eq.s32.totalorder %s129, 0
    %s132 = sadd.s32 %s131, 1
    %s133 = scalar_select %p130, %s131, %s132
    %p136 = pneg %p130
    %p137 = scmp.eq.s32.totalorder %s11, 1
    %p138 = por %p136, %p137
    %p139 = scmp.ne.s32.totalorder %s131, %s134
    %p140 = scmp.eq.s32.totalorder %s11, 0
    %p141 = por %p139, %p140
    %p142 = scmp.ne.s32.totalorder %s131, %s134
    %p143 = scmp.eq.s32.totalorder %s16, 1
    %p144 = por %p142, %p143
    %p145 = scmp.ne.s32.totalorder %s134, %s135
    %p146 = scmp.eq.s32.totalorder %s16, 0
    %p147 = por %p145, %p146
    %p148 = scmp.ne.s32.totalorder %s134, %s135
    %p149 = scmp.eq.s32.totalorder %s17, 1
    %p150 = por %p148, %p149
    %p152 = scmp.ne.s32.totalorder %s135, %s151
    %p153 = scmp.eq.s32.totalorder %s17, 0
    %p154 = por %p152, %p153
    %p155 = scmp.le.s32.totalorder 1, %s11
    %p156 = scmp.lt.s32.totalorder %s11, 3
    %p157 = pnand %p155, %p156
    %p158 = pneg %p157
    // Predicated region
    $region9: #{atari_a2c_forward.7} parent=5 // pred_check
      _
    $region10: #{atari_a2c_forward.7} parent=5 // pred_check_branch
      %160 = sbr.rel (%p157) target = $region12
    $region11: #{atari_a2c_forward.7} parent=5 // pred_region
      %s161 = ssub.s32 %s11, 1
      // Predicated region
      $region13: #{atari_a2c_forward.7} parent=11 // pred_check
        %p162 = pneg %p58
      $region14: #{atari_a2c_forward.7} parent=11 // pred_check_branch
        %164 = sbr.rel (%p162) target = $region16
      $region15: #{atari_a2c_forward.7} parent=11 // pred_region
        _
      $region16: #{atari_a2c_forward.7} parent=11 // pred_fallthru
        _
      // Predicated region
      $region17: #{atari_a2c_forward.7} parent=11 // pred_check
        %p165 = pneg %p79
      $region18: #{atari_a2c_forward.7} parent=11 // pred_check_branch
        %167 = sbr.rel (%p165) target = $region20
      $region19: #{atari_a2c_forward.7} parent=11 // pred_region
        _
      $region20: #{atari_a2c_forward.7} parent=11 // pred_fallthru
        _
      // Predicated region
      $region21: #{atari_a2c_forward.7} parent=11 // pred_check
        %p168 = pneg %p100
      $region22: #{atari_a2c_forward.7} parent=11 // pred_check_branch
        %170 = sbr.rel (%p168) target = $region24
      $region23: #{atari_a2c_forward.7} parent=11 // pred_region
        _
      $region24: #{atari_a2c_forward.7} parent=11 // pred_fallthru
        _
      // Predicated region
      $region25: #{atari_a2c_forward.7} parent=11 // pred_check
        %p171 = pneg %p121
      $region26: #{atari_a2c_forward.7} parent=11 // pred_check_branch
        %173 = sbr.rel (%p171) target = $region28
      $region27: #{atari_a2c_forward.7} parent=11 // pred_region
        _
      $region28: #{atari_a2c_forward.7} parent=11 // pred_fallthru
        _
    $region12: #{atari_a2c_forward.7} parent=5 // pred_fallthru
      _
    %p174 = scmp.lt.s32.totalorder %s11, 2
    // Predicated region
    $region29: #{atari_a2c_forward.7} parent=5 // pred_check
      %p175 = pneg %p174
    $region30: #{atari_a2c_forward.7} parent=5 // pred_check_branch
      %177 = sbr.rel (%p175) target = $region32
    $region31: #{atari_a2c_forward.7} parent=5 // pred_region
      // Predicated region
      $region33: #{atari_a2c_forward.7} parent=31 // pred_check
        %p178 = pneg %p31
      $region34: #{atari_a2c_forward.7} parent=31 // pred_check_branch
        %180 = sbr.rel (%p178) target = $region36
      $region35: #{atari_a2c_forward.7} parent=31 // pred_region
        %p181 = scmp.lt.s32.totalorder %s11, 1
        %s182 = scalar_select %p181, %s11, 1
        %s183 = smul.addr %s182, 5
        %s184 = smul.addr %s183, 4
        %s185 = scalar_lea.vmem %s0, %s184
      $region36: #{atari_a2c_forward.7} parent=31 // pred_fallthru
        _
    $region32: #{atari_a2c_forward.7} parent=5 // pred_fallthru
      _
    %p186 = scmp.le.s32.totalorder 1, %s11
    %p187 = scmp.lt.s32.totalorder %s11, 3
    %p188 = pnand %p186, %p187
    %p189 = pneg %p188
    // Predicated region
    $region37: #{atari_a2c_forward.7} parent=5 // pred_check
      _
    $region38: #{atari_a2c_forward.7} parent=5 // pred_check_branch
      %191 = sbr.rel (%p188) target = $region40
    $region39: #{atari_a2c_forward.7} parent=5 // pred_region
      %s192 = ssub.s32 %s11, 1
      %p193 = scmp.lt.s32.totalorder %s16, 1
      %s194 = scalar_select %p193, %s16, 1
      %s195 = smul.addr %s194, 5
      %s196 = smul.addr %s195, 4
      %s197 = scalar_lea.vmem %s0, %s196
      %p198 = pneg %p37
      %p199 = pneg %p34
      %p200 = pneg %p58
      %p201 = pneg %p55
      %p202 = pneg %p79
      %p203 = pneg %p76
      %p204 = pneg %p100
      %p205 = pneg %p97
      %p206 = pneg %p121
      %p207 = pneg %p118
      %p208 = pneg %p147
      %p209 = pneg %p144
      %p210 = scmp.lt.s32.totalorder %s16, 1
      %s211 = scalar_select %p210, %s16, 1
      %s212 = smul.addr %s211, 8
      %s213 = scalar_lea.vmem %s5, %s212
      %p214 = scmp.lt.s32.totalorder %s16, 1
      %s215 = scalar_select %p214, %s16, 1
      %s216 = smul.addr %s215, 5
      %s217 = smul.addr %s216, 4
      %s218 = scalar_lea.vmem %s0, %s217
      %p219 = scmp.lt.s32.totalorder %s16, 1
      %s220 = scalar_select %p219, %s16, 1
      %s221 = smul.addr %s220, 8
      %s222 = scalar_lea.vmem %s5, %s221
      %v224 = vld [vmem:[%s218] sm:$0xff]
      %v225 = vld [vmem:[%s218 + $0x8] sm:$0xff]
      %v226 = vld [vmem:[%s218 + $0x10] sm:$0xf]
      %v227 = vld [vmem:[%s1] sm:$0xff]
      %v228 = vld [vmem:[%s1 + $0x8] sm:$0xff]
      %v229 = vld [vmem:[%s1 + $0x10] sm:$0xff]
      %v230 = vld [vmem:[%s1 + $0x18] sm:$0xff]
      %v231 = vld [vmem:[%s1 + $0x20] sm:$0xff]
      %v232 = vld [vmem:[%s1 + $0x28] sm:$0xff]
      %v233 = vld [vmem:[%s1 + $0x30] sm:$0xff]
      %v234 = vld [vmem:[%s1 + $0x38] sm:$0xff]
      %v235 = vld [vmem:[%s1 + $0x40] sm:$0xff]
      %v236 = vld [vmem:[%s1 + $0x48] sm:$0xff]
      %v237 = vld [vmem:[%s1 + $0x50] sm:$0xff]
      %v238 = vld [vmem:[%s1 + $0x58] sm:$0xff]
      %v239 = vld [vmem:[%s1 + $0x60] sm:$0xff]
      %v240 = vld [vmem:[%s1 + $0x68] sm:$0xff]
      %v241 = vld [vmem:[%s1 + $0x70] sm:$0xff]
      %v242 = vld [vmem:[%s1 + $0x78] sm:$0xff]
      %v243 = vld [vmem:[%s1 + $0x80] sm:$0xff]
      %v244 = vld [vmem:[%s1 + $0x88] sm:$0xff]
      %v245 = vld [vmem:[%s1 + $0x90] sm:$0xff]
      %v246 = vld [vmem:[%s1 + $0x98] sm:$0xff]
      %v247 = vld [vmem:[%s1 + $0xa0] sm:$0xff]
      %v248 = vld [vmem:[%s1 + $0xa8] sm:$0xff]
      %v249 = vld [vmem:[%s1 + $0xb0] sm:$0xff]
      %v250 = vld [vmem:[%s1 + $0xb8] sm:$0xff]
      %v251 = vld [vmem:[%s1 + $0xc0] sm:$0xff]
      %v252 = vld [vmem:[%s1 + $0xc8] sm:$0xff]
      %v253 = vld [vmem:[%s1 + $0xd0] sm:$0xff]
      %v254 = vld [vmem:[%s1 + $0xd8] sm:$0xff]
      %v255 = vld [vmem:[%s1 + $0xe0] sm:$0xff]
      %v256 = vld [vmem:[%s1 + $0xe8] sm:$0xff]
      %v257 = vld [vmem:[%s1 + $0xf0] sm:$0xff]
      %v258 = vld [vmem:[%s1 + $0xf8] sm:$0xff]
      %v259 = vld [vmem:[%s1 + $0x100] sm:$0xff]
      %v260 = vld [vmem:[%s1 + $0x108] sm:$0xff]
      %v261 = vld [vmem:[%s1 + $0x110] sm:$0xff]
      %v262 = vld [vmem:[%s1 + $0x118] sm:$0xff]
      %v263 = vld [vmem:[%s1 + $0x120] sm:$0xff]
      %v264 = vld [vmem:[%s1 + $0x128] sm:$0xff]
      %v265 = vld [vmem:[%s1 + $0x130] sm:$0xff]
      %v266 = vld [vmem:[%s1 + $0x138] sm:$0xff]
      %v267 = vld [vmem:[%s1 + $0x140] sm:$0xff]
      %v268 = vld [vmem:[%s1 + $0x148] sm:$0xff]
      %v269 = vld [vmem:[%s1 + $0x150] sm:$0xff]
      %v270 = vld [vmem:[%s1 + $0x158] sm:$0xff]
      %v271 = vld [vmem:[%s1 + $0x160] sm:$0xff]
      %v272 = vld [vmem:[%s1 + $0x168] sm:$0xff]
      %v273 = vld [vmem:[%s1 + $0x170] sm:$0xff]
      %v274 = vld [vmem:[%s1 + $0x178] sm:$0xff]
      %v275 = vld [vmem:[%s1 + $0x180] sm:$0xff]
      %v276 = vld [vmem:[%s1 + $0x188] sm:$0xff]
      %v277 = vld [vmem:[%s1 + $0x190] sm:$0xff]
      %v278 = vld [vmem:[%s1 + $0x198] sm:$0xff]
      %v279 = vld [vmem:[%s1 + $0x1a0] sm:$0xff]
      %v280 = vld [vmem:[%s1 + $0x1a8] sm:$0xff]
      %v281 = vld [vmem:[%s1 + $0x1b0] sm:$0xff]
      %v282 = vld [vmem:[%s1 + $0x1b8] sm:$0xff]
      %v283 = vld [vmem:[%s1 + $0x1c0] sm:$0xff]
      %v284 = vld [vmem:[%s1 + $0x1c8] sm:$0xff]
      %v285 = vld [vmem:[%s1 + $0x1d0] sm:$0xff]
      %v286 = vld [vmem:[%s1 + $0x1d8] sm:$0xff]
      %v287 = vld [vmem:[%s1 + $0x1e0] sm:$0xff]
      %v288 = vld [vmem:[%s1 + $0x1e8] sm:$0xff]
      %v289 = vld [vmem:[%s1 + $0x1f0] sm:$0xff]
      %v290 = vld [vmem:[%s1 + $0x1f8] sm:$0xff]
      %v291 = vld [vmem:[%s1 + $0x200] sm:$0xff]
      %v292 = vld [vmem:[%s1 + $0x208] sm:$0xff]
      %v293 = vld [vmem:[%s1 + $0x210] sm:$0xff]
      %v294 = vld [vmem:[%s1 + $0x218] sm:$0xff]
      %v295 = vld [vmem:[%s1 + $0x220] sm:$0xff]
      %v296 = vld [vmem:[%s1 + $0x228] sm:$0xff]
      %v297 = vld [vmem:[%s1 + $0x230] sm:$0xff]
      %v298 = vld [vmem:[%s1 + $0x238] sm:$0xff]
      %v299 = vld [vmem:[%s1 + $0x240] sm:$0xff]
      %v300 = vld [vmem:[%s1 + $0x248] sm:$0xff]
      %v301 = vld [vmem:[%s1 + $0x250] sm:$0xff]
      %v302 = vld [vmem:[%s1 + $0x258] sm:$0xff]
      %v303 = vld [vmem:[%s1 + $0x260] sm:$0xff]
      %v304 = vld [vmem:[%s1 + $0x268] sm:$0xff]
      %v305 = vld [vmem:[%s1 + $0x270] sm:$0xff]
      %v306 = vld [vmem:[%s1 + $0x278] sm:$0xff]
      %v307 = vld [vmem:[%s1 + $0x280] sm:$0xff]
      %v308 = vld [vmem:[%s1 + $0x288] sm:$0xff]
      %v309 = vld [vmem:[%s1 + $0x290] sm:$0xff]
      %v310 = vld [vmem:[%s1 + $0x298] sm:$0xff]
      %v311 = vld [vmem:[%s1 + $0x2a0] sm:$0xff]
      %v312 = vld [vmem:[%s1 + $0x2a8] sm:$0xff]
      %v313 = vld [vmem:[%s1 + $0x2b0] sm:$0xff]
      %v314 = vld [vmem:[%s1 + $0x2b8] sm:$0xff]
      %v315 = vld [vmem:[%s1 + $0x2c0] sm:$0xff]
      %v316 = vld [vmem:[%s1 + $0x2c8] sm:$0xff]
      %v317 = vld [vmem:[%s1 + $0x2d0] sm:$0xff]
      %v318 = vld [vmem:[%s1 + $0x2d8] sm:$0xff]
      %v319 = vld [vmem:[%s1 + $0x2e0] sm:$0xff]
      %v320 = vld [vmem:[%s1 + $0x2e8] sm:$0xff]
      %v321 = vld [vmem:[%s1 + $0x2f0] sm:$0xff]
      %v322 = vld [vmem:[%s1 + $0x2f8] sm:$0xff]
      %v323 = vld [vmem:[%s1 + $0x300] sm:$0xff]
      %v324 = vld [vmem:[%s1 + $0x308] sm:$0xff]
      %v325 = vld [vmem:[%s1 + $0x310] sm:$0xff]
      %v326 = vld [vmem:[%s1 + $0x318] sm:$0xff]
      %v327 = vld [vmem:[%s1 + $0x320] sm:$0xff]
      %v328 = vld [vmem:[%s1 + $0x328] sm:$0xff]
      %v329 = vld [vmem:[%s1 + $0x330] sm:$0xff]
      %v330 = vld [vmem:[%s1 + $0x338] sm:$0xff]
      %v331 = vld [vmem:[%s1 + $0x340] sm:$0xff]
      %v332 = vld [vmem:[%s1 + $0x348] sm:$0xff]
      %v333 = vld [vmem:[%s1 + $0x350] sm:$0xff]
      %v334 = vld [vmem:[%s1 + $0x358] sm:$0xff]
      %v335 = vld [vmem:[%s1 + $0x360] sm:$0xff]
      %v336 = vld [vmem:[%s1 + $0x368] sm:$0xff]
      %v337 = vld [vmem:[%s1 + $0x370] sm:$0xff]
      %v338 = vld [vmem:[%s1 + $0x378] sm:$0xff]
      %v339 = vld [vmem:[%s1 + $0x380] sm:$0xff]
      %v340 = vld [vmem:[%s1 + $0x388] sm:$0xff]
      %v341 = vld [vmem:[%s1 + $0x390] sm:$0xff]
      %v342 = vld [vmem:[%s1 + $0x398] sm:$0xff]
      %v343 = vld [vmem:[%s1 + $0x3a0] sm:$0xff]
      %v344 = vld [vmem:[%s1 + $0x3a8] sm:$0xff]
      %v345 = vld [vmem:[%s1 + $0x3b0] sm:$0xff]
      %v346 = vld [vmem:[%s1 + $0x3b8] sm:$0xff]
      %v347 = vld [vmem:[%s1 + $0x3c0] sm:$0xff]
      %v348 = vld [vmem:[%s1 + $0x3c8] sm:$0xff]
      %v349 = vld [vmem:[%s1 + $0x3d0] sm:$0xff]
      %v350 = vld [vmem:[%s1 + $0x3d8] sm:$0xff]
      %v351 = vld [vmem:[%s1 + $0x3e0] sm:$0xff]
      %v352 = vld [vmem:[%s1 + $0x3e8] sm:$0xff]
      %v353 = vld [vmem:[%s1 + $0x3f0] sm:$0xff]
      %v354 = vld [vmem:[%s1 + $0x3f8] sm:$0xff]
      %v355 = vld [vmem:[%s1 + $0x400] sm:$0xff]
      %v356 = vld [vmem:[%s1 + $0x408] sm:$0xff]
      %v357 = vld [vmem:[%s1 + $0x410] sm:$0xff]
      %v358 = vld [vmem:[%s1 + $0x418] sm:$0xff]
      %v359 = vld [vmem:[%s1 + $0x420] sm:$0xff]
      %v360 = vld [vmem:[%s1 + $0x428] sm:$0xff]
      %v361 = vld [vmem:[%s1 + $0x430] sm:$0xff]
      %v362 = vld [vmem:[%s1 + $0x438] sm:$0xff]
      %v363 = vld [vmem:[%s1 + $0x440] sm:$0xff]
      %v364 = vld [vmem:[%s1 + $0x448] sm:$0xff]
      %v365 = vld [vmem:[%s1 + $0x450] sm:$0xff]
      %v366 = vld [vmem:[%s1 + $0x458] sm:$0xff]
      %v367 = vld [vmem:[%s1 + $0x460] sm:$0xff]
      %v368 = vld [vmem:[%s1 + $0x468] sm:$0xff]
      %v369 = vld [vmem:[%s1 + $0x470] sm:$0xff]
      %v370 = vld [vmem:[%s1 + $0x478] sm:$0xff]
      %v371 = vld [vmem:[%s1 + $0x480] sm:$0xff]
      %v372 = vld [vmem:[%s1 + $0x488] sm:$0xff]
      %v373 = vld [vmem:[%s1 + $0x490] sm:$0xff]
      %v374 = vld [vmem:[%s1 + $0x498] sm:$0xff]
      %v375 = vld [vmem:[%s1 + $0x4a0] sm:$0xff]
      %v376 = vld [vmem:[%s1 + $0x4a8] sm:$0xff]
      %v377 = vld [vmem:[%s1 + $0x4b0] sm:$0xff]
      %v378 = vld [vmem:[%s1 + $0x4b8] sm:$0xff]
      %v379 = vld [vmem:[%s1 + $0x4c0] sm:$0xff]
      %v380 = vld [vmem:[%s1 + $0x4c8] sm:$0xff]
      %v381 = vld [vmem:[%s1 + $0x4d0] sm:$0xff]
      %v382 = vld [vmem:[%s1 + $0x4d8] sm:$0xff]
      %v383 = vld [vmem:[%s1 + $0x4e0] sm:$0xff]
      %v384 = vld [vmem:[%s1 + $0x4e8] sm:$0xff]
      %v385 = vld [vmem:[%s1 + $0x4f0] sm:$0xff]
      %v386 = vld [vmem:[%s1 + $0x4f8] sm:$0xff]
      %v387 = vld [vmem:[%s1 + $0x500] sm:$0xff]
      %v388 = vld [vmem:[%s1 + $0x508] sm:$0xff]
      %v389 = vld [vmem:[%s1 + $0x510] sm:$0xff]
      %v390 = vld [vmem:[%s1 + $0x518] sm:$0xff]
      %v391 = vld [vmem:[%s1 + $0x520] sm:$0xff]
      %v392 = vld [vmem:[%s1 + $0x528] sm:$0xff]
      %v393 = vld [vmem:[%s1 + $0x530] sm:$0xff]
      %v394 = vld [vmem:[%s1 + $0x538] sm:$0xff]
      %v395 = vld [vmem:[%s1 + $0x540] sm:$0xff]
      %v396 = vld [vmem:[%s1 + $0x548] sm:$0xff]
      %v397 = vld [vmem:[%s1 + $0x550] sm:$0xff]
      %v398 = vld [vmem:[%s1 + $0x558] sm:$0xff]
      %v399 = vld [vmem:[%s1 + $0x560] sm:$0xff]
      %v400 = vld [vmem:[%s1 + $0x568] sm:$0xff]
      %v401 = vld [vmem:[%s1 + $0x570] sm:$0xff]
      %v402 = vld [vmem:[%s1 + $0x578] sm:$0xff]
      %v403 = vld [vmem:[%s1 + $0x580] sm:$0xff]
      %v404 = vld [vmem:[%s1 + $0x588] sm:$0xff]
      %v405 = vld [vmem:[%s1 + $0x590] sm:$0xff]
      %v406 = vld [vmem:[%s1 + $0x598] sm:$0xff]
      %v407 = vld [vmem:[%s1 + $0x5a0] sm:$0xff]
      %v408 = vld [vmem:[%s1 + $0x5a8] sm:$0xff]
      %v409 = vld [vmem:[%s1 + $0x5b0] sm:$0xff]
      %v410 = vld [vmem:[%s1 + $0x5b8] sm:$0xff]
      %v411 = vld [vmem:[%s1 + $0x5c0] sm:$0xff]
      %v412 = vld [vmem:[%s1 + $0x5c8] sm:$0xff]
      %v413 = vld [vmem:[%s1 + $0x5d0] sm:$0xff]
      %v414 = vld [vmem:[%s1 + $0x5d8] sm:$0xff]
      %v415 = vld [vmem:[%s1 + $0x5e0] sm:$0xff]
      %v416 = vld [vmem:[%s1 + $0x5e8] sm:$0xff]
      %v417 = vld [vmem:[%s1 + $0x5f0] sm:$0xff]
      %v418 = vld [vmem:[%s1 + $0x5f8] sm:$0xff]
      %v419 = vld [vmem:[%s1 + $0x600] sm:$0xff]
      %v420 = vld [vmem:[%s1 + $0x608] sm:$0xff]
      %v421 = vld [vmem:[%s1 + $0x610] sm:$0xff]
      %v422 = vld [vmem:[%s1 + $0x618] sm:$0xff]
      %v423 = vld [vmem:[%s1 + $0x620] sm:$0xff]
      %v424 = vld [vmem:[%s1 + $0x628] sm:$0xff]
      %v425 = vld [vmem:[%s1 + $0x630] sm:$0xff]
      %v426 = vld [vmem:[%s1 + $0x638] sm:$0xff]
      %v427 = vld [vmem:[%s1 + $0x640] sm:$0xff]
      %v428 = vld [vmem:[%s1 + $0x648] sm:$0xff]
      %v429 = vld [vmem:[%s1 + $0x650] sm:$0xff]
      %v430 = vld [vmem:[%s1 + $0x658] sm:$0xff]
      %v431 = vld [vmem:[%s1 + $0x660] sm:$0xff]
      %v432 = vld [vmem:[%s1 + $0x668] sm:$0xff]
      %v433 = vld [vmem:[%s1 + $0x670] sm:$0xff]
      %v434 = vld [vmem:[%s1 + $0x678] sm:$0xff]
      %v435 = vld [vmem:[%s1 + $0x680] sm:$0xff]
      %v436 = vld [vmem:[%s1 + $0x688] sm:$0xff]
      %v437 = vld [vmem:[%s1 + $0x690] sm:$0xff]
      %v438 = vld [vmem:[%s1 + $0x698] sm:$0xff]
      %v439 = vld [vmem:[%s1 + $0x6a0] sm:$0xff]
      %v440 = vld [vmem:[%s1 + $0x6a8] sm:$0xff]
      %v441 = vld [vmem:[%s1 + $0x6b0] sm:$0xff]
      %v442 = vld [vmem:[%s1 + $0x6b8] sm:$0xff]
      %v443 = vld [vmem:[%s1 + $0x6c0] sm:$0xff]
      %v444 = vld [vmem:[%s1 + $0x6c8] sm:$0xff]
      %v445 = vld [vmem:[%s1 + $0x6d0] sm:$0xff]
      %v446 = vld [vmem:[%s1 + $0x6d8] sm:$0xff]
      %v447 = vld [vmem:[%s1 + $0x6e0] sm:$0xff]
      %v448 = vld [vmem:[%s1 + $0x6e8] sm:$0xff]
      %v449 = vld [vmem:[%s1 + $0x6f0] sm:$0xff]
      %v450 = vld [vmem:[%s1 + $0x6f8] sm:$0xff]
      %v451 = vld [vmem:[%s1 + $0x700] sm:$0xff]
      %v452 = vld [vmem:[%s1 + $0x708] sm:$0xff]
      %v453 = vld [vmem:[%s1 + $0x710] sm:$0xff]
      %v454 = vld [vmem:[%s1 + $0x718] sm:$0xff]
      %v455 = vld [vmem:[%s1 + $0x720] sm:$0xff]
      %v456 = vld [vmem:[%s1 + $0x728] sm:$0xff]
      %v457 = vld [vmem:[%s1 + $0x730] sm:$0xff]
      %v458 = vld [vmem:[%s1 + $0x738] sm:$0xff]
      %v459 = vld [vmem:[%s1 + $0x740] sm:$0xff]
      %v460 = vld [vmem:[%s1 + $0x748] sm:$0xff]
      %v461 = vld [vmem:[%s1 + $0x750] sm:$0xff]
      %v462 = vld [vmem:[%s1 + $0x758] sm:$0xff]
      %v463 = vld [vmem:[%s1 + $0x760] sm:$0xff]
      %v464 = vld [vmem:[%s1 + $0x768] sm:$0xff]
      %v465 = vld [vmem:[%s1 + $0x770] sm:$0xff]
      %v466 = vld [vmem:[%s1 + $0x778] sm:$0xff]
      %v467 = vld [vmem:[%s1 + $0x780] sm:$0xff]
      %v468 = vld [vmem:[%s1 + $0x788] sm:$0xff]
      %v469 = vld [vmem:[%s1 + $0x790] sm:$0xff]
      %v470 = vld [vmem:[%s1 + $0x798] sm:$0xff]
      %v471 = vld [vmem:[%s1 + $0x7a0] sm:$0xff]
      %v472 = vld [vmem:[%s1 + $0x7a8] sm:$0xff]
      %v473 = vld [vmem:[%s1 + $0x7b0] sm:$0xff]
      %v474 = vld [vmem:[%s1 + $0x7b8] sm:$0xff]
      %v475 = vld [vmem:[%s1 + $0x7c0] sm:$0xff]
      %v476 = vld [vmem:[%s1 + $0x7c8] sm:$0xff]
      %v477 = vld [vmem:[%s1 + $0x7d0] sm:$0xff]
      %v478 = vld [vmem:[%s1 + $0x7d8] sm:$0xff]
      %v479 = vld [vmem:[%s1 + $0x7e0] sm:$0xff]
      %v480 = vld [vmem:[%s1 + $0x7e8] sm:$0xff]
      %v481 = vld [vmem:[%s1 + $0x7f0] sm:$0xff]
      %v482 = vld [vmem:[%s1 + $0x7f8] sm:$0xff]
      %v483 = vld [vmem:[%s1 + $0x800] sm:$0xff]
      %v484 = vld [vmem:[%s1 + $0x808] sm:$0xff]
      %v485 = vld [vmem:[%s1 + $0x810] sm:$0xff]
      %v486 = vld [vmem:[%s1 + $0x818] sm:$0xff]
      %v487 = vld [vmem:[%s1 + $0x820] sm:$0xff]
      %v488 = vld [vmem:[%s1 + $0x828] sm:$0xff]
      %v489 = vld [vmem:[%s1 + $0x830] sm:$0xff]
      %v490 = vld [vmem:[%s1 + $0x838] sm:$0xff]
      %v491 = vld [vmem:[%s1 + $0x840] sm:$0xff]
      %v492 = vld [vmem:[%s1 + $0x848] sm:$0xff]
      %v493 = vld [vmem:[%s1 + $0x850] sm:$0xff]
      %v494 = vld [vmem:[%s1 + $0x858] sm:$0xff]
      %v495 = vld [vmem:[%s1 + $0x860] sm:$0xff]
      %v496 = vld [vmem:[%s1 + $0x868] sm:$0xff]
      %v497 = vld [vmem:[%s1 + $0x870] sm:$0xff]
      %v498 = vld [vmem:[%s1 + $0x878] sm:$0xff]
      %v499 = vld [vmem:[%s1 + $0x880] sm:$0xff]
      %v500 = vld [vmem:[%s1 + $0x888] sm:$0xff]
      %v501 = vld [vmem:[%s1 + $0x890] sm:$0xff]
      %v502 = vld [vmem:[%s1 + $0x898] sm:$0xff]
      %v503 = vld [vmem:[%s1 + $0x8a0] sm:$0xff]
      %v504 = vld [vmem:[%s1 + $0x8a8] sm:$0xff]
      %v505 = vld [vmem:[%s1 + $0x8b0] sm:$0xff]
      %v506 = vld [vmem:[%s1 + $0x8b8] sm:$0xff]
      %v507 = vld [vmem:[%s1 + $0x8c0] sm:$0xff]
      %v508 = vld [vmem:[%s1 + $0x8c8] sm:$0xff]
      %v509 = vld [vmem:[%s1 + $0x8d0] sm:$0xff]
      %v510 = vld [vmem:[%s1 + $0x8d8] sm:$0xff]
      %v511 = vld [vmem:[%s1 + $0x8e0] sm:$0xff]
      %v512 = vld [vmem:[%s1 + $0x8e8] sm:$0xff]
      %v513 = vld [vmem:[%s1 + $0x8f0] sm:$0xff]
      %v514 = vld [vmem:[%s1 + $0x8f8] sm:$0xff]
      %v515 = vld [vmem:[%s2] sm:$0xff]
      %v517 = vlaneseq
      %v518 = vshrl.u32 %v517, 7
      %v519 = vsub.s32 0, %v518
      %v520 = vrot.slane %v515, %v519
      %v521 = vlaneseq
      %v522 = vshrl.u32 %v521, 7
      %v523 = vsub.s32 1, %v522
      %v524 = vrot.slane %v515, %v523
      %v525 = vlaneseq
      %v526 = vshrl.u32 %v525, 7
      %v527 = vsub.s32 2, %v526
      %v528 = vrot.slane %v515, %v527
      %v529 = vlaneseq
      %v530 = vshrl.u32 %v529, 7
      %v531 = vsub.s32 3, %v530
      %v532 = vrot.slane %v515, %v531
      %v533 = vlaneseq
      %v534 = vshrl.u32 %v533, 7
      %v535 = vsub.s32 4, %v534
      %v536 = vrot.slane %v515, %v535
      %v537 = vlaneseq
      %v538 = vshrl.u32 %v537, 7
      %v539 = vsub.s32 5, %v538
      %v540 = vrot.slane %v515, %v539
      %v541 = vlaneseq
      %v542 = vshrl.u32 %v541, 7
      %v543 = vsub.s32 6, %v542
      %v544 = vrot.slane %v515, %v543
      %v545 = vlaneseq
      %v546 = vshrl.u32 %v545, 7
      %v547 = vsub.s32 7, %v546
      %v548 = vrot.slane %v515, %v547
      %v560 = vunpack.c.l.b16 %v224
      %v561 = vunpack.c.h.b16 %v224
      %v562 = vunpack.c.l.b16 %v225
      %v563 = vunpack.c.h.b16 %v225
      %v564 = vunpack.c.l.b16 %v226
      %v565 = vpack.c.b16 %v560, %v560
      %v566 = vpack.c.b16 %v561, %v561
      %v567 = vpack.c.b16 %v562, %v562
      %v568 = vpack.c.b16 %v563, %v563
      %v569 = vpack.c.b16 %v564, %v564
      %v862 = vunpack.c.l.b16 %v227
      %v863 = vunpack.c.h.b16 %v227
      %v864 = vunpack.c.l.b16 %v228
      %v865 = vunpack.c.h.b16 %v228
      %v866 = vunpack.c.l.b16 %v229
      %v867 = vunpack.c.h.b16 %v229
      %v868 = vunpack.c.l.b16 %v230
      %v869 = vunpack.c.h.b16 %v230
      %v870 = vunpack.c.l.b16 %v231
      %v871 = vunpack.c.h.b16 %v231
      %v872 = vunpack.c.l.b16 %v232
      %v873 = vunpack.c.h.b16 %v232
      %v874 = vunpack.c.l.b16 %v233
      %v875 = vunpack.c.h.b16 %v233
      %v876 = vunpack.c.l.b16 %v234
      %v877 = vunpack.c.h.b16 %v234
      %v878 = vunpack.c.l.b16 %v235
      %v879 = vunpack.c.h.b16 %v235
      %v880 = vunpack.c.l.b16 %v236
      %v881 = vunpack.c.h.b16 %v236
      %v882 = vunpack.c.l.b16 %v237
      %v883 = vunpack.c.h.b16 %v237
      %v884 = vunpack.c.l.b16 %v238
      %v885 = vunpack.c.h.b16 %v238
      %v886 = vunpack.c.l.b16 %v239
      %v887 = vunpack.c.h.b16 %v239
      %v888 = vunpack.c.l.b16 %v240
      %v889 = vunpack.c.h.b16 %v240
      %v890 = vunpack.c.l.b16 %v241
      %v891 = vunpack.c.h.b16 %v241
      %v892 = vunpack.c.l.b16 %v242
      %v893 = vunpack.c.h.b16 %v242
      %v894 = vunpack.c.l.b16 %v243
      %v895 = vunpack.c.h.b16 %v243
      %v896 = vunpack.c.l.b16 %v244
      %v897 = vunpack.c.h.b16 %v244
      %v898 = vunpack.c.l.b16 %v245
      %v899 = vunpack.c.h.b16 %v245
      %v900 = vunpack.c.l.b16 %v246
      %v901 = vunpack.c.h.b16 %v246
      %v902 = vunpack.c.l.b16 %v247
      %v903 = vunpack.c.h.b16 %v247
      %v904 = vunpack.c.l.b16 %v248
      %v905 = vunpack.c.h.b16 %v248
      %v906 = vunpack.c.l.b16 %v249
      %v907 = vunpack.c.h.b16 %v249
      %v908 = vunpack.c.l.b16 %v250
      %v909 = vunpack.c.h.b16 %v250
      %v910 = vunpack.c.l.b16 %v251
      %v911 = vunpack.c.h.b16 %v251
      %v912 = vunpack.c.l.b16 %v252
      %v913 = vunpack.c.h.b16 %v252
      %v914 = vunpack.c.l.b16 %v253
      %v915 = vunpack.c.h.b16 %v253
      %v916 = vunpack.c.l.b16 %v254
      %v917 = vunpack.c.h.b16 %v254
      %v918 = vunpack.c.l.b16 %v255
      %v919 = vunpack.c.h.b16 %v255
      %v920 = vunpack.c.l.b16 %v256
      %v921 = vunpack.c.h.b16 %v256
      %v922 = vunpack.c.l.b16 %v257
      %v923 = vunpack.c.h.b16 %v257
      %v924 = vunpack.c.l.b16 %v258
      %v925 = vunpack.c.h.b16 %v258
      %v926 = vunpack.c.l.b16 %v259
      %v927 = vunpack.c.h.b16 %v259
      %v928 = vunpack.c.l.b16 %v260
      %v929 = vunpack.c.h.b16 %v260
      %v930 = vunpack.c.l.b16 %v261
      %v931 = vunpack.c.h.b16 %v261
      %v932 = vunpack.c.l.b16 %v262
      %v933 = vunpack.c.h.b16 %v262
      %v934 = vunpack.c.l.b16 %v263
      %v935 = vunpack.c.h.b16 %v263
      %v936 = vunpack.c.l.b16 %v264
      %v937 = vunpack.c.h.b16 %v264
      %v938 = vunpack.c.l.b16 %v265
      %v939 = vunpack.c.h.b16 %v265
      %v940 = vunpack.c.l.b16 %v266
      %v941 = vunpack.c.h.b16 %v266
      %v942 = vunpack.c.l.b16 %v267
      %v943 = vunpack.c.h.b16 %v267
      %v944 = vunpack.c.l.b16 %v268
      %v945 = vunpack.c.h.b16 %v268
      %v946 = vunpack.c.l.b16 %v269
      %v947 = vunpack.c.h.b16 %v269
      %v948 = vunpack.c.l.b16 %v270
      %v949 = vunpack.c.h.b16 %v270
      %v950 = vunpack.c.l.b16 %v271
      %v951 = vunpack.c.h.b16 %v271
      %v952 = vunpack.c.l.b16 %v272
      %v953 = vunpack.c.h.b16 %v272
      %v954 = vunpack.c.l.b16 %v273
      %v955 = vunpack.c.h.b16 %v273
      %v956 = vunpack.c.l.b16 %v274
      %v957 = vunpack.c.h.b16 %v274
      %v958 = vunpack.c.l.b16 %v275
      %v959 = vunpack.c.h.b16 %v275
      %v960 = vunpack.c.l.b16 %v276
      %v961 = vunpack.c.h.b16 %v276
      %v962 = vunpack.c.l.b16 %v277
      %v963 = vunpack.c.h.b16 %v277
      %v964 = vunpack.c.l.b16 %v278
      %v965 = vunpack.c.h.b16 %v278
      %v966 = vunpack.c.l.b16 %v279
      %v967 = vunpack.c.h.b16 %v279
      %v968 = vunpack.c.l.b16 %v280
      %v969 = vunpack.c.h.b16 %v280
      %v970 = vunpack.c.l.b16 %v281
      %v971 = vunpack.c.h.b16 %v281
      %v972 = vunpack.c.l.b16 %v282
      %v973 = vunpack.c.h.b16 %v282
      %v974 = vunpack.c.l.b16 %v283
      %v975 = vunpack.c.h.b16 %v283
      %v976 = vunpack.c.l.b16 %v284
      %v977 = vunpack.c.h.b16 %v284
      %v978 = vunpack.c.l.b16 %v285
      %v979 = vunpack.c.h.b16 %v285
      %v980 = vunpack.c.l.b16 %v286
      %v981 = vunpack.c.h.b16 %v286
      %v982 = vunpack.c.l.b16 %v287
      %v983 = vunpack.c.h.b16 %v287
      %v984 = vunpack.c.l.b16 %v288
      %v985 = vunpack.c.h.b16 %v288
      %v986 = vunpack.c.l.b16 %v289
      %v987 = vunpack.c.h.b16 %v289
      %v988 = vunpack.c.l.b16 %v290
      %v989 = vunpack.c.h.b16 %v290
      %v990 = vunpack.c.l.b16 %v291
      %v991 = vunpack.c.h.b16 %v291
      %v992 = vunpack.c.l.b16 %v292
      %v993 = vunpack.c.h.b16 %v292
      %v994 = vunpack.c.l.b16 %v293
      %v995 = vunpack.c.h.b16 %v293
      %v996 = vunpack.c.l.b16 %v294
      %v997 = vunpack.c.h.b16 %v294
      %v998 = vunpack.c.l.b16 %v295
      %v999 = vunpack.c.h.b16 %v295
      %v1000 = vunpack.c.l.b16 %v296
      %v1001 = vunpack.c.h.b16 %v296
      %v1002 = vunpack.c.l.b16 %v297
      %v1003 = vunpack.c.h.b16 %v297
      %v1004 = vunpack.c.l.b16 %v298
      %v1005 = vunpack.c.h.b16 %v298
      %v1006 = vunpack.c.l.b16 %v299
      %v1007 = vunpack.c.h.b16 %v299
      %v1008 = vunpack.c.l.b16 %v300
      %v1009 = vunpack.c.h.b16 %v300
      %v1010 = vunpack.c.l.b16 %v301
      %v1011 = vunpack.c.h.b16 %v301
      %v1012 = vunpack.c.l.b16 %v302
      %v1013 = vunpack.c.h.b16 %v302
      %v1014 = vunpack.c.l.b16 %v303
      %v1015 = vunpack.c.h.b16 %v303
      %v1016 = vunpack.c.l.b16 %v304
      %v1017 = vunpack.c.h.b16 %v304
      %v1018 = vunpack.c.l.b16 %v305
      %v1019 = vunpack.c.h.b16 %v305
      %v1020 = vunpack.c.l.b16 %v306
      %v1021 = vunpack.c.h.b16 %v306
      %v1022 = vunpack.c.l.b16 %v307
      %v1023 = vunpack.c.h.b16 %v307
      %v1024 = vunpack.c.l.b16 %v308
      %v1025 = vunpack.c.h.b16 %v308
      %v1026 = vunpack.c.l.b16 %v309
      %v1027 = vunpack.c.h.b16 %v309
      %v1028 = vunpack.c.l.b16 %v310
      %v1029 = vunpack.c.h.b16 %v310
      %v1030 = vunpack.c.l.b16 %v311
      %v1031 = vunpack.c.h.b16 %v311
      %v1032 = vunpack.c.l.b16 %v312
      %v1033 = vunpack.c.h.b16 %v312
      %v1034 = vunpack.c.l.b16 %v313
      %v1035 = vunpack.c.h.b16 %v313
      %v1036 = vunpack.c.l.b16 %v314
      %v1037 = vunpack.c.h.b16 %v314
      %v1038 = vunpack.c.l.b16 %v315
      %v1039 = vunpack.c.h.b16 %v315
      %v1040 = vunpack.c.l.b16 %v316
      %v1041 = vunpack.c.h.b16 %v316
      %v1042 = vunpack.c.l.b16 %v317
      %v1043 = vunpack.c.h.b16 %v317
      %v1044 = vunpack.c.l.b16 %v318
      %v1045 = vunpack.c.h.b16 %v318
      %v1046 = vunpack.c.l.b16 %v319
      %v1047 = vunpack.c.h.b16 %v319
      %v1048 = vunpack.c.l.b16 %v320
      %v1049 = vunpack.c.h.b16 %v320
      %v1050 = vunpack.c.l.b16 %v321
      %v1051 = vunpack.c.h.b16 %v321
      %v1052 = vunpack.c.l.b16 %v322
      %v1053 = vunpack.c.h.b16 %v322
      %v1054 = vunpack.c.l.b16 %v323
      %v1055 = vunpack.c.h.b16 %v323
      %v1056 = vunpack.c.l.b16 %v324
      %v1057 = vunpack.c.h.b16 %v324
      %v1058 = vunpack.c.l.b16 %v325
      %v1059 = vunpack.c.h.b16 %v325
      %v1060 = vunpack.c.l.b16 %v326
      %v1061 = vunpack.c.h.b16 %v326
      %v1062 = vunpack.c.l.b16 %v327
      %v1063 = vunpack.c.h.b16 %v327
      %v1064 = vunpack.c.l.b16 %v328
      %v1065 = vunpack.c.h.b16 %v328
      %v1066 = vunpack.c.l.b16 %v329
      %v1067 = vunpack.c.h.b16 %v329
      %v1068 = vunpack.c.l.b16 %v330
      %v1069 = vunpack.c.h.b16 %v330
      %v1070 = vunpack.c.l.b16 %v331
      %v1071 = vunpack.c.h.b16 %v331
      %v1072 = vunpack.c.l.b16 %v332
      %v1073 = vunpack.c.h.b16 %v332
      %v1074 = vunpack.c.l.b16 %v333
      %v1075 = vunpack.c.h.b16 %v333
      %v1076 = vunpack.c.l.b16 %v334
      %v1077 = vunpack.c.h.b16 %v334
      %v1078 = vunpack.c.l.b16 %v335
      %v1079 = vunpack.c.h.b16 %v335
      %v1080 = vunpack.c.l.b16 %v336
      %v1081 = vunpack.c.h.b16 %v336
      %v1082 = vunpack.c.l.b16 %v337
      %v1083 = vunpack.c.h.b16 %v337
      %v1084 = vunpack.c.l.b16 %v338
      %v1085 = vunpack.c.h.b16 %v338
      %v1086 = vunpack.c.l.b16 %v339
      %v1087 = vunpack.c.h.b16 %v339
      %v1088 = vunpack.c.l.b16 %v340
      %v1089 = vunpack.c.h.b16 %v340
      %v1090 = vunpack.c.l.b16 %v341
      %v1091 = vunpack.c.h.b16 %v341
      %v1092 = vunpack.c.l.b16 %v342
      %v1093 = vunpack.c.h.b16 %v342
      %v1094 = vunpack.c.l.b16 %v343
      %v1095 = vunpack.c.h.b16 %v343
      %v1096 = vunpack.c.l.b16 %v344
      %v1097 = vunpack.c.h.b16 %v344
      %v1098 = vunpack.c.l.b16 %v345
      %v1099 = vunpack.c.h.b16 %v345
      %v1100 = vunpack.c.l.b16 %v346
      %v1101 = vunpack.c.h.b16 %v346
      %v1102 = vunpack.c.l.b16 %v347
      %v1103 = vunpack.c.h.b16 %v347
      %v1104 = vunpack.c.l.b16 %v348
      %v1105 = vunpack.c.h.b16 %v348
      %v1106 = vunpack.c.l.b16 %v349
      %v1107 = vunpack.c.h.b16 %v349
      %v1108 = vunpack.c.l.b16 %v350
      %v1109 = vunpack.c.h.b16 %v350
      %v1110 = vunpack.c.l.b16 %v351
      %v1111 = vunpack.c.h.b16 %v351
      %v1112 = vunpack.c.l.b16 %v352
      %v1113 = vunpack.c.h.b16 %v352
      %v1114 = vunpack.c.l.b16 %v353
      %v1115 = vunpack.c.h.b16 %v353
      %v1116 = vunpack.c.l.b16 %v354
      %v1117 = vunpack.c.h.b16 %v354
      %v1118 = vunpack.c.l.b16 %v355
      %v1119 = vunpack.c.h.b16 %v355
      %v1120 = vunpack.c.l.b16 %v356
      %v1121 = vunpack.c.h.b16 %v356
      %v1122 = vunpack.c.l.b16 %v357
      %v1123 = vunpack.c.h.b16 %v357
      %v1124 = vunpack.c.l.b16 %v358
      %v1125 = vunpack.c.h.b16 %v358
      %v1126 = vunpack.c.l.b16 %v359
      %v1127 = vunpack.c.h.b16 %v359
      %v1128 = vunpack.c.l.b16 %v360
      %v1129 = vunpack.c.h.b16 %v360
      %v1130 = vunpack.c.l.b16 %v361
      %v1131 = vunpack.c.h.b16 %v361
      %v1132 = vunpack.c.l.b16 %v362
      %v1133 = vunpack.c.h.b16 %v362
      %v1134 = vunpack.c.l.b16 %v363
      %v1135 = vunpack.c.h.b16 %v363
      %v1136 = vunpack.c.l.b16 %v364
      %v1137 = vunpack.c.h.b16 %v364
      %v1138 = vunpack.c.l.b16 %v365
      %v1139 = vunpack.c.h.b16 %v365
      %v1140 = vunpack.c.l.b16 %v366
      %v1141 = vunpack.c.h.b16 %v366
      %v1142 = vunpack.c.l.b16 %v367
      %v1143 = vunpack.c.h.b16 %v367
      %v1144 = vunpack.c.l.b16 %v368
      %v1145 = vunpack.c.h.b16 %v368
      %v1146 = vunpack.c.l.b16 %v369
      %v1147 = vunpack.c.h.b16 %v369
      %v1148 = vunpack.c.l.b16 %v370
      %v1149 = vunpack.c.h.b16 %v370
      %v1150 = vunpack.c.l.b16 %v371
      %v1151 = vunpack.c.h.b16 %v371
      %v1152 = vunpack.c.l.b16 %v372
      %v1153 = vunpack.c.h.b16 %v372
      %v1154 = vunpack.c.l.b16 %v373
      %v1155 = vunpack.c.h.b16 %v373
      %v1156 = vunpack.c.l.b16 %v374
      %v1157 = vunpack.c.h.b16 %v374
      %v1158 = vunpack.c.l.b16 %v375
      %v1159 = vunpack.c.h.b16 %v375
      %v1160 = vunpack.c.l.b16 %v376
      %v1161 = vunpack.c.h.b16 %v376
      %v1162 = vunpack.c.l.b16 %v377
      %v1163 = vunpack.c.h.b16 %v377
      %v1164 = vunpack.c.l.b16 %v378
      %v1165 = vunpack.c.h.b16 %v378
      %v1166 = vunpack.c.l.b16 %v379
      %v1167 = vunpack.c.h.b16 %v379
      %v1168 = vunpack.c.l.b16 %v380
      %v1169 = vunpack.c.h.b16 %v380
      %v1170 = vunpack.c.l.b16 %v381
      %v1171 = vunpack.c.h.b16 %v381
      %v1172 = vunpack.c.l.b16 %v382
      %v1173 = vunpack.c.h.b16 %v382
      %v1174 = vunpack.c.l.b16 %v383
      %v1175 = vunpack.c.h.b16 %v383
      %v1176 = vunpack.c.l.b16 %v384
      %v1177 = vunpack.c.h.b16 %v384
      %v1178 = vunpack.c.l.b16 %v385
      %v1179 = vunpack.c.h.b16 %v385
      %v1180 = vunpack.c.l.b16 %v386
      %v1181 = vunpack.c.h.b16 %v386
      %v1182 = vunpack.c.l.b16 %v387
      %v1183 = vunpack.c.h.b16 %v387
      %v1184 = vunpack.c.l.b16 %v388
      %v1185 = vunpack.c.h.b16 %v388
      %v1186 = vunpack.c.l.b16 %v389
      %v1187 = vunpack.c.h.b16 %v389
      %v1188 = vunpack.c.l.b16 %v390
      %v1189 = vunpack.c.h.b16 %v390
      %v1190 = vunpack.c.l.b16 %v391
      %v1191 = vunpack.c.h.b16 %v391
      %v1192 = vunpack.c.l.b16 %v392
      %v1193 = vunpack.c.h.b16 %v392
      %v1194 = vunpack.c.l.b16 %v393
      %v1195 = vunpack.c.h.b16 %v393
      %v1196 = vunpack.c.l.b16 %v394
      %v1197 = vunpack.c.h.b16 %v394
      %v1198 = vunpack.c.l.b16 %v395
      %v1199 = vunpack.c.h.b16 %v395
      %v1200 = vunpack.c.l.b16 %v396
      %v1201 = vunpack.c.h.b16 %v396
      %v1202 = vunpack.c.l.b16 %v397
      %v1203 = vunpack.c.h.b16 %v397
      %v1204 = vunpack.c.l.b16 %v398
      %v1205 = vunpack.c.h.b16 %v398
      %v1206 = vunpack.c.l.b16 %v399
      %v1207 = vunpack.c.h.b16 %v399
      %v1208 = vunpack.c.l.b16 %v400
      %v1209 = vunpack.c.h.b16 %v400
      %v1210 = vunpack.c.l.b16 %v401
      %v1211 = vunpack.c.h.b16 %v401
      %v1212 = vunpack.c.l.b16 %v402
      %v1213 = vunpack.c.h.b16 %v402
      %v1214 = vunpack.c.l.b16 %v403
      %v1215 = vunpack.c.h.b16 %v403
      %v1216 = vunpack.c.l.b16 %v404
      %v1217 = vunpack.c.h.b16 %v404
      %v1218 = vunpack.c.l.b16 %v405
      %v1219 = vunpack.c.h.b16 %v405
      %v1220 = vunpack.c.l.b16 %v406
      %v1221 = vunpack.c.h.b16 %v406
      %v1222 = vunpack.c.l.b16 %v407
      %v1223 = vunpack.c.h.b16 %v407
      %v1224 = vunpack.c.l.b16 %v408
      %v1225 = vunpack.c.h.b16 %v408
      %v1226 = vunpack.c.l.b16 %v409
      %v1227 = vunpack.c.h.b16 %v409
      %v1228 = vunpack.c.l.b16 %v410
      %v1229 = vunpack.c.h.b16 %v410
      %v1230 = vunpack.c.l.b16 %v411
      %v1231 = vunpack.c.h.b16 %v411
      %v1232 = vunpack.c.l.b16 %v412
      %v1233 = vunpack.c.h.b16 %v412
      %v1234 = vunpack.c.l.b16 %v413
      %v1235 = vunpack.c.h.b16 %v413
      %v1236 = vunpack.c.l.b16 %v414
      %v1237 = vunpack.c.h.b16 %v414
      %v1238 = vunpack.c.l.b16 %v415
      %v1239 = vunpack.c.h.b16 %v415
      %v1240 = vunpack.c.l.b16 %v416
      %v1241 = vunpack.c.h.b16 %v416
      %v1242 = vunpack.c.l.b16 %v417
      %v1243 = vunpack.c.h.b16 %v417
      %v1244 = vunpack.c.l.b16 %v418
      %v1245 = vunpack.c.h.b16 %v418
      %v1246 = vunpack.c.l.b16 %v419
      %v1247 = vunpack.c.h.b16 %v419
      %v1248 = vunpack.c.l.b16 %v420
      %v1249 = vunpack.c.h.b16 %v420
      %v1250 = vunpack.c.l.b16 %v421
      %v1251 = vunpack.c.h.b16 %v421
      %v1252 = vunpack.c.l.b16 %v422
      %v1253 = vunpack.c.h.b16 %v422
      %v1254 = vunpack.c.l.b16 %v423
      %v1255 = vunpack.c.h.b16 %v423
      %v1256 = vunpack.c.l.b16 %v424
      %v1257 = vunpack.c.h.b16 %v424
      %v1258 = vunpack.c.l.b16 %v425
      %v1259 = vunpack.c.h.b16 %v425
      %v1260 = vunpack.c.l.b16 %v426
      %v1261 = vunpack.c.h.b16 %v426
      %v1262 = vunpack.c.l.b16 %v427
      %v1263 = vunpack.c.h.b16 %v427
      %v1264 = vunpack.c.l.b16 %v428
      %v1265 = vunpack.c.h.b16 %v428
      %v1266 = vunpack.c.l.b16 %v429
      %v1267 = vunpack.c.h.b16 %v429
      %v1268 = vunpack.c.l.b16 %v430
      %v1269 = vunpack.c.h.b16 %v430
      %v1270 = vunpack.c.l.b16 %v431
      %v1271 = vunpack.c.h.b16 %v431
      %v1272 = vunpack.c.l.b16 %v432
      %v1273 = vunpack.c.h.b16 %v432
      %v1274 = vunpack.c.l.b16 %v433
      %v1275 = vunpack.c.h.b16 %v433
      %v1276 = vunpack.c.l.b16 %v434
      %v1277 = vunpack.c.h.b16 %v434
      %v1278 = vunpack.c.l.b16 %v435
      %v1279 = vunpack.c.h.b16 %v435
      %v1280 = vunpack.c.l.b16 %v436
      %v1281 = vunpack.c.h.b16 %v436
      %v1282 = vunpack.c.l.b16 %v437
      %v1283 = vunpack.c.h.b16 %v437
      %v1284 = vunpack.c.l.b16 %v438
      %v1285 = vunpack.c.h.b16 %v438
      %v1286 = vunpack.c.l.b16 %v439
      %v1287 = vunpack.c.h.b16 %v439
      %v1288 = vunpack.c.l.b16 %v440
      %v1289 = vunpack.c.h.b16 %v440
      %v1290 = vunpack.c.l.b16 %v441
      %v1291 = vunpack.c.h.b16 %v441
      %v1292 = vunpack.c.l.b16 %v442
      %v1293 = vunpack.c.h.b16 %v442
      %v1294 = vunpack.c.l.b16 %v443
      %v1295 = vunpack.c.h.b16 %v443
      %v1296 = vunpack.c.l.b16 %v444
      %v1297 = vunpack.c.h.b16 %v444
      %v1298 = vunpack.c.l.b16 %v445
      %v1299 = vunpack.c.h.b16 %v445
      %v1300 = vunpack.c.l.b16 %v446
      %v1301 = vunpack.c.h.b16 %v446
      %v1302 = vunpack.c.l.b16 %v447
      %v1303 = vunpack.c.h.b16 %v447
      %v1304 = vunpack.c.l.b16 %v448
      %v1305 = vunpack.c.h.b16 %v448
      %v1306 = vunpack.c.l.b16 %v449
      %v1307 = vunpack.c.h.b16 %v449
      %v1308 = vunpack.c.l.b16 %v450
      %v1309 = vunpack.c.h.b16 %v450
      %v1310 = vunpack.c.l.b16 %v451
      %v1311 = vunpack.c.h.b16 %v451
      %v1312 = vunpack.c.l.b16 %v452
      %v1313 = vunpack.c.h.b16 %v452
      %v1314 = vunpack.c.l.b16 %v453
      %v1315 = vunpack.c.h.b16 %v453
      %v1316 = vunpack.c.l.b16 %v454
      %v1317 = vunpack.c.h.b16 %v454
      %v1318 = vunpack.c.l.b16 %v455
      %v1319 = vunpack.c.h.b16 %v455
      %v1320 = vunpack.c.l.b16 %v456
      %v1321 = vunpack.c.h.b16 %v456
      %v1322 = vunpack.c.l.b16 %v457
      %v1323 = vunpack.c.h.b16 %v457
      %v1324 = vunpack.c.l.b16 %v458
      %v1325 = vunpack.c.h.b16 %v458
      %v1326 = vunpack.c.l.b16 %v459
      %v1327 = vunpack.c.h.b16 %v459
      %v1328 = vunpack.c.l.b16 %v460
      %v1329 = vunpack.c.h.b16 %v460
      %v1330 = vunpack.c.l.b16 %v461
      %v1331 = vunpack.c.h.b16 %v461
      %v1332 = vunpack.c.l.b16 %v462
      %v1333 = vunpack.c.h.b16 %v462
      %v1334 = vunpack.c.l.b16 %v463
      %v1335 = vunpack.c.h.b16 %v463
      %v1336 = vunpack.c.l.b16 %v464
      %v1337 = vunpack.c.h.b16 %v464
      %v1338 = vunpack.c.l.b16 %v465
      %v1339 = vunpack.c.h.b16 %v465
      %v1340 = vunpack.c.l.b16 %v466
      %v1341 = vunpack.c.h.b16 %v466
      %v1342 = vunpack.c.l.b16 %v467
      %v1343 = vunpack.c.h.b16 %v467
      %v1344 = vunpack.c.l.b16 %v468
      %v1345 = vunpack.c.h.b16 %v468
      %v1346 = vunpack.c.l.b16 %v469
      %v1347 = vunpack.c.h.b16 %v469
      %v1348 = vunpack.c.l.b16 %v470
      %v1349 = vunpack.c.h.b16 %v470
      %v1350 = vunpack.c.l.b16 %v471
      %v1351 = vunpack.c.h.b16 %v471
      %v1352 = vunpack.c.l.b16 %v472
      %v1353 = vunpack.c.h.b16 %v472
      %v1354 = vunpack.c.l.b16 %v473
      %v1355 = vunpack.c.h.b16 %v473
      %v1356 = vunpack.c.l.b16 %v474
      %v1357 = vunpack.c.h.b16 %v474
      %v1358 = vunpack.c.l.b16 %v475
      %v1359 = vunpack.c.h.b16 %v475
      %v1360 = vunpack.c.l.b16 %v476
      %v1361 = vunpack.c.h.b16 %v476
      %v1362 = vunpack.c.l.b16 %v477
      %v1363 = vunpack.c.h.b16 %v477
      %v1364 = vunpack.c.l.b16 %v478
      %v1365 = vunpack.c.h.b16 %v478
      %v1366 = vunpack.c.l.b16 %v479
      %v1367 = vunpack.c.h.b16 %v479
      %v1368 = vunpack.c.l.b16 %v480
      %v1369 = vunpack.c.h.b16 %v480
      %v1370 = vunpack.c.l.b16 %v481
      %v1371 = vunpack.c.h.b16 %v481
      %v1372 = vunpack.c.l.b16 %v482
      %v1373 = vunpack.c.h.b16 %v482
      %v1374 = vunpack.c.l.b16 %v483
      %v1375 = vunpack.c.h.b16 %v483
      %v1376 = vunpack.c.l.b16 %v484
      %v1377 = vunpack.c.h.b16 %v484
      %v1378 = vunpack.c.l.b16 %v485
      %v1379 = vunpack.c.h.b16 %v485
      %v1380 = vunpack.c.l.b16 %v486
      %v1381 = vunpack.c.h.b16 %v486
      %v1382 = vunpack.c.l.b16 %v487
      %v1383 = vunpack.c.h.b16 %v487
      %v1384 = vunpack.c.l.b16 %v488
      %v1385 = vunpack.c.h.b16 %v488
      %v1386 = vunpack.c.l.b16 %v489
      %v1387 = vunpack.c.h.b16 %v489
      %v1388 = vunpack.c.l.b16 %v490
      %v1389 = vunpack.c.h.b16 %v490
      %v1390 = vunpack.c.l.b16 %v491
      %v1391 = vunpack.c.h.b16 %v491
      %v1392 = vunpack.c.l.b16 %v492
      %v1393 = vunpack.c.h.b16 %v492
      %v1394 = vunpack.c.l.b16 %v493
      %v1395 = vunpack.c.h.b16 %v493
      %v1396 = vunpack.c.l.b16 %v494
      %v1397 = vunpack.c.h.b16 %v494
      %v1398 = vunpack.c.l.b16 %v495
      %v1399 = vunpack.c.h.b16 %v495
      %v1400 = vunpack.c.l.b16 %v496
      %v1401 = vunpack.c.h.b16 %v496
      %v1402 = vunpack.c.l.b16 %v497
      %v1403 = vunpack.c.h.b16 %v497
      %v1404 = vunpack.c.l.b16 %v498
      %v1405 = vunpack.c.h.b16 %v498
      %v1406 = vunpack.c.l.b16 %v499
      %v1407 = vunpack.c.h.b16 %v499
      %v1408 = vunpack.c.l.b16 %v500
      %v1409 = vunpack.c.h.b16 %v500
      %v1410 = vunpack.c.l.b16 %v501
      %v1411 = vunpack.c.h.b16 %v501
      %v1412 = vunpack.c.l.b16 %v502
      %v1413 = vunpack.c.h.b16 %v502
      %v1414 = vunpack.c.l.b16 %v503
      %v1415 = vunpack.c.h.b16 %v503
      %v1416 = vunpack.c.l.b16 %v504
      %v1417 = vunpack.c.h.b16 %v504
      %v1418 = vunpack.c.l.b16 %v505
      %v1419 = vunpack.c.h.b16 %v505
      %v1420 = vunpack.c.l.b16 %v506
      %v1421 = vunpack.c.h.b16 %v506
      %v1422 = vunpack.c.l.b16 %v507
      %v1423 = vunpack.c.h.b16 %v507
      %v1424 = vunpack.c.l.b16 %v508
      %v1425 = vunpack.c.h.b16 %v508
      %v1426 = vunpack.c.l.b16 %v509
      %v1427 = vunpack.c.h.b16 %v509
      %v1428 = vunpack.c.l.b16 %v510
      %v1429 = vunpack.c.h.b16 %v510
      %v1430 = vunpack.c.l.b16 %v511
      %v1431 = vunpack.c.h.b16 %v511
      %v1432 = vunpack.c.l.b16 %v512
      %v1433 = vunpack.c.h.b16 %v512
      %v1434 = vunpack.c.l.b16 %v513
      %v1435 = vunpack.c.h.b16 %v513
      %v1436 = vunpack.c.l.b16 %v514
      %v1437 = vunpack.c.h.b16 %v514
      %v1438 = vpack.c.b16 %v870, %v862
      %v1439 = vpack.c.b16 %v871, %v863
      %v1440 = vpack.c.b16 %v872, %v864
      %v1441 = vpack.c.b16 %v873, %v865
      %v1442 = vpack.c.b16 %v874, %v866
      %v1443 = vpack.c.b16 %v875, %v867
      %v1444 = vpack.c.b16 %v876, %v868
      %v1445 = vpack.c.b16 %v877, %v869
      %v1446 = vpack.c.b16 %v886, %v878
      %v1447 = vpack.c.b16 %v887, %v879
      %v1448 = vpack.c.b16 %v888, %v880
      %v1449 = vpack.c.b16 %v889, %v881
      %v1450 = vpack.c.b16 %v890, %v882
      %v1451 = vpack.c.b16 %v891, %v883
      %v1452 = vpack.c.b16 %v892, %v884
      %v1453 = vpack.c.b16 %v893, %v885
      %v1454 = vpack.c.b16 %v902, %v894
      %v1455 = vpack.c.b16 %v903, %v895
      %v1456 = vpack.c.b16 %v904, %v896
      %v1457 = vpack.c.b16 %v905, %v897
      %v1458 = vpack.c.b16 %v906, %v898
      %v1459 = vpack.c.b16 %v907, %v899
      %v1460 = vpack.c.b16 %v908, %v900
      %v1461 = vpack.c.b16 %v909, %v901
      %v1462 = vpack.c.b16 %v918, %v910
      %v1463 = vpack.c.b16 %v919, %v911
      %v1464 = vpack.c.b16 %v920, %v912
      %v1465 = vpack.c.b16 %v921, %v913
      %v1466 = vpack.c.b16 %v922, %v914
      %v1467 = vpack.c.b16 %v923, %v915
      %v1468 = vpack.c.b16 %v924, %v916
      %v1469 = vpack.c.b16 %v925, %v917
      %v1470 = vpack.c.b16 %v934, %v926
      %v1471 = vpack.c.b16 %v935, %v927
      %v1472 = vpack.c.b16 %v936, %v928
      %v1473 = vpack.c.b16 %v937, %v929
      %v1474 = vpack.c.b16 %v938, %v930
      %v1475 = vpack.c.b16 %v939, %v931
      %v1476 = vpack.c.b16 %v940, %v932
      %v1477 = vpack.c.b16 %v941, %v933
      %v1478 = vpack.c.b16 %v950, %v942
      %v1479 = vpack.c.b16 %v951, %v943
      %v1480 = vpack.c.b16 %v952, %v944
      %v1481 = vpack.c.b16 %v953, %v945
      %v1482 = vpack.c.b16 %v954, %v946
      %v1483 = vpack.c.b16 %v955, %v947
      %v1484 = vpack.c.b16 %v956, %v948
      %v1485 = vpack.c.b16 %v957, %v949
      %v1486 = vpack.c.b16 %v966, %v958
      %v1487 = vpack.c.b16 %v967, %v959
      %v1488 = vpack.c.b16 %v968, %v960
      %v1489 = vpack.c.b16 %v969, %v961
      %v1490 = vpack.c.b16 %v970, %v962
      %v1491 = vpack.c.b16 %v971, %v963
      %v1492 = vpack.c.b16 %v972, %v964
      %v1493 = vpack.c.b16 %v973, %v965
      %v1494 = vpack.c.b16 %v982, %v974
      %v1495 = vpack.c.b16 %v983, %v975
      %v1496 = vpack.c.b16 %v984, %v976
      %v1497 = vpack.c.b16 %v985, %v977
      %v1498 = vpack.c.b16 %v986, %v978
      %v1499 = vpack.c.b16 %v987, %v979
      %v1500 = vpack.c.b16 %v988, %v980
      %v1501 = vpack.c.b16 %v989, %v981
      %v1502 = vpack.c.b16 %v998, %v990
      %v1503 = vpack.c.b16 %v999, %v991
      %v1504 = vpack.c.b16 %v1000, %v992
      %v1505 = vpack.c.b16 %v1001, %v993
      %v1506 = vpack.c.b16 %v1002, %v994
      %v1507 = vpack.c.b16 %v1003, %v995
      %v1508 = vpack.c.b16 %v1004, %v996
      %v1509 = vpack.c.b16 %v1005, %v997
      %v1510 = vpack.c.b16 %v1014, %v1006
      %v1511 = vpack.c.b16 %v1015, %v1007
      %v1512 = vpack.c.b16 %v1016, %v1008
      %v1513 = vpack.c.b16 %v1017, %v1009
      %v1514 = vpack.c.b16 %v1018, %v1010
      %v1515 = vpack.c.b16 %v1019, %v1011
      %v1516 = vpack.c.b16 %v1020, %v1012
      %v1517 = vpack.c.b16 %v1021, %v1013
      %v1518 = vpack.c.b16 %v1030, %v1022
      %v1519 = vpack.c.b16 %v1031, %v1023
      %v1520 = vpack.c.b16 %v1032, %v1024
      %v1521 = vpack.c.b16 %v1033, %v1025
      %v1522 = vpack.c.b16 %v1034, %v1026
      %v1523 = vpack.c.b16 %v1035, %v1027
      %v1524 = vpack.c.b16 %v1036, %v1028
      %v1525 = vpack.c.b16 %v1037, %v1029
      %v1526 = vpack.c.b16 %v1046, %v1038
      %v1527 = vpack.c.b16 %v1047, %v1039
      %v1528 = vpack.c.b16 %v1048, %v1040
      %v1529 = vpack.c.b16 %v1049, %v1041
      %v1530 = vpack.c.b16 %v1050, %v1042
      %v1531 = vpack.c.b16 %v1051, %v1043
      %v1532 = vpack.c.b16 %v1052, %v1044
      %v1533 = vpack.c.b16 %v1053, %v1045
      %v1534 = vpack.c.b16 %v1062, %v1054
      %v1535 = vpack.c.b16 %v1063, %v1055
      %v1536 = vpack.c.b16 %v1064, %v1056
      %v1537 = vpack.c.b16 %v1065, %v1057
      %v1538 = vpack.c.b16 %v1066, %v1058
      %v1539 = vpack.c.b16 %v1067, %v1059
      %v1540 = vpack.c.b16 %v1068, %v1060
      %v1541 = vpack.c.b16 %v1069, %v1061
      %v1542 = vpack.c.b16 %v1078, %v1070
      %v1543 = vpack.c.b16 %v1079, %v1071
      %v1544 = vpack.c.b16 %v1080, %v1072
      %v1545 = vpack.c.b16 %v1081, %v1073
      %v1546 = vpack.c.b16 %v1082, %v1074
      %v1547 = vpack.c.b16 %v1083, %v1075
      %v1548 = vpack.c.b16 %v1084, %v1076
      %v1549 = vpack.c.b16 %v1085, %v1077
      %v1550 = vpack.c.b16 %v1094, %v1086
      %v1551 = vpack.c.b16 %v1095, %v1087
      %v1552 = vpack.c.b16 %v1096, %v1088
      %v1553 = vpack.c.b16 %v1097, %v1089
      %v1554 = vpack.c.b16 %v1098, %v1090
      %v1555 = vpack.c.b16 %v1099, %v1091
      %v1556 = vpack.c.b16 %v1100, %v1092
      %v1557 = vpack.c.b16 %v1101, %v1093
      %v1558 = vpack.c.b16 %v1110, %v1102
      %v1559 = vpack.c.b16 %v1111, %v1103
      %v1560 = vpack.c.b16 %v1112, %v1104
      %v1561 = vpack.c.b16 %v1113, %v1105
      %v1562 = vpack.c.b16 %v1114, %v1106
      %v1563 = vpack.c.b16 %v1115, %v1107
      %v1564 = vpack.c.b16 %v1116, %v1108
      %v1565 = vpack.c.b16 %v1117, %v1109
      %v1566 = vpack.c.b16 %v1126, %v1118
      %v1567 = vpack.c.b16 %v1127, %v1119
      %v1568 = vpack.c.b16 %v1128, %v1120
      %v1569 = vpack.c.b16 %v1129, %v1121
      %v1570 = vpack.c.b16 %v1130, %v1122
      %v1571 = vpack.c.b16 %v1131, %v1123
      %v1572 = vpack.c.b16 %v1132, %v1124
      %v1573 = vpack.c.b16 %v1133, %v1125
      %v1574 = vpack.c.b16 %v1142, %v1134
      %v1575 = vpack.c.b16 %v1143, %v1135
      %v1576 = vpack.c.b16 %v1144, %v1136
      %v1577 = vpack.c.b16 %v1145, %v1137
      %v1578 = vpack.c.b16 %v1146, %v1138
      %v1579 = vpack.c.b16 %v1147, %v1139
      %v1580 = vpack.c.b16 %v1148, %v1140
      %v1581 = vpack.c.b16 %v1149, %v1141
      %v1582 = vpack.c.b16 %v1158, %v1150
      %v1583 = vpack.c.b16 %v1159, %v1151
      %v1584 = vpack.c.b16 %v1160, %v1152
      %v1585 = vpack.c.b16 %v1161, %v1153
      %v1586 = vpack.c.b16 %v1162, %v1154
      %v1587 = vpack.c.b16 %v1163, %v1155
      %v1588 = vpack.c.b16 %v1164, %v1156
      %v1589 = vpack.c.b16 %v1165, %v1157
      %v1590 = vpack.c.b16 %v1174, %v1166
      %v1591 = vpack.c.b16 %v1175, %v1167
      %v1592 = vpack.c.b16 %v1176, %v1168
      %v1593 = vpack.c.b16 %v1177, %v1169
      %v1594 = vpack.c.b16 %v1178, %v1170
      %v1595 = vpack.c.b16 %v1179, %v1171
      %v1596 = vpack.c.b16 %v1180, %v1172
      %v1597 = vpack.c.b16 %v1181, %v1173
      %v1598 = vpack.c.b16 %v1190, %v1182
      %v1599 = vpack.c.b16 %v1191, %v1183
      %v1600 = vpack.c.b16 %v1192, %v1184
      %v1601 = vpack.c.b16 %v1193, %v1185
      %v1602 = vpack.c.b16 %v1194, %v1186
      %v1603 = vpack.c.b16 %v1195, %v1187
      %v1604 = vpack.c.b16 %v1196, %v1188
      %v1605 = vpack.c.b16 %v1197, %v1189
      %v1606 = vpack.c.b16 %v1206, %v1198
      %v1607 = vpack.c.b16 %v1207, %v1199
      %v1608 = vpack.c.b16 %v1208, %v1200
      %v1609 = vpack.c.b16 %v1209, %v1201
      %v1610 = vpack.c.b16 %v1210, %v1202
      %v1611 = vpack.c.b16 %v1211, %v1203
      %v1612 = vpack.c.b16 %v1212, %v1204
      %v1613 = vpack.c.b16 %v1213, %v1205
      %v1614 = vpack.c.b16 %v1222, %v1214
      %v1615 = vpack.c.b16 %v1223, %v1215
      %v1616 = vpack.c.b16 %v1224, %v1216
      %v1617 = vpack.c.b16 %v1225, %v1217
      %v1618 = vpack.c.b16 %v1226, %v1218
      %v1619 = vpack.c.b16 %v1227, %v1219
      %v1620 = vpack.c.b16 %v1228, %v1220
      %v1621 = vpack.c.b16 %v1229, %v1221
      %v1622 = vpack.c.b16 %v1238, %v1230
      %v1623 = vpack.c.b16 %v1239, %v1231
      %v1624 = vpack.c.b16 %v1240, %v1232
      %v1625 = vpack.c.b16 %v1241, %v1233
      %v1626 = vpack.c.b16 %v1242, %v1234
      %v1627 = vpack.c.b16 %v1243, %v1235
      %v1628 = vpack.c.b16 %v1244, %v1236
      %v1629 = vpack.c.b16 %v1245, %v1237
      %v1630 = vpack.c.b16 %v1254, %v1246
      %v1631 = vpack.c.b16 %v1255, %v1247
      %v1632 = vpack.c.b16 %v1256, %v1248
      %v1633 = vpack.c.b16 %v1257, %v1249
      %v1634 = vpack.c.b16 %v1258, %v1250
      %v1635 = vpack.c.b16 %v1259, %v1251
      %v1636 = vpack.c.b16 %v1260, %v1252
      %v1637 = vpack.c.b16 %v1261, %v1253
      %v1638 = vpack.c.b16 %v1270, %v1262
      %v1639 = vpack.c.b16 %v1271, %v1263
      %v1640 = vpack.c.b16 %v1272, %v1264
      %v1641 = vpack.c.b16 %v1273, %v1265
      %v1642 = vpack.c.b16 %v1274, %v1266
      %v1643 = vpack.c.b16 %v1275, %v1267
      %v1644 = vpack.c.b16 %v1276, %v1268
      %v1645 = vpack.c.b16 %v1277, %v1269
      %v1646 = vpack.c.b16 %v1286, %v1278
      %v1647 = vpack.c.b16 %v1287, %v1279
      %v1648 = vpack.c.b16 %v1288, %v1280
      %v1649 = vpack.c.b16 %v1289, %v1281
      %v1650 = vpack.c.b16 %v1290, %v1282
      %v1651 = vpack.c.b16 %v1291, %v1283
      %v1652 = vpack.c.b16 %v1292, %v1284
      %v1653 = vpack.c.b16 %v1293, %v1285
      %v1654 = vpack.c.b16 %v1302, %v1294
      %v1655 = vpack.c.b16 %v1303, %v1295
      %v1656 = vpack.c.b16 %v1304, %v1296
      %v1657 = vpack.c.b16 %v1305, %v1297
      %v1658 = vpack.c.b16 %v1306, %v1298
      %v1659 = vpack.c.b16 %v1307, %v1299
      %v1660 = vpack.c.b16 %v1308, %v1300
      %v1661 = vpack.c.b16 %v1309, %v1301
      %v1662 = vpack.c.b16 %v1318, %v1310
      %v1663 = vpack.c.b16 %v1319, %v1311
      %v1664 = vpack.c.b16 %v1320, %v1312
      %v1665 = vpack.c.b16 %v1321, %v1313
      %v1666 = vpack.c.b16 %v1322, %v1314
      %v1667 = vpack.c.b16 %v1323, %v1315
      %v1668 = vpack.c.b16 %v1324, %v1316
      %v1669 = vpack.c.b16 %v1325, %v1317
      %v1670 = vpack.c.b16 %v1334, %v1326
      %v1671 = vpack.c.b16 %v1335, %v1327
      %v1672 = vpack.c.b16 %v1336, %v1328
      %v1673 = vpack.c.b16 %v1337, %v1329
      %v1674 = vpack.c.b16 %v1338, %v1330
      %v1675 = vpack.c.b16 %v1339, %v1331
      %v1676 = vpack.c.b16 %v1340, %v1332
      %v1677 = vpack.c.b16 %v1341, %v1333
      %v1678 = vpack.c.b16 %v1350, %v1342
      %v1679 = vpack.c.b16 %v1351, %v1343
      %v1680 = vpack.c.b16 %v1352, %v1344
      %v1681 = vpack.c.b16 %v1353, %v1345
      %v1682 = vpack.c.b16 %v1354, %v1346
      %v1683 = vpack.c.b16 %v1355, %v1347
      %v1684 = vpack.c.b16 %v1356, %v1348
      %v1685 = vpack.c.b16 %v1357, %v1349
      %v1686 = vpack.c.b16 %v1366, %v1358
      %v1687 = vpack.c.b16 %v1367, %v1359
      %v1688 = vpack.c.b16 %v1368, %v1360
      %v1689 = vpack.c.b16 %v1369, %v1361
      %v1690 = vpack.c.b16 %v1370, %v1362
      %v1691 = vpack.c.b16 %v1371, %v1363
      %v1692 = vpack.c.b16 %v1372, %v1364
      %v1693 = vpack.c.b16 %v1373, %v1365
      %v1694 = vpack.c.b16 %v1382, %v1374
      %v1695 = vpack.c.b16 %v1383, %v1375
      %v1696 = vpack.c.b16 %v1384, %v1376
      %v1697 = vpack.c.b16 %v1385, %v1377
      %v1698 = vpack.c.b16 %v1386, %v1378
      %v1699 = vpack.c.b16 %v1387, %v1379
      %v1700 = vpack.c.b16 %v1388, %v1380
      %v1701 = vpack.c.b16 %v1389, %v1381
      %v1702 = vpack.c.b16 %v1398, %v1390
      %v1703 = vpack.c.b16 %v1399, %v1391
      %v1704 = vpack.c.b16 %v1400, %v1392
      %v1705 = vpack.c.b16 %v1401, %v1393
      %v1706 = vpack.c.b16 %v1402, %v1394
      %v1707 = vpack.c.b16 %v1403, %v1395
      %v1708 = vpack.c.b16 %v1404, %v1396
      %v1709 = vpack.c.b16 %v1405, %v1397
      %v1710 = vpack.c.b16 %v1414, %v1406
      %v1711 = vpack.c.b16 %v1415, %v1407
      %v1712 = vpack.c.b16 %v1416, %v1408
      %v1713 = vpack.c.b16 %v1417, %v1409
      %v1714 = vpack.c.b16 %v1418, %v1410
      %v1715 = vpack.c.b16 %v1419, %v1411
      %v1716 = vpack.c.b16 %v1420, %v1412
      %v1717 = vpack.c.b16 %v1421, %v1413
      %v1718 = vpack.c.b16 %v1430, %v1422
      %v1719 = vpack.c.b16 %v1431, %v1423
      %v1720 = vpack.c.b16 %v1432, %v1424
      %v1721 = vpack.c.b16 %v1433, %v1425
      %v1722 = vpack.c.b16 %v1434, %v1426
      %v1723 = vpack.c.b16 %v1435, %v1427
      %v1724 = vpack.c.b16 %v1436, %v1428
      %v1725 = vpack.c.b16 %v1437, %v1429
      %vm2014 = vcmask 523264
      %v2016 = vsel %vm2014, %v569, 0
      %2018 = vmatprep.subr.bf16.mxu0 %v1439
      %2019 = vmatpush1.bf16.msra.mxu0 %v1438
      %2020 = vmatprep.subr.bf16.mxu0 %v1447
      %2021 = vmatpush1.bf16.msra.mxu0 %v1446
      %2022 = vmatprep.subr.bf16.mxu0 %v1455
      %2023 = vmatpush1.bf16.msra.mxu0 %v1454
      %2024 = vmatprep.subr.bf16.mxu0 %v1463
      %2025 = vmatpush1.bf16.msra.mxu0 %v1462
      %2026 = vmatprep.subr.bf16.mxu0 %v1471
      %2027 = vmatpush1.bf16.msra.mxu0 %v1470
      %2028 = vmatprep.subr.bf16.mxu0 %v1479
      %2029 = vmatpush1.bf16.msra.mxu0 %v1478
      %2030 = vmatprep.subr.bf16.mxu0 %v1487
      %2031 = vmatpush1.bf16.msra.mxu0 %v1486
      %2032 = vmatprep.subr.bf16.mxu0 %v1495
      %2033 = vmatpush1.bf16.msra.mxu0 %v1494
      %2034 = vmatprep.subr.bf16.mxu0 %v1503
      %2035 = vmatpush1.bf16.msra.mxu0 %v1502
      %2036 = vmatprep.subr.bf16.mxu0 %v1511
      %2037 = vmatpush1.bf16.msra.mxu0 %v1510
      %2038 = vmatprep.subr.bf16.mxu0 %v1519
      %2039 = vmatpush1.bf16.msra.mxu0 %v1518
      %2040 = vmatprep.subr.bf16.mxu0 %v1527
      %2041 = vmatpush1.bf16.msra.mxu0 %v1526
      %2042 = vmatprep.subr.bf16.mxu0 %v1535
      %2043 = vmatpush1.bf16.msra.mxu0 %v1534
      %2044 = vmatprep.subr.bf16.mxu0 %v1543
      %2045 = vmatpush1.bf16.msra.mxu0 %v1542
      %2046 = vmatprep.subr.bf16.mxu0 %v1551
      %2047 = vmatpush1.bf16.msra.mxu0 %v1550
      %2048 = vmatprep.subr.bf16.mxu0 %v1559
      %2049 = vmatpush1.bf16.msra.mxu0 %v1558
      %2050 = vmatprep.mubr.bf16.mxu0 %v566
      %2051 = vmatmul.mubr.bf16.gmra.mrb[0].mxu0 %v565
      %v2052 = vpop.f32.mrb[0].mxu0
      %v2053 = vadd.f32 %v520, %v2052
      %v2054 = vpop.f32.mrb[0].mxu0
      %v2055 = vadd.f32 %v524, %v2054
      %v2056 = vpop.f32.mrb[0].mxu0
      %v2057 = vpop.f32.mrb[0].mxu0
      %2058 = vdwg.mxu0
      %2059 = vmatprep.subr.bf16.mxu0 %v1567
      %2060 = vmatpush1.bf16.msra.mxu0 %v1566
      %2061 = vmatprep.subr.bf16.mxu0 %v1575
      %2062 = vmatpush1.bf16.msra.mxu0 %v1574
      %2063 = vmatprep.subr.bf16.mxu0 %v1583
      %2064 = vmatpush1.bf16.msra.mxu0 %v1582
      %2065 = vmatprep.subr.bf16.mxu0 %v1591
      %2066 = vmatpush1.bf16.msra.mxu0 %v1590
      %2067 = vmatprep.subr.bf16.mxu0 %v1599
      %2068 = vmatpush1.bf16.msra.mxu0 %v1598
      %2069 = vmatprep.subr.bf16.mxu0 %v1607
      %2070 = vmatpush1.bf16.msra.mxu0 %v1606
      %2071 = vmatprep.subr.bf16.mxu0 %v1615
      %2072 = vmatpush1.bf16.msra.mxu0 %v1614
      %2073 = vmatprep.subr.bf16.mxu0 %v1623
      %2074 = vmatpush1.bf16.msra.mxu0 %v1622
      %2075 = vmatprep.subr.bf16.mxu0 %v1631
      %2076 = vmatpush1.bf16.msra.mxu0 %v1630
      %2077 = vmatprep.subr.bf16.mxu0 %v1639
      %2078 = vmatpush1.bf16.msra.mxu0 %v1638
      %2079 = vmatprep.subr.bf16.mxu0 %v1647
      %2080 = vmatpush1.bf16.msra.mxu0 %v1646
      %2081 = vmatprep.subr.bf16.mxu0 %v1655
      %2082 = vmatpush1.bf16.msra.mxu0 %v1654
      %2083 = vmatprep.subr.bf16.mxu0 %v1663
      %2084 = vmatpush1.bf16.msra.mxu0 %v1662
      %2085 = vmatprep.subr.bf16.mxu0 %v1671
      %2086 = vmatpush1.bf16.msra.mxu0 %v1670
      %2087 = vmatprep.subr.bf16.mxu0 %v1679
      %2088 = vmatpush1.bf16.msra.mxu0 %v1678
      %2089 = vmatprep.subr.bf16.mxu0 %v1687
      %2090 = vmatpush1.bf16.msra.mxu0 %v1686
      %2091 = vmatprep.mubr.bf16.mxu0 %v568
      %2092 = vmatmul.mubr.bf16.gmra.mrb[0].mxu0 %v567
      %v2093 = vpop.f32.mrb[0].mxu0
      %v2094 = vadd.f32 %v2053, %v2093
      %v2095 = vpop.f32.mrb[0].mxu0
      %v2096 = vadd.f32 %v2055, %v2095
      %v2097 = vpop.f32.mrb[0].mxu0
      %v2098 = vpop.f32.mrb[0].mxu0
      %2099 = vdwg.mxu0
      %2100 = vmatprep.subr.bf16.mxu0 %v1695
      %2101 = vmatpush1.bf16.msra.mxu0 %v1694
      %2102 = vmatprep.subr.bf16.mxu0 %v1703
      %2103 = vmatpush1.bf16.msra.mxu0 %v1702
      %2104 = vmatprep.subr.bf16.mxu0 %v1711
      %2105 = vmatpush1.bf16.msra.mxu0 %v1710
      %2106 = vmatprep.subr.bf16.mxu0 %v1719
      %2107 = vmatpush1.bf16.msra.mxu0 %v1718
      %2108 = vmatprep.subr.bf16.mxu0 0
      %2109 = vmatpush1.bf16.msra.mxu0 0
      %2110 = vmatprep.subr.bf16.mxu0 0
      %2111 = vmatpush1.bf16.msra.mxu0 0
      %2112 = vmatprep.subr.bf16.mxu0 0
      %2113 = vmatpush1.bf16.msra.mxu0 0
      %2114 = vmatprep.subr.bf16.mxu0 0
      %2115 = vmatpush1.bf16.msra.mxu0 0
      %2116 = vmatprep.subr.bf16.mxu0 0
      %2117 = vmatpush1.bf16.msra.mxu0 0
      %2118 = vmatprep.subr.bf16.mxu0 0
      %2119 = vmatpush1.bf16.msra.mxu0 0
      %2120 = vmatprep.subr.bf16.mxu0 0
      %2121 = vmatpush1.bf16.msra.mxu0 0
      %2122 = vmatprep.subr.bf16.mxu0 0
      %2123 = vmatpush1.bf16.msra.mxu0 0
      %2124 = vmatprep.subr.bf16.mxu0 0
      %2125 = vmatpush1.bf16.msra.mxu0 0
      %2126 = vmatprep.subr.bf16.mxu0 0
      %2127 = vmatpush1.bf16.msra.mxu0 0
      %2128 = vmatprep.subr.bf16.mxu0 0
      %2129 = vmatpush1.bf16.msra.mxu0 0
      %2130 = vmatprep.subr.bf16.mxu0 0
      %2131 = vmatpush1.bf16.msra.mxu0 0
      %2132 = vmatprep.mubr.bf16.mxu0 0
      %2133 = vmatmul.mubr.bf16.gmra.mrb[0].mxu0 %v2016
      %v2134 = vpop.f32.mrb[0].mxu0
      %v2135 = vadd.f32 %v2094, %v2134
      %v2136 = vpop.f32.mrb[0].mxu0
      %v2137 = vadd.f32 %v2096, %v2136
      %v2138 = vpop.f32.mrb[0].mxu0
      %v2139 = vpop.f32.mrb[0].mxu0
      %2140 = vdwg.mxu0
      %2141 = vmatprep.subr.bf16.mxu0 %v1441
      %2142 = vmatpush1.bf16.msra.mxu0 %v1440
      %2143 = vmatprep.subr.bf16.mxu0 %v1449
      %2144 = vmatpush1.bf16.msra.mxu0 %v1448
      %2145 = vmatprep.subr.bf16.mxu0 %v1457
      %2146 = vmatpush1.bf16.msra.mxu0 %v1456
      %2147 = vmatprep.subr.bf16.mxu0 %v1465
      %2148 = vmatpush1.bf16.msra.mxu0 %v1464
      %2149 = vmatprep.subr.bf16.mxu0 %v1473
      %2150 = vmatpush1.bf16.msra.mxu0 %v1472
      %2151 = vmatprep.subr.bf16.mxu0 %v1481
      %2152 = vmatpush1.bf16.msra.mxu0 %v1480
      %2153 = vmatprep.subr.bf16.mxu0 %v1489
      %2154 = vmatpush1.bf16.msra.mxu0 %v1488
      %2155 = vmatprep.subr.bf16.mxu0 %v1497
      %2156 = vmatpush1.bf16.msra.mxu0 %v1496
      %2157 = vmatprep.subr.bf16.mxu0 %v1505
      %2158 = vmatpush1.bf16.msra.mxu0 %v1504
      %2159 = vmatprep.subr.bf16.mxu0 %v1513
      %2160 = vmatpush1.bf16.msra.mxu0 %v1512
      %2161 = vmatprep.subr.bf16.mxu0 %v1521
      %2162 = vmatpush1.bf16.msra.mxu0 %v1520
      %2163 = vmatprep.subr.bf16.mxu0 %v1529
      %2164 = vmatpush1.bf16.msra.mxu0 %v1528
      %2165 = vmatprep.subr.bf16.mxu0 %v1537
      %2166 = vmatpush1.bf16.msra.mxu0 %v1536
      %2167 = vmatprep.subr.bf16.mxu0 %v1545
      %2168 = vmatpush1.bf16.msra.mxu0 %v1544
      %2169 = vmatprep.subr.bf16.mxu0 %v1553
      %2170 = vmatpush1.bf16.msra.mxu0 %v1552
      %2171 = vmatprep.subr.bf16.mxu0 %v1561
      %2172 = vmatpush1.bf16.msra.mxu0 %v1560
      %2173 = vmatprep.mubr.bf16.mxu0 %v566
      %2174 = vmatmul.mubr.bf16.gmra.mrb[0].mxu0 %v565
      %v2175 = vpop.f32.mrb[0].mxu0
      %v2176 = vadd.f32 %v528, %v2175
      %v2177 = vpop.f32.mrb[0].mxu0
      %v2178 = vadd.f32 %v532, %v2177
      %v2179 = vpop.f32.mrb[0].mxu0
      %v2180 = vpop.f32.mrb[0].mxu0
      %2181 = vdwg.mxu0
      %2182 = vmatprep.subr.bf16.mxu0 %v1569
      %2183 = vmatpush1.bf16.msra.mxu0 %v1568
      %2184 = vmatprep.subr.bf16.mxu0 %v1577
      %2185 = vmatpush1.bf16.msra.mxu0 %v1576
      %2186 = vmatprep.subr.bf16.mxu0 %v1585
      %2187 = vmatpush1.bf16.msra.mxu0 %v1584
      %2188 = vmatprep.subr.bf16.mxu0 %v1593
      %2189 = vmatpush1.bf16.msra.mxu0 %v1592
      %2190 = vmatprep.subr.bf16.mxu0 %v1601
      %2191 = vmatpush1.bf16.msra.mxu0 %v1600
      %2192 = vmatprep.subr.bf16.mxu0 %v1609
      %2193 = vmatpush1.bf16.msra.mxu0 %v1608
      %2194 = vmatprep.subr.bf16.mxu0 %v1617
      %2195 = vmatpush1.bf16.msra.mxu0 %v1616
      %2196 = vmatprep.subr.bf16.mxu0 %v1625
      %2197 = vmatpush1.bf16.msra.mxu0 %v1624
      %2198 = vmatprep.subr.bf16.mxu0 %v1633
      %2199 = vmatpush1.bf16.msra.mxu0 %v1632
      %2200 = vmatprep.subr.bf16.mxu0 %v1641
      %2201 = vmatpush1.bf16.msra.mxu0 %v1640
      %2202 = vmatprep.subr.bf16.mxu0 %v1649
      %2203 = vmatpush1.bf16.msra.mxu0 %v1648
      %2204 = vmatprep.subr.bf16.mxu0 %v1657
      %2205 = vmatpush1.bf16.msra.mxu0 %v1656
      %2206 = vmatprep.subr.bf16.mxu0 %v1665
      %2207 = vmatpush1.bf16.msra.mxu0 %v1664
      %2208 = vmatprep.subr.bf16.mxu0 %v1673
      %2209 = vmatpush1.bf16.msra.mxu0 %v1672
      %2210 = vmatprep.subr.bf16.mxu0 %v1681
      %2211 = vmatpush1.bf16.msra.mxu0 %v1680
      %2212 = vmatprep.subr.bf16.mxu0 %v1689
      %2213 = vmatpush1.bf16.msra.mxu0 %v1688
      %2214 = vmatprep.mubr.bf16.mxu0 %v568
      %2215 = vmatmul.mubr.bf16.gmra.mrb[0].mxu0 %v567
      %v2216 = vpop.f32.mrb[0].mxu0
      %v2217 = vadd.f32 %v2176, %v2216
      %v2218 = vpop.f32.mrb[0].mxu0
      %v2219 = vadd.f32 %v2178, %v2218
      %v2220 = vpop.f32.mrb[0].mxu0
      %v2221 = vpop.f32.mrb[0].mxu0
      %2222 = vdwg.mxu0
      %2223 = vmatprep.subr.bf16.mxu0 %v1697
      %2224 = vmatpush1.bf16.msra.mxu0 %v1696
      %2225 = vmatprep.subr.bf16.mxu0 %v1705
      %2226 = vmatpush1.bf16.msra.mxu0 %v1704
      %2227 = vmatprep.subr.bf16.mxu0 %v1713
      %2228 = vmatpush1.bf16.msra.mxu0 %v1712
      %2229 = vmatprep.subr.bf16.mxu0 %v1721
      %2230 = vmatpush1.bf16.msra.mxu0 %v1720
      %2231 = vmatprep.subr.bf16.mxu0 0
      %2232 = vmatpush1.bf16.msra.mxu0 0
      %2233 = vmatprep.subr.bf16.mxu0 0
      %2234 = vmatpush1.bf16.msra.mxu0 0
      %2235 = vmatprep.subr.bf16.mxu0 0
      %2236 = vmatpush1.bf16.msra.mxu0 0
      %2237 = vmatprep.subr.bf16.mxu0 0
      %2238 = vmatpush1.bf16.msra.mxu0 0
      %2239 = vmatprep.subr.bf16.mxu0 0
      %2240 = vmatpush1.bf16.msra.mxu0 0
      %2241 = vmatprep.subr.bf16.mxu0 0
      %2242 = vmatpush1.bf16.msra.mxu0 0
      %2243 = vmatprep.subr.bf16.mxu0 0
      %2244 = vmatpush1.bf16.msra.mxu0 0
      %2245 = vmatprep.subr.bf16.mxu0 0
      %2246 = vmatpush1.bf16.msra.mxu0 0
      %2247 = vmatprep.subr.bf16.mxu0 0
      %2248 = vmatpush1.bf16.msra.mxu0 0
      %2249 = vmatprep.subr.bf16.mxu0 0
      %2250 = vmatpush1.bf16.msra.mxu0 0
      %2251 = vmatprep.subr.bf16.mxu0 0
      %2252 = vmatpush1.bf16.msra.mxu0 0
      %2253 = vmatprep.subr.bf16.mxu0 0
      %2254 = vmatpush1.bf16.msra.mxu0 0
      %2255 = vmatprep.mubr.bf16.mxu0 0
      %2256 = vmatmul.mubr.bf16.gmra.mrb[0].mxu0 %v2016
      %v2257 = vpop.f32.mrb[0].mxu0
      %v2258 = vadd.f32 %v2217, %v2257
      %v2259 = vpop.f32.mrb[0].mxu0
      %v2260 = vadd.f32 %v2219, %v2259
      %v2261 = vpop.f32.mrb[0].mxu0
      %v2262 = vpop.f32.mrb[0].mxu0
      %2263 = vdwg.mxu0
      %2264 = vmatprep.subr.bf16.mxu0 %v1443
      %2265 = vmatpush1.bf16.msra.mxu0 %v1442
      %2266 = vmatprep.subr.bf16.mxu0 %v1451
      %2267 = vmatpush1.bf16.msra.mxu0 %v1450
      %2268 = vmatprep.subr.bf16.mxu0 %v1459
      %2269 = vmatpush1.bf16.msra.mxu0 %v1458
      %2270 = vmatprep.subr.bf16.mxu0 %v1467
      %2271 = vmatpush1.bf16.msra.mxu0 %v1466
      %2272 = vmatprep.subr.bf16.mxu0 %v1475
      %2273 = vmatpush1.bf16.msra.mxu0 %v1474
      %2274 = vmatprep.subr.bf16.mxu0 %v1483
      %2275 = vmatpush1.bf16.msra.mxu0 %v1482
      %2276 = vmatprep.subr.bf16.mxu0 %v1491
      %2277 = vmatpush1.bf16.msra.mxu0 %v1490
      %2278 = vmatprep.subr.bf16.mxu0 %v1499
      %2279 = vmatpush1.bf16.msra.mxu0 %v1498
      %2280 = vmatprep.subr.bf16.mxu0 %v1507
      %2281 = vmatpush1.bf16.msra.mxu0 %v1506
      %2282 = vmatprep.subr.bf16.mxu0 %v1515
      %2283 = vmatpush1.bf16.msra.mxu0 %v1514
      %2284 = vmatprep.subr.bf16.mxu0 %v1523
      %2285 = vmatpush1.bf16.msra.mxu0 %v1522
      %2286 = vmatprep.subr.bf16.mxu0 %v1531
      %2287 = vmatpush1.bf16.msra.mxu0 %v1530
      %2288 = vmatprep.subr.bf16.mxu0 %v1539
      %2289 = vmatpush1.bf16.msra.mxu0 %v1538
      %2290 = vmatprep.subr.bf16.mxu0 %v1547
      %2291 = vmatpush1.bf16.msra.mxu0 %v1546
      %2292 = vmatprep.subr.bf16.mxu0 %v1555
      %2293 = vmatpush1.bf16.msra.mxu0 %v1554
      %2294 = vmatprep.subr.bf16.mxu0 %v1563
      %2295 = vmatpush1.bf16.msra.mxu0 %v1562
      %2296 = vmatprep.mubr.bf16.mxu0 %v566
      %2297 = vmatmul.mubr.bf16.gmra.mrb[0].mxu0 %v565
      %v2298 = vpop.f32.mrb[0].mxu0
      %v2299 = vadd.f32 %v536, %v2298
      %v2300 = vpop.f32.mrb[0].mxu0
      %v2301 = vadd.f32 %v540, %v2300
      %v2302 = vpop.f32.mrb[0].mxu0
      %v2303 = vpop.f32.mrb[0].mxu0
      %2304 = vdwg.mxu0
      %2305 = vmatprep.subr.bf16.mxu0 %v1571
      %2306 = vmatpush1.bf16.msra.mxu0 %v1570
      %2307 = vmatprep.subr.bf16.mxu0 %v1579
      %2308 = vmatpush1.bf16.msra.mxu0 %v1578
      %2309 = vmatprep.subr.bf16.mxu0 %v1587
      %2310 = vmatpush1.bf16.msra.mxu0 %v1586
      %2311 = vmatprep.subr.bf16.mxu0 %v1595
      %2312 = vmatpush1.bf16.msra.mxu0 %v1594
      %2313 = vmatprep.subr.bf16.mxu0 %v1603
      %2314 = vmatpush1.bf16.msra.mxu0 %v1602
      %2315 = vmatprep.subr.bf16.mxu0 %v1611
      %2316 = vmatpush1.bf16.msra.mxu0 %v1610
      %2317 = vmatprep.subr.bf16.mxu0 %v1619
      %2318 = vmatpush1.bf16.msra.mxu0 %v1618
      %2319 = vmatprep.subr.bf16.mxu0 %v1627
      %2320 = vmatpush1.bf16.msra.mxu0 %v1626
      %2321 = vmatprep.subr.bf16.mxu0 %v1635
      %2322 = vmatpush1.bf16.msra.mxu0 %v1634
      %2323 = vmatprep.subr.bf16.mxu0 %v1643
      %2324 = vmatpush1.bf16.msra.mxu0 %v1642
      %2325 = vmatprep.subr.bf16.mxu0 %v1651
      %2326 = vmatpush1.bf16.msra.mxu0 %v1650
      %2327 = vmatprep.subr.bf16.mxu0 %v1659
      %2328 = vmatpush1.bf16.msra.mxu0 %v1658
      %2329 = vmatprep.subr.bf16.mxu0 %v1667
      %2330 = vmatpush1.bf16.msra.mxu0 %v1666
      %2331 = vmatprep.subr.bf16.mxu0 %v1675
      %2332 = vmatpush1.bf16.msra.mxu0 %v1674
      %2333 = vmatprep.subr.bf16.mxu0 %v1683
      %2334 = vmatpush1.bf16.msra.mxu0 %v1682
      %2335 = vmatprep.subr.bf16.mxu0 %v1691
      %2336 = vmatpush1.bf16.msra.mxu0 %v1690
      %2337 = vmatprep.mubr.bf16.mxu0 %v568
      %2338 = vmatmul.mubr.bf16.gmra.mrb[0].mxu0 %v567
      %v2339 = vpop.f32.mrb[0].mxu0
      %v2340 = vadd.f32 %v2299, %v2339
      %v2341 = vpop.f32.mrb[0].mxu0
      %v2342 = vadd.f32 %v2301, %v2341
      %v2343 = vpop.f32.mrb[0].mxu0
      %v2344 = vpop.f32.mrb[0].mxu0
      %2345 = vdwg.mxu0
      %2346 = vmatprep.subr.bf16.mxu0 %v1699
      %2347 = vmatpush1.bf16.msra.mxu0 %v1698
      %2348 = vmatprep.subr.bf16.mxu0 %v1707
      %2349 = vmatpush1.bf16.msra.mxu0 %v1706
      %2350 = vmatprep.subr.bf16.mxu0 %v1715
      %2351 = vmatpush1.bf16.msra.mxu0 %v1714
      %2352 = vmatprep.subr.bf16.mxu0 %v1723
      %2353 = vmatpush1.bf16.msra.mxu0 %v1722
      %2354 = vmatprep.subr.bf16.mxu0 0
      %2355 = vmatpush1.bf16.msra.mxu0 0
      %2356 = vmatprep.subr.bf16.mxu0 0
      %2357 = vmatpush1.bf16.msra.mxu0 0
      %2358 = vmatprep.subr.bf16.mxu0 0
      %2359 = vmatpush1.bf16.msra.mxu0 0
      %2360 = vmatprep.subr.bf16.mxu0 0
      %2361 = vmatpush1.bf16.msra.mxu0 0
      %2362 = vmatprep.subr.bf16.mxu0 0
      %2363 = vmatpush1.bf16.msra.mxu0 0
      %2364 = vmatprep.subr.bf16.mxu0 0
      %2365 = vmatpush1.bf16.msra.mxu0 0
      %2366 = vmatprep.subr.bf16.mxu0 0
      %2367 = vmatpush1.bf16.msra.mxu0 0
      %2368 = vmatprep.subr.bf16.mxu0 0
      %2369 = vmatpush1.bf16.msra.mxu0 0
      %2370 = vmatprep.subr.bf16.mxu0 0
      %2371 = vmatpush1.bf16.msra.mxu0 0
      %2372 = vmatprep.subr.bf16.mxu0 0
      %2373 = vmatpush1.bf16.msra.mxu0 0
      %2374 = vmatprep.subr.bf16.mxu0 0
      %2375 = vmatpush1.bf16.msra.mxu0 0
      %2376 = vmatprep.subr.bf16.mxu0 0
      %2377 = vmatpush1.bf16.msra.mxu0 0
      %2378 = vmatprep.mubr.bf16.mxu0 0
      %2379 = vmatmul.mubr.bf16.gmra.mrb[0].mxu0 %v2016
      %v2380 = vpop.f32.mrb[0].mxu0
      %v2381 = vadd.f32 %v2340, %v2380
      %v2382 = vpop.f32.mrb[0].mxu0
      %v2383 = vadd.f32 %v2342, %v2382
      %v2384 = vpop.f32.mrb[0].mxu0
      %v2385 = vpop.f32.mrb[0].mxu0
      %2386 = vdwg.mxu0
      %2387 = vmatprep.subr.bf16.mxu0 %v1445
      %2388 = vmatpush1.bf16.msra.mxu0 %v1444
      %2389 = vmatprep.subr.bf16.mxu0 %v1453
      %2390 = vmatpush1.bf16.msra.mxu0 %v1452
      %2391 = vmatprep.subr.bf16.mxu0 %v1461
      %2392 = vmatpush1.bf16.msra.mxu0 %v1460
      %2393 = vmatprep.subr.bf16.mxu0 %v1469
      %2394 = vmatpush1.bf16.msra.mxu0 %v1468
      %2395 = vmatprep.subr.bf16.mxu0 %v1477
      %2396 = vmatpush1.bf16.msra.mxu0 %v1476
      %2397 = vmatprep.subr.bf16.mxu0 %v1485
      %2398 = vmatpush1.bf16.msra.mxu0 %v1484
      %2399 = vmatprep.subr.bf16.mxu0 %v1493
      %2400 = vmatpush1.bf16.msra.mxu0 %v1492
      %2401 = vmatprep.subr.bf16.mxu0 %v1501
      %2402 = vmatpush1.bf16.msra.mxu0 %v1500
      %2403 = vmatprep.subr.bf16.mxu0 %v1509
      %2404 = vmatpush1.bf16.msra.mxu0 %v1508
      %2405 = vmatprep.subr.bf16.mxu0 %v1517
      %2406 = vmatpush1.bf16.msra.mxu0 %v1516
      %2407 = vmatprep.subr.bf16.mxu0 %v1525
      %2408 = vmatpush1.bf16.msra.mxu0 %v1524
      %2409 = vmatprep.subr.bf16.mxu0 %v1533
      %2410 = vmatpush1.bf16.msra.mxu0 %v1532
      %2411 = vmatprep.subr.bf16.mxu0 %v1541
      %2412 = vmatpush1.bf16.msra.mxu0 %v1540
      %2413 = vmatprep.subr.bf16.mxu0 %v1549
      %2414 = vmatpush1.bf16.msra.mxu0 %v1548
      %2415 = vmatprep.subr.bf16.mxu0 %v1557
      %2416 = vmatpush1.bf16.msra.mxu0 %v1556
      %2417 = vmatprep.subr.bf16.mxu0 %v1565
      %2418 = vmatpush1.bf16.msra.mxu0 %v1564
      %2419 = vmatprep.mubr.bf16.mxu0 %v566
      %2420 = vmatmul.mubr.bf16.gmra.mrb[0].mxu0 %v565
      %v2421 = vpop.f32.mrb[0].mxu0
      %v2422 = vadd.f32 %v544, %v2421
      %v2423 = vpop.f32.mrb[0].mxu0
      %v2424 = vadd.f32 %v548, %v2423
      %v2425 = vpop.f32.mrb[0].mxu0
      %v2426 = vpop.f32.mrb[0].mxu0
      %2427 = vdwg.mxu0
      %2428 = vmatprep.subr.bf16.mxu0 %v1573
      %2429 = vmatpush1.bf16.msra.mxu0 %v1572
      %2430 = vmatprep.subr.bf16.mxu0 %v1581
      %2431 = vmatpush1.bf16.msra.mxu0 %v1580
      %2432 = vmatprep.subr.bf16.mxu0 %v1589
      %2433 = vmatpush1.bf16.msra.mxu0 %v1588
      %2434 = vmatprep.subr.bf16.mxu0 %v1597
      %2435 = vmatpush1.bf16.msra.mxu0 %v1596
      %2436 = vmatprep.subr.bf16.mxu0 %v1605
      %2437 = vmatpush1.bf16.msra.mxu0 %v1604
      %2438 = vmatprep.subr.bf16.mxu0 %v1613
      %2439 = vmatpush1.bf16.msra.mxu0 %v1612
      %2440 = vmatprep.subr.bf16.mxu0 %v1621
      %2441 = vmatpush1.bf16.msra.mxu0 %v1620
      %2442 = vmatprep.subr.bf16.mxu0 %v1629
      %2443 = vmatpush1.bf16.msra.mxu0 %v1628
      %2444 = vmatprep.subr.bf16.mxu0 %v1637
      %2445 = vmatpush1.bf16.msra.mxu0 %v1636
      %2446 = vmatprep.subr.bf16.mxu0 %v1645
      %2447 = vmatpush1.bf16.msra.mxu0 %v1644
      %2448 = vmatprep.subr.bf16.mxu0 %v1653
      %2449 = vmatpush1.bf16.msra.mxu0 %v1652
      %2450 = vmatprep.subr.bf16.mxu0 %v1661
      %2451 = vmatpush1.bf16.msra.mxu0 %v1660
      %2452 = vmatprep.subr.bf16.mxu0 %v1669
      %2453 = vmatpush1.bf16.msra.mxu0 %v1668
      %2454 = vmatprep.subr.bf16.mxu0 %v1677
      %2455 = vmatpush1.bf16.msra.mxu0 %v1676
      %2456 = vmatprep.subr.bf16.mxu0 %v1685
      %2457 = vmatpush1.bf16.msra.mxu0 %v1684
      %2458 = vmatprep.subr.bf16.mxu0 %v1693
      %2459 = vmatpush1.bf16.msra.mxu0 %v1692
      %2460 = vmatprep.mubr.bf16.mxu0 %v568
      %2461 = vmatmul.mubr.bf16.gmra.mrb[0].mxu0 %v567
      %v2462 = vpop.f32.mrb[0].mxu0
      %v2463 = vadd.f32 %v2422, %v2462
      %v2464 = vpop.f32.mrb[0].mxu0
      %v2465 = vadd.f32 %v2424, %v2464
      %v2466 = vpop.f32.mrb[0].mxu0
      %v2467 = vpop.f32.mrb[0].mxu0
      %2468 = vdwg.mxu0
      %2469 = vmatprep.subr.bf16.mxu0 %v1701
      %2470 = vmatpush1.bf16.msra.mxu0 %v1700
      %2471 = vmatprep.subr.bf16.mxu0 %v1709
      %2472 = vmatpush1.bf16.msra.mxu0 %v1708
      %2473 = vmatprep.subr.bf16.mxu0 %v1717
      %2474 = vmatpush1.bf16.msra.mxu0 %v1716
      %2475 = vmatprep.subr.bf16.mxu0 %v1725
      %2476 = vmatpush1.bf16.msra.mxu0 %v1724
      %2477 = vmatprep.subr.bf16.mxu0 0
      %2478 = vmatpush1.bf16.msra.mxu0 0
      %2479 = vmatprep.subr.bf16.mxu0 0
      %2480 = vmatpush1.bf16.msra.mxu0 0
      %2481 = vmatprep.subr.bf16.mxu0 0
      %2482 = vmatpush1.bf16.msra.mxu0 0
      %2483 = vmatprep.subr.bf16.mxu0 0
      %2484 = vmatpush1.bf16.msra.mxu0 0
      %2485 = vmatprep.subr.bf16.mxu0 0
      %2486 = vmatpush1.bf16.msra.mxu0 0
      %2487 = vmatprep.subr.bf16.mxu0 0
      %2488 = vmatpush1.bf16.msra.mxu0 0
      %2489 = vmatprep.subr.bf16.mxu0 0
      %2490 = vmatpush1.bf16.msra.mxu0 0
      %2491 = vmatprep.subr.bf16.mxu0 0
      %2492 = vmatpush1.bf16.msra.mxu0 0
      %2493 = vmatprep.subr.bf16.mxu0 0
      %2494 = vmatpush1.bf16.msra.mxu0 0
      %2495 = vmatprep.subr.bf16.mxu0 0
      %2496 = vmatpush1.bf16.msra.mxu0 0
      %2497 = vmatprep.subr.bf16.mxu0 0
      %2498 = vmatpush1.bf16.msra.mxu0 0
      %2499 = vmatprep.subr.bf16.mxu0 0
      %2500 = vmatpush1.bf16.msra.mxu0 0
      %2501 = vmatprep.mubr.bf16.mxu0 0
      %2502 = vmatmul.mubr.bf16.gmra.mrb[0].mxu0 %v2016
      %v2503 = vpop.f32.mrb[0].mxu0
      %v2504 = vadd.f32 %v2463, %v2503
      %v2505 = vpop.f32.mrb[0].mxu0
      %v2506 = vadd.f32 %v2465, %v2505
      %v2507 = vpop.f32.mrb[0].mxu0
      %v2508 = vpop.f32.mrb[0].mxu0
      %2509 = vdwg.mxu0
      %v2510 = vmax.f32 %v2135, 0.0
      %v2511 = vmax.f32 %v2137, 0.0
      %v2512 = vmax.f32 %v2258, 0.0
      %v2513 = vmax.f32 %v2260, 0.0
      %v2514 = vmax.f32 %v2381, 0.0
      %v2515 = vmax.f32 %v2383, 0.0
      %v2516 = vmax.f32 %v2504, 0.0
      %v2517 = vmax.f32 %v2506, 0.0
      %v2518 = vpack.c.bf16 %v2510, %v2510
      %v2519 = vpack.c.bf16 %v2511, %v2511
      %v2520 = vpack.c.bf16 %v2512, %v2512
      %v2521 = vpack.c.bf16 %v2513, %v2513
      %v2522 = vpack.c.bf16 %v2514, %v2514
      %v2523 = vpack.c.bf16 %v2515, %v2515
      %v2524 = vpack.c.bf16 %v2516, %v2516
      %v2525 = vpack.c.bf16 %v2517, %v2517
      %v2526 = vld [vmem:[%s3] sm:$0xf]
      %v2527 = vld [vmem:[%s3 + $0x4] sm:$0xf]
      %v2528 = vld [vmem:[%s3 + $0x8] sm:$0xf]
      %v2529 = vld [vmem:[%s3 + $0xc] sm:$0xf]
      %v2530 = vld [vmem:[%s3 + $0x10] sm:$0xf]
      %v2531 = vld [vmem:[%s3 + $0x14] sm:$0xf]
      %v2532 = vld [vmem:[%s3 + $0x18] sm:$0xf]
      %v2533 = vld [vmem:[%s3 + $0x1c] sm:$0xf]
      %v2534 = vld [vmem:[%s3 + $0x20] sm:$0xf]
      %v2535 = vld [vmem:[%s3 + $0x24] sm:$0xf]
      %v2536 = vld [vmem:[%s3 + $0x28] sm:$0xf]
      %v2537 = vld [vmem:[%s3 + $0x2c] sm:$0xf]
      %v2538 = vld [vmem:[%s3 + $0x30] sm:$0xf]
      %v2539 = vld [vmem:[%s3 + $0x34] sm:$0xf]
      %v2540 = vld [vmem:[%s3 + $0x38] sm:$0xf]
      %v2541 = vld [vmem:[%s3 + $0x3c] sm:$0xf]
      %v2542 = vld [vmem:[%s3 + $0x40] sm:$0xf]
      %v2543 = vld [vmem:[%s3 + $0x44] sm:$0xf]
      %v2544 = vld [vmem:[%s3 + $0x48] sm:$0xf]
      %v2545 = vld [vmem:[%s3 + $0x4c] sm:$0xf]
      %v2546 = vld [vmem:[%s3 + $0x50] sm:$0xf]
      %v2547 = vld [vmem:[%s3 + $0x54] sm:$0xf]
      %v2548 = vld [vmem:[%s3 + $0x58] sm:$0xf]
      %v2549 = vld [vmem:[%s3 + $0x5c] sm:$0xf]
      %v2550 = vld [vmem:[%s3 + $0x60] sm:$0xf]
      %v2551 = vld [vmem:[%s3 + $0x64] sm:$0xf]
      %v2552 = vld [vmem:[%s3 + $0x68] sm:$0xf]
      %v2553 = vld [vmem:[%s3 + $0x6c] sm:$0xf]
      %v2554 = vld [vmem:[%s3 + $0x70] sm:$0xf]
      %v2555 = vld [vmem:[%s3 + $0x74] sm:$0xf]
      %v2556 = vld [vmem:[%s3 + $0x78] sm:$0xf]
      %v2557 = vld [vmem:[%s3 + $0x7c] sm:$0xf]
      %v2558 = vld [vmem:[%s3 + $0x80] sm:$0xf]
      %v2559 = vld [vmem:[%s3 + $0x84] sm:$0xf]
      %v2560 = vld [vmem:[%s3 + $0x88] sm:$0xf]
      %v2561 = vld [vmem:[%s3 + $0x8c] sm:$0xf]
      %v2562 = vld [vmem:[%s3 + $0x90] sm:$0xf]
      %v2563 = vld [vmem:[%s3 + $0x94] sm:$0xf]
      %v2564 = vld [vmem:[%s3 + $0x98] sm:$0xf]
      %v2565 = vld [vmem:[%s3 + $0x9c] sm:$0xf]
      %v2566 = vld [vmem:[%s3 + $0xa0] sm:$0xf]
      %v2567 = vld [vmem:[%s3 + $0xa4] sm:$0xf]
      %v2568 = vld [vmem:[%s3 + $0xa8] sm:$0xf]
      %v2569 = vld [vmem:[%s3 + $0xac] sm:$0xf]
      %v2570 = vld [vmem:[%s3 + $0xb0] sm:$0xf]
      %v2571 = vld [vmem:[%s3 + $0xb4] sm:$0xf]
      %v2572 = vld [vmem:[%s3 + $0xb8] sm:$0xf]
      %v2573 = vld [vmem:[%s3 + $0xbc] sm:$0xf]
      %v2574 = vld [vmem:[%s3 + $0xc0] sm:$0xf]
      %v2575 = vld [vmem:[%s3 + $0xc4] sm:$0xf]
      %v2576 = vld [vmem:[%s3 + $0xc8] sm:$0xf]
      %v2577 = vld [vmem:[%s3 + $0xcc] sm:$0xf]
      %v2578 = vld [vmem:[%s3 + $0xd0] sm:$0xf]
      %v2579 = vld [vmem:[%s3 + $0xd4] sm:$0xf]
      %v2580 = vld [vmem:[%s3 + $0xd8] sm:$0xf]
      %v2581 = vld [vmem:[%s3 + $0xdc] sm:$0xf]
      %v2582 = vld [vmem:[%s3 + $0xe0] sm:$0xf]
      %v2583 = vld [vmem:[%s3 + $0xe4] sm:$0xf]
      %v2584 = vld [vmem:[%s3 + $0xe8] sm:$0xf]
      %v2585 = vld [vmem:[%s3 + $0xec] sm:$0xf]
      %v2586 = vld [vmem:[%s3 + $0xf0] sm:$0xf]
      %v2587 = vld [vmem:[%s3 + $0xf4] sm:$0xf]
      %v2588 = vld [vmem:[%s3 + $0xf8] sm:$0xf]
      %v2589 = vld [vmem:[%s3 + $0xfc] sm:$0xf]
      %v2590 = vld [vmem:[%s3 + $0x100] sm:$0xf]
      %v2591 = vld [vmem:[%s3 + $0x104] sm:$0xf]
      %v2592 = vld [vmem:[%s3 + $0x108] sm:$0xf]
      %v2593 = vld [vmem:[%s3 + $0x10c] sm:$0xf]
      %v2594 = vld [vmem:[%s3 + $0x110] sm:$0xf]
      %v2595 = vld [vmem:[%s3 + $0x114] sm:$0xf]
      %v2596 = vld [vmem:[%s3 + $0x118] sm:$0xf]
      %v2597 = vld [vmem:[%s3 + $0x11c] sm:$0xf]
      %v2598 = vld [vmem:[%s3 + $0x120] sm:$0xf]
      %v2599 = vld [vmem:[%s3 + $0x124] sm:$0xf]
      %v2600 = vld [vmem:[%s3 + $0x128] sm:$0xf]
      %v2601 = vld [vmem:[%s3 + $0x12c] sm:$0xf]
      %v2602 = vld [vmem:[%s3 + $0x130] sm:$0xf]
      %v2603 = vld [vmem:[%s3 + $0x134] sm:$0xf]
      %v2604 = vld [vmem:[%s3 + $0x138] sm:$0xf]
      %v2605 = vld [vmem:[%s3 + $0x13c] sm:$0xf]
      %v2606 = vld [vmem:[%s3 + $0x140] sm:$0xf]
      %v2607 = vld [vmem:[%s3 + $0x144] sm:$0xf]
      %v2608 = vld [vmem:[%s3 + $0x148] sm:$0xf]
      %v2609 = vld [vmem:[%s3 + $0x14c] sm:$0xf]
      %v2610 = vld [vmem:[%s3 + $0x150] sm:$0xf]
      %v2611 = vld [vmem:[%s3 + $0x154] sm:$0xf]
      %v2612 = vld [vmem:[%s3 + $0x158] sm:$0xf]
      %v2613 = vld [vmem:[%s3 + $0x15c] sm:$0xf]
      %v2614 = vld [vmem:[%s3 + $0x160] sm:$0xf]
      %v2615 = vld [vmem:[%s3 + $0x164] sm:$0xf]
      %v2616 = vld [vmem:[%s3 + $0x168] sm:$0xf]
      %v2617 = vld [vmem:[%s3 + $0x16c] sm:$0xf]
      %v2618 = vld [vmem:[%s3 + $0x170] sm:$0xf]
      %v2619 = vld [vmem:[%s3 + $0x174] sm:$0xf]
      %v2620 = vld [vmem:[%s3 + $0x178] sm:$0xf]
      %v2621 = vld [vmem:[%s3 + $0x17c] sm:$0xf]
      %v2622 = vld [vmem:[%s3 + $0x180] sm:$0xf]
      %v2623 = vld [vmem:[%s3 + $0x184] sm:$0xf]
      %v2624 = vld [vmem:[%s3 + $0x188] sm:$0xf]
      %v2625 = vld [vmem:[%s3 + $0x18c] sm:$0xf]
      %v2626 = vld [vmem:[%s3 + $0x190] sm:$0xf]
      %v2627 = vld [vmem:[%s3 + $0x194] sm:$0xf]
      %v2628 = vld [vmem:[%s3 + $0x198] sm:$0xf]
      %v2629 = vld [vmem:[%s3 + $0x19c] sm:$0xf]
      %v2630 = vld [vmem:[%s3 + $0x1a0] sm:$0xf]
      %v2631 = vld [vmem:[%s3 + $0x1a4] sm:$0xf]
      %v2632 = vld [vmem:[%s3 + $0x1a8] sm:$0xf]
      %v2633 = vld [vmem:[%s3 + $0x1ac] sm:$0xf]
      %v2634 = vld [vmem:[%s3 + $0x1b0] sm:$0xf]
      %v2635 = vld [vmem:[%s3 + $0x1b4] sm:$0xf]
      %v2636 = vld [vmem:[%s3 + $0x1b8] sm:$0xf]
      %v2637 = vld [vmem:[%s3 + $0x1bc] sm:$0xf]
      %v2638 = vld [vmem:[%s3 + $0x1c0] sm:$0xf]
      %v2639 = vld [vmem:[%s3 + $0x1c4] sm:$0xf]
      %v2640 = vld [vmem:[%s3 + $0x1c8] sm:$0xf]
      %v2641 = vld [vmem:[%s3 + $0x1cc] sm:$0xf]
      %v2642 = vld [vmem:[%s3 + $0x1d0] sm:$0xf]
      %v2643 = vld [vmem:[%s3 + $0x1d4] sm:$0xf]
      %v2644 = vld [vmem:[%s3 + $0x1d8] sm:$0xf]
      %v2645 = vld [vmem:[%s3 + $0x1dc] sm:$0xf]
      %v2646 = vld [vmem:[%s3 + $0x1e0] sm:$0xf]
      %v2647 = vld [vmem:[%s3 + $0x1e4] sm:$0xf]
      %v2648 = vld [vmem:[%s3 + $0x1e8] sm:$0xf]
      %v2649 = vld [vmem:[%s3 + $0x1ec] sm:$0xf]
      %v2650 = vld [vmem:[%s3 + $0x1f0] sm:$0xf]
      %v2651 = vld [vmem:[%s3 + $0x1f4] sm:$0xf]
      %v2652 = vld [vmem:[%s3 + $0x1f8] sm:$0xf]
      %v2653 = vld [vmem:[%s3 + $0x1fc] sm:$0xf]
      %v2654 = vld [vmem:[%s4] sm:$0x1]
      %v2656 = vlaneseq
      %v2657 = vshrl.u32 %v2656, 7
      %v2658 = vsub.s32 0, %v2657
      %v2659 = vrot.slane %v2654, %v2658
      %v2789 = vunpack.c.l.b16 %v2526
      %v2790 = vunpack.c.l.b16 %v2527
      %v2791 = vunpack.c.l.b16 %v2528
      %v2792 = vunpack.c.l.b16 %v2529
      %v2793 = vunpack.c.l.b16 %v2530
      %v2794 = vunpack.c.l.b16 %v2531
      %v2795 = vunpack.c.l.b16 %v2532
      %v2796 = vunpack.c.l.b16 %v2533
      %v2797 = vunpack.c.l.b16 %v2534
      %v2798 = vunpack.c.l.b16 %v2535
      %v2799 = vunpack.c.l.b16 %v2536
      %v2800 = vunpack.c.l.b16 %v2537
      %v2801 = vunpack.c.l.b16 %v2538
      %v2802 = vunpack.c.l.b16 %v2539
      %v2803 = vunpack.c.l.b16 %v2540
      %v2804 = vunpack.c.l.b16 %v2541
      %v2805 = vunpack.c.l.b16 %v2542
      %v2806 = vunpack.c.l.b16 %v2543
      %v2807 = vunpack.c.l.b16 %v2544
      %v2808 = vunpack.c.l.b16 %v2545
      %v2809 = vunpack.c.l.b16 %v2546
      %v2810 = vunpack.c.l.b16 %v2547
      %v2811 = vunpack.c.l.b16 %v2548
      %v2812 = vunpack.c.l.b16 %v2549
      %v2813 = vunpack.c.l.b16 %v2550
      %v2814 = vunpack.c.l.b16 %v2551
      %v2815 = vunpack.c.l.b16 %v2552
      %v2816 = vunpack.c.l.b16 %v2553
      %v2817 = vunpack.c.l.b16 %v2554
      %v2818 = vunpack.c.l.b16 %v2555
      %v2819 = vunpack.c.l.b16 %v2556
      %v2820 = vunpack.c.l.b16 %v2557
      %v2821 = vunpack.c.l.b16 %v2558
      %v2822 = vunpack.c.l.b16 %v2559
      %v2823 = vunpack.c.l.b16 %v2560
      %v2824 = vunpack.c.l.b16 %v2561
      %v2825 = vunpack.c.l.b16 %v2562
      %v2826 = vunpack.c.l.b16 %v2563
      %v2827 = vunpack.c.l.b16 %v2564
      %v2828 = vunpack.c.l.b16 %v2565
      %v2829 = vunpack.c.l.b16 %v2566
      %v2830 = vunpack.c.l.b16 %v2567
      %v2831 = vunpack.c.l.b16 %v2568
      %v2832 = vunpack.c.l.b16 %v2569
      %v2833 = vunpack.c.l.b16 %v2570
      %v2834 = vunpack.c.l.b16 %v2571
      %v2835 = vunpack.c.l.b16 %v2572
      %v2836 = vunpack.c.l.b16 %v2573
      %v2837 = vunpack.c.l.b16 %v2574
      %v2838 = vunpack.c.l.b16 %v2575
      %v2839 = vunpack.c.l.b16 %v2576
      %v2840 = vunpack.c.l.b16 %v2577
      %v2841 = vunpack.c.l.b16 %v2578
      %v2842 = vunpack.c.l.b16 %v2579
      %v2843 = vunpack.c.l.b16 %v2580
      %v2844 = vunpack.c.l.b16 %v2581
      %v2845 = vunpack.c.l.b16 %v2582
      %v2846 = vunpack.c.l.b16 %v2583
      %v2847 = vunpack.c.l.b16 %v2584
      %v2848 = vunpack.c.l.b16 %v2585
      %v2849 = vunpack.c.l.b16 %v2586
      %v2850 = vunpack.c.l.b16 %v2587
      %v2851 = vunpack.c.l.b16 %v2588
      %v2852 = vunpack.c.l.b16 %v2589
      %v2853 = vunpack.c.l.b16 %v2590
      %v2854 = vunpack.c.l.b16 %v2591
      %v2855 = vunpack.c.l.b16 %v2592
      %v2856 = vunpack.c.l.b16 %v2593
      %v2857 = vunpack.c.l.b16 %v2594
      %v2858 = vunpack.c.l.b16 %v2595
      %v2859 = vunpack.c.l.b16 %v2596
      %v2860 = vunpack.c.l.b16 %v2597
      %v2861 = vunpack.c.l.b16 %v2598
      %v2862 = vunpack.c.l.b16 %v2599
      %v2863 = vunpack.c.l.b16 %v2600
      %v2864 = vunpack.c.l.b16 %v2601
      %v2865 = vunpack.c.l.b16 %v2602
      %v2866 = vunpack.c.l.b16 %v2603
      %v2867 = vunpack.c.l.b16 %v2604
      %v2868 = vunpack.c.l.b16 %v2605
      %v2869 = vunpack.c.l.b16 %v2606
      %v2870 = vunpack.c.l.b16 %v2607
      %v2871 = vunpack.c.l.b16 %v2608
      %v2872 = vunpack.c.l.b16 %v2609
      %v2873 = vunpack.c.l.b16 %v2610
      %v2874 = vunpack.c.l.b16 %v2611
      %v2875 = vunpack.c.l.b16 %v2612
      %v2876 = vunpack.c.l.b16 %v2613
      %v2877 = vunpack.c.l.b16 %v2614
      %v2878 = vunpack.c.l.b16 %v2615
      %v2879 = vunpack.c.l.b16 %v2616
      %v2880 = vunpack.c.l.b16 %v2617
      %v2881 = vunpack.c.l.b16 %v2618
      %v2882 = vunpack.c.l.b16 %v2619
      %v2883 = vunpack.c.l.b16 %v2620
      %v2884 = vunpack.c.l.b16 %v2621
      %v2885 = vunpack.c.l.b16 %v2622
      %v2886 = vunpack.c.l.b16 %v2623
      %v2887 = vunpack.c.l.b16 %v2624
      %v2888 = vunpack.c.l.b16 %v2625
      %v2889 = vunpack.c.l.b16 %v2626
      %v2890 = vunpack.c.l.b16 %v2627
      %v2891 = vunpack.c.l.b16 %v2628
      %v2892 = vunpack.c.l.b16 %v2629
      %v2893 = vunpack.c.l.b16 %v2630
      %v2894 = vunpack.c.l.b16 %v2631
      %v2895 = vunpack.c.l.b16 %v2632
      %v2896 = vunpack.c.l.b16 %v2633
      %v2897 = vunpack.c.l.b16 %v2634
      %v2898 = vunpack.c.l.b16 %v2635
      %v2899 = vunpack.c.l.b16 %v2636
      %v2900 = vunpack.c.l.b16 %v2637
      %v2901 = vunpack.c.l.b16 %v2638
      %v2902 = vunpack.c.l.b16 %v2639
      %v2903 = vunpack.c.l.b16 %v2640
      %v2904 = vunpack.c.l.b16 %v2641
      %v2905 = vunpack.c.l.b16 %v2642
      %v2906 = vunpack.c.l.b16 %v2643
      %v2907 = vunpack.c.l.b16 %v2644
      %v2908 = vunpack.c.l.b16 %v2645
      %v2909 = vunpack.c.l.b16 %v2646
      %v2910 = vunpack.c.l.b16 %v2647
      %v2911 = vunpack.c.l.b16 %v2648
      %v2912 = vunpack.c.l.b16 %v2649
      %v2913 = vunpack.c.l.b16 %v2650
      %v2914 = vunpack.c.l.b16 %v2651
      %v2915 = vunpack.c.l.b16 %v2652
      %v2916 = vunpack.c.l.b16 %v2653
      %v2917 = vpack.c.b16 %v2790, %v2789
      %v2918 = vpack.c.b16 %v2792, %v2791
      %v2919 = vpack.c.b16 %v2794, %v2793
      %v2920 = vpack.c.b16 %v2796, %v2795
      %v2921 = vpack.c.b16 %v2798, %v2797
      %v2922 = vpack.c.b16 %v2800, %v2799
      %v2923 = vpack.c.b16 %v2802, %v2801
      %v2924 = vpack.c.b16 %v2804, %v2803
      %v2925 = vpack.c.b16 %v2806, %v2805
      %v2926 = vpack.c.b16 %v2808, %v2807
      %v2927 = vpack.c.b16 %v2810, %v2809
      %v2928 = vpack.c.b16 %v2812, %v2811
      %v2929 = vpack.c.b16 %v2814, %v2813
      %v2930 = vpack.c.b16 %v2816, %v2815
      %v2931 = vpack.c.b16 %v2818, %v2817
      %v2932 = vpack.c.b16 %v2820, %v2819
      %v2933 = vpack.c.b16 %v2822, %v2821
      %v2934 = vpack.c.b16 %v2824, %v2823
      %v2935 = vpack.c.b16 %v2826, %v2825
      %v2936 = vpack.c.b16 %v2828, %v2827
      %v2937 = vpack.c.b16 %v2830, %v2829
      %v2938 = vpack.c.b16 %v2832, %v2831
      %v2939 = vpack.c.b16 %v2834, %v2833
      %v2940 = vpack.c.b16 %v2836, %v2835
      %v2941 = vpack.c.b16 %v2838, %v2837
      %v2942 = vpack.c.b16 %v2840, %v2839
      %v2943 = vpack.c.b16 %v2842, %v2841
      %v2944 = vpack.c.b16 %v2844, %v2843
      %v2945 = vpack.c.b16 %v2846, %v2845
      %v2946 = vpack.c.b16 %v2848, %v2847
      %v2947 = vpack.c.b16 %v2850, %v2849
      %v2948 = vpack.c.b16 %v2852, %v2851
      %v2949 = vpack.c.b16 %v2854, %v2853
      %v2950 = vpack.c.b16 %v2856, %v2855
      %v2951 = vpack.c.b16 %v2858, %v2857
      %v2952 = vpack.c.b16 %v2860, %v2859
      %v2953 = vpack.c.b16 %v2862, %v2861
      %v2954 = vpack.c.b16 %v2864, %v2863
      %v2955 = vpack.c.b16 %v2866, %v2865
      %v2956 = vpack.c.b16 %v2868, %v2867
      %v2957 = vpack.c.b16 %v2870, %v2869
      %v2958 = vpack.c.b16 %v2872, %v2871
      %v2959 = vpack.c.b16 %v2874, %v2873
      %v2960 = vpack.c.b16 %v2876, %v2875
      %v2961 = vpack.c.b16 %v2878, %v2877
      %v2962 = vpack.c.b16 %v2880, %v2879
      %v2963 = vpack.c.b16 %v2882, %v2881
      %v2964 = vpack.c.b16 %v2884, %v2883
      %v2965 = vpack.c.b16 %v2886, %v2885
      %v2966 = vpack.c.b16 %v2888, %v2887
      %v2967 = vpack.c.b16 %v2890, %v2889
      %v2968 = vpack.c.b16 %v2892, %v2891
      %v2969 = vpack.c.b16 %v2894, %v2893
      %v2970 = vpack.c.b16 %v2896, %v2895
      %v2971 = vpack.c.b16 %v2898, %v2897
      %v2972 = vpack.c.b16 %v2900, %v2899
      %v2973 = vpack.c.b16 %v2902, %v2901
      %v2974 = vpack.c.b16 %v2904, %v2903
      %v2975 = vpack.c.b16 %v2906, %v2905
      %v2976 = vpack.c.b16 %v2908, %v2907
      %v2977 = vpack.c.b16 %v2910, %v2909
      %v2978 = vpack.c.b16 %v2912, %v2911
      %v2979 = vpack.c.b16 %v2914, %v2913
      %v2980 = vpack.c.b16 %v2916, %v2915
      %3045 = vmatprep.subr.bf16.mxu0 0
      %3046 = vmatpush1.bf16.msra.mxu0 %v2917
      %3047 = vmatprep.subr.bf16.mxu0 0
      %3048 = vmatpush1.bf16.msra.mxu0 %v2918
      %3049 = vmatprep.subr.bf16.mxu0 0
      %3050 = vmatpush1.bf16.msra.mxu0 %v2919
      %3051 = vmatprep.subr.bf16.mxu0 0
      %3052 = vmatpush1.bf16.msra.mxu0 %v2920
      %3053 = vmatprep.subr.bf16.mxu0 0
      %3054 = vmatpush1.bf16.msra.mxu0 %v2921
      %3055 = vmatprep.subr.bf16.mxu0 0
      %3056 = vmatpush1.bf16.msra.mxu0 %v2922
      %3057 = vmatprep.subr.bf16.mxu0 0
      %3058 = vmatpush1.bf16.msra.mxu0 %v2923
      %3059 = vmatprep.subr.bf16.mxu0 0
      %3060 = vmatpush1.bf16.msra.mxu0 %v2924
      %3061 = vmatprep.subr.bf16.mxu0 0
      %3062 = vmatpush1.bf16.msra.mxu0 %v2925
      %3063 = vmatprep.subr.bf16.mxu0 0
      %3064 = vmatpush1.bf16.msra.mxu0 %v2926
      %3065 = vmatprep.subr.bf16.mxu0 0
      %3066 = vmatpush1.bf16.msra.mxu0 %v2927
      %3067 = vmatprep.subr.bf16.mxu0 0
      %3068 = vmatpush1.bf16.msra.mxu0 %v2928
      %3069 = vmatprep.subr.bf16.mxu0 0
      %3070 = vmatpush1.bf16.msra.mxu0 %v2929
      %3071 = vmatprep.subr.bf16.mxu0 0
      %3072 = vmatpush1.bf16.msra.mxu0 %v2930
      %3073 = vmatprep.subr.bf16.mxu0 0
      %3074 = vmatpush1.bf16.msra.mxu0 %v2931
      %3075 = vmatprep.subr.bf16.mxu0 0
      %3076 = vmatpush1.bf16.msra.mxu0 %v2932
      %3077 = vmatprep.mubr.bf16.mxu0 %v2519
      %3078 = vmatmul.mubr.bf16.gmra.mrb[0].mxu0 %v2518
      %v3079 = vpop.f32.mrb[0].mxu0
      %v3080 = vadd.f32 %v2659, %v3079
      %v3081 = vpop.f32.mrb[0].mxu0
      %v3082 = vpop.f32.mrb[0].mxu0
      %v3083 = vpop.f32.mrb[0].mxu0
      %3084 = vdwg.mxu0
      %3085 = vmatprep.subr.bf16.mxu0 0
      %3086 = vmatpush1.bf16.msra.mxu0 %v2933
      %3087 = vmatprep.subr.bf16.mxu0 0
      %3088 = vmatpush1.bf16.msra.mxu0 %v2934
      %3089 = vmatprep.subr.bf16.mxu0 0
      %3090 = vmatpush1.bf16.msra.mxu0 %v2935
      %3091 = vmatprep.subr.bf16.mxu0 0
      %3092 = vmatpush1.bf16.msra.mxu0 %v2936
      %3093 = vmatprep.subr.bf16.mxu0 0
      %3094 = vmatpush1.bf16.msra.mxu0 %v2937
      %3095 = vmatprep.subr.bf16.mxu0 0
      %3096 = vmatpush1.bf16.msra.mxu0 %v2938
      %3097 = vmatprep.subr.bf16.mxu0 0
      %3098 = vmatpush1.bf16.msra.mxu0 %v2939
      %3099 = vmatprep.subr.bf16.mxu0 0
      %3100 = vmatpush1.bf16.msra.mxu0 %v2940
      %3101 = vmatprep.subr.bf16.mxu0 0
      %3102 = vmatpush1.bf16.msra.mxu0 %v2941
      %3103 = vmatprep.subr.bf16.mxu0 0
      %3104 = vmatpush1.bf16.msra.mxu0 %v2942
      %3105 = vmatprep.subr.bf16.mxu0 0
      %3106 = vmatpush1.bf16.msra.mxu0 %v2943
      %3107 = vmatprep.subr.bf16.mxu0 0
      %3108 = vmatpush1.bf16.msra.mxu0 %v2944
      %3109 = vmatprep.subr.bf16.mxu0 0
      %3110 = vmatpush1.bf16.msra.mxu0 %v2945
      %3111 = vmatprep.subr.bf16.mxu0 0
      %3112 = vmatpush1.bf16.msra.mxu0 %v2946
      %3113 = vmatprep.subr.bf16.mxu0 0
      %3114 = vmatpush1.bf16.msra.mxu0 %v2947
      %3115 = vmatprep.subr.bf16.mxu0 0
      %3116 = vmatpush1.bf16.msra.mxu0 %v2948
      %3117 = vmatprep.mubr.bf16.mxu0 %v2521
      %3118 = vmatmul.mubr.bf16.gmra.mrb[0].mxu0 %v2520
      %v3119 = vpop.f32.mrb[0].mxu0
      %v3120 = vadd.f32 %v3080, %v3119
      %v3121 = vpop.f32.mrb[0].mxu0
      %v3122 = vpop.f32.mrb[0].mxu0
      %v3123 = vpop.f32.mrb[0].mxu0
      %3124 = vdwg.mxu0
      %3125 = vmatprep.subr.bf16.mxu0 0
      %3126 = vmatpush1.bf16.msra.mxu0 %v2949
      %3127 = vmatprep.subr.bf16.mxu0 0
      %3128 = vmatpush1.bf16.msra.mxu0 %v2950
      %3129 = vmatprep.subr.bf16.mxu0 0
      %3130 = vmatpush1.bf16.msra.mxu0 %v2951
      %3131 = vmatprep.subr.bf16.mxu0 0
      %3132 = vmatpush1.bf16.msra.mxu0 %v2952
      %3133 = vmatprep.subr.bf16.mxu0 0
      %3134 = vmatpush1.bf16.msra.mxu0 %v2953
      %3135 = vmatprep.subr.bf16.mxu0 0
      %3136 = vmatpush1.bf16.msra.mxu0 %v2954
      %3137 = vmatprep.subr.bf16.mxu0 0
      %3138 = vmatpush1.bf16.msra.mxu0 %v2955
      %3139 = vmatprep.subr.bf16.mxu0 0
      %3140 = vmatpush1.bf16.msra.mxu0 %v2956
      %3141 = vmatprep.subr.bf16.mxu0 0
      %3142 = vmatpush1.bf16.msra.mxu0 %v2957
      %3143 = vmatprep.subr.bf16.mxu0 0
      %3144 = vmatpush1.bf16.msra.mxu0 %v2958
      %3145 = vmatprep.subr.bf16.mxu0 0
      %3146 = vmatpush1.bf16.msra.mxu0 %v2959
      %3147 = vmatprep.subr.bf16.mxu0 0
      %3148 = vmatpush1.bf16.msra.mxu0 %v2960
      %3149 = vmatprep.subr.bf16.mxu0 0
      %3150 = vmatpush1.bf16.msra.mxu0 %v2961
      %3151 = vmatprep.subr.bf16.mxu0 0
      %3152 = vmatpush1.bf16.msra.mxu0 %v2962
      %3153 = vmatprep.subr.bf16.mxu0 0
      %3154 = vmatpush1.bf16.msra.mxu0 %v2963
      %3155 = vmatprep.subr.bf16.mxu0 0
      %3156 = vmatpush1.bf16.msra.mxu0 %v2964
      %3157 = vmatprep.mubr.bf16.mxu0 %v2523
      %3158 = vmatmul.mubr.bf16.gmra.mrb[0].mxu0 %v2522
      %v3159 = vpop.f32.mrb[0].mxu0
      %v3160 = vadd.f32 %v3120, %v3159
      %v3161 = vpop.f32.mrb[0].mxu0
      %v3162 = vpop.f32.mrb[0].mxu0
      %v3163 = vpop.f32.mrb[0].mxu0
      %3164 = vdwg.mxu0
      %3165 = vmatprep.subr.bf16.mxu0 0
      %3166 = vmatpush1.bf16.msra.mxu0 %v2965
      %3167 = vmatprep.subr.bf16.mxu0 0
      %3168 = vmatpush1.bf16.msra.mxu0 %v2966
      %3169 = vmatprep.subr.bf16.mxu0 0
      %3170 = vmatpush1.bf16.msra.mxu0 %v2967
      %3171 = vmatprep.subr.bf16.mxu0 0
      %3172 = vmatpush1.bf16.msra.mxu0 %v2968
      %3173 = vmatprep.subr.bf16.mxu0 0
      %3174 = vmatpush1.bf16.msra.mxu0 %v2969
      %3175 = vmatprep.subr.bf16.mxu0 0
      %3176 = vmatpush1.bf16.msra.mxu0 %v2970
      %3177 = vmatprep.subr.bf16.mxu0 0
      %3178 = vmatpush1.bf16.msra.mxu0 %v2971
      %3179 = vmatprep.subr.bf16.mxu0 0
      %3180 = vmatpush1.bf16.msra.mxu0 %v2972
      %3181 = vmatprep.subr.bf16.mxu0 0
      %3182 = vmatpush1.bf16.msra.mxu0 %v2973
      %3183 = vmatprep.subr.bf16.mxu0 0
      %3184 = vmatpush1.bf16.msra.mxu0 %v2974
      %3185 = vmatprep.subr.bf16.mxu0 0
      %3186 = vmatpush1.bf16.msra.mxu0 %v2975
      %3187 = vmatprep.subr.bf16.mxu0 0
      %3188 = vmatpush1.bf16.msra.mxu0 %v2976
      %3189 = vmatprep.subr.bf16.mxu0 0
      %3190 = vmatpush1.bf16.msra.mxu0 %v2977
      %3191 = vmatprep.subr.bf16.mxu0 0
      %3192 = vmatpush1.bf16.msra.mxu0 %v2978
      %3193 = vmatprep.subr.bf16.mxu0 0
      %3194 = vmatpush1.bf16.msra.mxu0 %v2979
      %3195 = vmatprep.subr.bf16.mxu0 0
      %3196 = vmatpush1.bf16.msra.mxu0 %v2980
      %3197 = vmatprep.mubr.bf16.mxu0 %v2525
      %3198 = vmatmul.mubr.bf16.gmra.mrb[0].mxu0 %v2524
      %v3199 = vpop.f32.mrb[0].mxu0
      %v3200 = vadd.f32 %v3160, %v3199
      %v3201 = vpop.f32.mrb[0].mxu0
      %v3202 = vpop.f32.mrb[0].mxu0
      %v3203 = vpop.f32.mrb[0].mxu0
      %3204 = vdwg.mxu0
      %3205 = vst [vmem:[%s222] sm:$0xff] %v3200
      %p3206 = scmp.lt.s32.totalorder %s16, 1
      %s3207 = scalar_select %p3206, %s16, 1
      %s3208 = smul.addr %s3207, 8
      %s3209 = scalar_lea.vmem %s5, %s3208
      // Predicated region
      $region41: #{atari_a2c_forward.7} parent=39 // pred_check
        %p3210 = pneg %p144
      $region42: #{atari_a2c_forward.7} parent=39 // pred_check_branch
        %3212 = sbr.rel (%p3210) target = $region44
      $region43: #{atari_a2c_forward.7} parent=39 // pred_region
        _
      $region44: #{atari_a2c_forward.7} parent=39 // pred_fallthru
        _
    $region40: #{atari_a2c_forward.7} parent=5 // pred_fallthru
      _
    %p3213 = scmp.le.s32.totalorder 2, %s11
    // Predicated region
    $region45: #{atari_a2c_forward.7} parent=5 // pred_check
      %p3214 = pneg %p3213
    $region46: #{atari_a2c_forward.7} parent=5 // pred_check_branch
      %3216 = sbr.rel (%p3214) target = $region48
    $region47: #{atari_a2c_forward.7} parent=5 // pred_region
      %s3217 = ssub.s32 %s11, 2
      // Predicated region
      $region49: #{atari_a2c_forward.7} parent=47 // pred_check
        %p3218 = pneg %p150
      $region50: #{atari_a2c_forward.7} parent=47 // pred_check_branch
        %3220 = sbr.rel (%p3218) target = $region52
      $region51: #{atari_a2c_forward.7} parent=47 // pred_region
        %p3221 = scmp.lt.s32.totalorder %s17, 1
        %s3222 = scalar_select %p3221, %s17, 1
        %s3223 = smul.addr %s3222, 8
        %s3224 = scalar_lea.vmem %s5, %s3223
      $region52: #{atari_a2c_forward.7} parent=47 // pred_fallthru
        _
    $region48: #{atari_a2c_forward.7} parent=5 // pred_fallthru
      _
  $region6: #{atari_a2c_forward.7} parent=0 // loop_footer
    %s15 = sadd.s32 1, %s11
  $region7: #{atari_a2c_forward.7} parent=0 // loop_footer_branch
    %10 = sbr.rel target = $region3
  $region8: #{atari_a2c_forward.7} parent=0 // loop_exit
    _

</llo_original>
